<compile_context>
chip_gen: v7x
topology: tpu7x:2x2x1
jax: 0.10.0
libtpu: 0.0.40
codegen_flags: <defaults>
</compile_context>

<pallas_src>
import functools

import jax
import jax.numpy as jnp
from jax import lax
from jax.experimental import pallas as pl
from jax.experimental.pallas import tpu as pltpu


def _vmem():
    return pl.BlockSpec(memory_space=pltpu.MemorySpace.VMEM)


# --------------------------------------------------------------------------
# One bidirectional GRU layer.  grid=(2,) over direction (0=fwd, 1=bwd).
# Weights per direction (fused gates, column order r|z|n):
#   w_ih: (2, Din, 3H)   w_hh: (2, H, 3H)   b_ih, b_hh: (2, 1, 3H)
# Input x is (C, S, B, Dc): C feature chunks (C=1 for the embedding input,
# C=2 for the previous layer's fwd/bwd halves), Din = C*Dc.
# Output: (2, S, B, H) -- direction-major halves, consumed as-is downstream.
# --------------------------------------------------------------------------
def gru_layer_kernel(x_ref, wih_ref, whh_ref, bih_ref, bhh_ref, out_ref, xp_scr):
    C, S, B, Dc = x_ref.shape
    H = out_ref.shape[-1]
    d = pl.program_id(0)                      # 0 = forward, 1 = backward

    # ---- input projection for ALL timesteps (hoisted out of the recurrence) ----
    wih = wih_ref[...].astype(jnp.bfloat16)   # (C*Dc, 3H)
    xp = None
    for c in range(C):                        # static feature-chunk loop (C<=2)
        xc = x_ref[c].reshape(S * B, Dc).astype(jnp.bfloat16)
        part = jnp.dot(xc, wih[c * Dc:(c + 1) * Dc, :],
                       preferred_element_type=jnp.float32)
        xp = part if xp is None else xp + part
    xp = xp + bih_ref[...]                    # (S*B, 3H), f32
    xp_scr[...] = xp.reshape(S, B, 3 * H)

    whh = whh_ref[...].astype(jnp.bfloat16)   # (H, 3H), hoisted cast
    bhh = bhh_ref[...]                        # (1, 3H)

    def step(t, h):
        time = jnp.where(d == 0, t, S - 1 - t)
        xp_t = xp_scr[time]                   # (B, 3H) precomputed x-projection
        hp = jnp.dot(h.astype(jnp.bfloat16), whh,
                     preferred_element_type=jnp.float32) + bhh  # (B, 3H)
        # elementwise gate math kept in f32 (v5e has no bf16 VPU/EUP)
        r = jax.nn.sigmoid(xp_t[:, 0:H] + hp[:, 0:H])
        z = jax.nn.sigmoid(xp_t[:, H:2 * H] + hp[:, H:2 * H])
        n = jnp.tanh(xp_t[:, 2 * H:3 * H] + r * hp[:, 2 * H:3 * H])
        h_new = (1.0 - z) * n + z * h
        out_ref[time] = h_new
        return h_new

    lax.fori_loop(0, S, step, jnp.zeros((B, H), jnp.float32), unroll=True)


def gru_layer(x, p):
    # x: (C, S, B, Dc); weights stacked over the 2 directions.
    C, S, B, Dc = x.shape
    H = p["w_hh"].shape[-1] // 3
    Din = p["w_ih"].shape[1]
    return pl.pallas_call(
        gru_layer_kernel,
        out_shape=jax.ShapeDtypeStruct((2, S, B, H), jnp.float32),
        grid=(2,),
        in_specs=[
            pl.BlockSpec((C, S, B, Dc), lambda d: (0, 0, 0, 0)),
            pl.BlockSpec((None, Din, 3 * H), lambda d: (d, 0, 0)),
            pl.BlockSpec((None, H, 3 * H), lambda d: (d, 0, 0)),
            pl.BlockSpec((None, 1, 3 * H), lambda d: (d, 0, 0)),
            pl.BlockSpec((None, 1, 3 * H), lambda d: (d, 0, 0)),
        ],
        out_specs=pl.BlockSpec((None, S, B, H), lambda d: (d, 0, 0, 0)),
        scratch_shapes=[pltpu.VMEM((S, B, 3 * H), jnp.float32)],
        compiler_params=pltpu.CompilerParams(
            dimension_semantics=("parallel",)),   # 2 TCs on v7x
    )(x, p["w_ih"], p["w_hh"], p["b_ih"], p["b_hh"])


# --------------------------------------------------------------------------
# CRF negative log-likelihood with the hidden2tag Linear fused in.
#   h:     (2, S, B, Hd) GRU output (direction-major halves)
#   w_tag: (2*Hd, T)  b_tag: (1, T)
#   mask:  (S, B, 1) float {0,1} (mask[0] assumed all ones, left-aligned)
#   tgt:   (S, B, T) one-hot targets
#   gstat: (B, 1) precomputed gold start + transition + end score (wrapper)
#   trans: (T, T)  start/end: (1, T)
# Output: (1, 1) scalar  sum_b(logZ_b - gold_b)
# --------------------------------------------------------------------------
def crf_nll_kernel(h_ref, wt_ref, bt_ref, mask_ref, tgt_ref, gstat_ref,
                   trans_ref, start_ref, end_ref, loss_ref, em_scr):
    C, S, B, Hd = h_ref.shape
    T = trans_ref.shape[-1]

    # ---- fused hidden2tag linear -> emissions ----
    wt = wt_ref[...].astype(jnp.bfloat16)                       # (C*Hd, T)
    em = None
    for c in range(C):
        hc = h_ref[c].reshape(S * B, Hd).astype(jnp.bfloat16)
        part = jnp.dot(hc, wt[c * Hd:(c + 1) * Hd, :],
                       preferred_element_type=jnp.float32)
        em = part if em is None else em + part
    em = (em + bt_ref[...]).reshape(S, B, T)
    em_scr[...] = em

    trans = trans_ref[...]
    start = start_ref[...]
    end = end_ref[...]
    mask = mask_ref[...]
    tgt = tgt_ref[...]

    # ---- gold-path score: emission part vectorized (no recurrence) ----
    em_gold = jnp.sum(jnp.sum(tgt * em, axis=-1, keepdims=True) * mask, axis=0)
    gold = gstat_ref[...] + em_gold                              # (B, 1)

    # ---- forward algorithm (the only sequential piece) ----
    trans_b = trans[None, :, :]            # hoisted loop-invariant broadcast
    alpha0 = start + em_scr[0]             # (B, T); mask[0] assumed all ones

    def step(t, alpha):
        em_t = em_scr[t]                                        # (B, T)
        m_t = mask_ref[t]                                       # (B, 1)
        scores = alpha[:, :, None] + trans_b + em_t[:, None, :]  # (B,T,T)
        mmax = jnp.max(scores, axis=1, keepdims=True)
        new_alpha = jnp.log(jnp.sum(jnp.exp(scores - mmax), axis=1)) + mmax[:, 0, :]
        return jnp.where(m_t > 0.5, new_alpha, alpha)

    alpha = lax.fori_loop(1, S, step, alpha0, unroll=True)

    final = alpha + end
    fmax = jnp.max(final, axis=-1, keepdims=True)
    logz = jnp.log(jnp.sum(jnp.exp(final - fmax), axis=-1, keepdims=True)) + fmax
    loss_ref[...] = jnp.sum(logz - gold, axis=0, keepdims=True)  # (1, 1)


def crf_nll(h, w_tag, b_tag, mask_t, tgt_oh, gold_static, trans, start, end):
    S, B = h.shape[1], h.shape[2]
    T = trans.shape[-1]
    return pl.pallas_call(
        crf_nll_kernel,
        out_shape=jax.ShapeDtypeStruct((1, 1), jnp.float32),
        in_specs=[_vmem()] * 9,
        out_specs=_vmem(),
        scratch_shapes=[pltpu.VMEM((S, B, T), jnp.float32)],
    )(h, w_tag, b_tag, mask_t, tgt_oh, gold_static, trans, start, end)


# --------------------------------------------------------------------------
# Parameter init (deterministic, PyTorch-like uniform(-1/sqrt(H), 1/sqrt(H))).
# Gate weights are stored FUSED: columns [0:H]=r, [H:2H]=z, [2H:3H]=n,
# stacked over the 2 directions on the leading axis.
# --------------------------------------------------------------------------
def init_params(key, tag_set_size, lstm_hidden_dim, embedding_size=300):
    hd = lstm_hidden_dim // 2

    def uni(k, shape, scale):
        return jax.random.uniform(k, shape, jnp.float32, -scale, scale)

    params = {"gru": []}
    k = key
    for layer in range(2):
        in_dim = embedding_size if layer == 0 else 2 * hd
        s = 1.0 / float(hd) ** 0.5
        k, k1, k2, k3, k4 = jax.random.split(k, 5)
        params["gru"].append({
            "w_ih": uni(k1, (2, in_dim, 3 * hd), s),
            "w_hh": uni(k2, (2, hd, 3 * hd), s),
            "b_ih": uni(k3, (2, 1, 3 * hd), s),
            "b_hh": uni(k4, (2, 1, 3 * hd), s),
        })

    k, k1, k2, k3, k4, k5 = jax.random.split(k, 6)
    s = 1.0 / float(lstm_hidden_dim) ** 0.5
    params["w_tag"] = uni(k1, (lstm_hidden_dim, tag_set_size), s)
    params["b_tag"] = uni(k2, (1, tag_set_size), s)
    params["transitions"] = 0.1 * jax.random.normal(
        k3, (tag_set_size, tag_set_size), jnp.float32)
    params["start"] = 0.1 * jax.random.normal(k4, (1, tag_set_size), jnp.float32)
    params["end"] = 0.1 * jax.random.normal(k5, (1, tag_set_size), jnp.float32)
    return params


# --------------------------------------------------------------------------
# Full forward (== GRU_CRF.forward): returns CRF neg-log-likelihood loss.
# --------------------------------------------------------------------------
@functools.partial(jax.jit, static_argnames=("tag_set_size",))
def gru_crf_forward(params, x, mask, target, tag_set_size):
    # x: (B, S, E) float32;  mask: (B, S) {0,1};  target: (B, S) int32
    B, S, _ = x.shape

    # time-major, with a leading "feature chunk" axis (C=1 for the raw input)
    h = jnp.transpose(x.astype(jnp.float32), (1, 0, 2))[None]   # (1, S, B, E)

    for layer_params in params["gru"]:
        h = gru_layer(h, layer_params)                          # (2, S, B, hd)
        # TODO(synk): inter-layer GRU dropout (p=0.1) and post-GRU Dropout(0.5)
        # are identity in eval mode and are omitted (no training-mode RNG here).

    mask_f = mask.astype(jnp.float32)
    mask_t = jnp.transpose(mask_f, (1, 0))[:, :, None]          # (S, B, 1)
    tgt_oh = jax.nn.one_hot(jnp.transpose(target, (1, 0)),
                            tag_set_size, dtype=jnp.float32)    # (S, B, T)

    # Gold-path start + transition + end scores (no recurrence) -> vectorized
    # gathers here, keeping the CRF kernel's serial loop minimal.
    start_gold = params["start"][0][target[:, 0]] * mask_f[:, 0]            # (B,)
    tr_gold = jnp.sum(
        params["transitions"][target[:, :-1], target[:, 1:]] * mask_f[:, 1:],
        axis=1)                                                             # (B,)
    lengths = jnp.sum(mask_f, axis=1).astype(jnp.int32)                     # (B,)
    last_tag = jnp.take_along_axis(target, (lengths - 1)[:, None], axis=1)[:, 0]
    end_gold = params["end"][0][last_tag]                                   # (B,)
    gold_static = (start_gold + tr_gold + end_gold)[:, None]                # (B,1)

    loss = crf_nll(h, params["w_tag"], params["b_tag"], mask_t, tgt_oh,
                   gold_static, params["transitions"],
                   params["start"], params["end"])
    return loss[0, 0]


if __name__ == "__main__":
    B, S, E = 2, 8, 300          # embedding_size=300 is fixed by the module
    lstm_hidden_dim = 32         # -> 16 per direction
    tag_set_size = 5

    key = jax.random.PRNGKey(0)
    kp, kx, kt = jax.random.split(key, 3)

    params = init_params(kp, tag_set_size, lstm_hidden_dim, E)

    x = jax.random.normal(kx, (B, S, E), jnp.float32)
    lengths = jnp.array([S, S - 2], dtype=jnp.int32)
    mask = (jnp.arange(S)[None, :] < lengths[:, None]).astype(jnp.float32)
    target = jax.random.randint(kt, (B, S), 0, tag_set_size, dtype=jnp.int32)

    loss = gru_crf_forward(params, x, mask, target, tag_set_size)
    loss = jax.block_until_ready(loss)
    assert loss.shape == () and jnp.isfinite(loss)
    print("KERNEL_OK")
</pallas_src>

<mosaic_0001>
module attributes {stable_mosaic.version = 11 : i64} {
  func.func @gru_layer_kernel(%arg0: i32, %arg1: memref<2x8x2x16xf32, #tpu.memory_space<vmem>>, %arg2: memref<1x32x48xf32, #tpu.memory_space<vmem>>, %arg3: memref<1x16x48xf32, #tpu.memory_space<vmem>>, %arg4: memref<1x1x48xf32, #tpu.memory_space<vmem>>, %arg5: memref<1x1x48xf32, #tpu.memory_space<vmem>>, %arg6: memref<1x8x2x16xf32, #tpu.memory_space<vmem>>, %arg7: memref<8x2x48xf32, #tpu.memory_space<vmem>>) attributes {dimension_semantics = [#tpu.dimension_semantics<parallel>], iteration_bounds = array<i64: 2>, scalar_prefetch = 0 : i64, scratch_operands = 1 : i64, tpu.core_type = #tpu.core_type<tc>, window_params = [{pipeline_mode = #tpu.pipeline_mode<synchronous>, transform_indices = @transform_0, window_bounds = array<i64: 2, 8, 2, 16>}, {transform_indices = @transform_1, window_bounds = array<i64: 1, 32, 48>}, {transform_indices = @transform_2, window_bounds = array<i64: 1, 16, 48>}, {transform_indices = @transform_3, window_bounds = array<i64: 1, 1, 48>}, {transform_indices = @transform_4, window_bounds = array<i64: 1, 1, 48>}, {transform_indices = @transform_5, window_bounds = array<i64: 1, 8, 2, 16>}]} {
    %c0 = arith.constant 0 : index
    %c0_0 = arith.constant 0 : index
    %c0_1 = arith.constant 0 : index
    %0 = vector.load %arg2[%c0, %c0_0, %c0_1] : memref<1x32x48xf32, #tpu.memory_space<vmem>>, vector<1x32x48xf32>
    %1 = vector.shape_cast %0 : vector<1x32x48xf32> to vector<32x48xf32>
    %2 = arith.truncf %1 : vector<32x48xf32> to vector<32x48xbf16>
    %c0_2 = arith.constant 0 : index
    %c0_3 = arith.constant 0 : index
    %c0_4 = arith.constant 0 : index
    %c0_5 = arith.constant 0 : index
    %3 = vector.load %arg1[%c0_2, %c0_3, %c0_4, %c0_5] : memref<2x8x2x16xf32, #tpu.memory_space<vmem>>, vector<1x8x2x16xf32>
    %4 = vector.shape_cast %3 : vector<1x8x2x16xf32> to vector<8x2x16xf32>
    %5 = vector.shape_cast %4 : vector<8x2x16xf32> to vector<16x16xf32>
    %6 = arith.truncf %5 : vector<16x16xf32> to vector<16x16xbf16>
    %7 = vector.extract_strided_slice %2 {offsets = [0, 0], sizes = [16, 48], strides = [1, 1]} : vector<32x48xbf16> to vector<16x48xbf16>
    %cst = arith.constant dense<0.000000e+00> : vector<16x48xf32>
    %8 = tpu.matmul %6, %7, %cst {dimension_numbers = #tpu.dot_dimension_numbers<[1], [0], [0], [1], [0, 0, 1, 1], [], []>} : vector<16x16xbf16>, vector<16x48xbf16>, vector<16x48xf32> -> vector<16x48xf32>
    %c1 = arith.constant 1 : index
    %c0_6 = arith.constant 0 : index
    %c0_7 = arith.constant 0 : index
    %c0_8 = arith.constant 0 : index
    %9 = vector.load %arg1[%c1, %c0_6, %c0_7, %c0_8] : memref<2x8x2x16xf32, #tpu.memory_space<vmem>>, vector<1x8x2x16xf32>
    %10 = vector.shape_cast %9 : vector<1x8x2x16xf32> to vector<8x2x16xf32>
    %11 = vector.shape_cast %10 : vector<8x2x16xf32> to vector<16x16xf32>
    %12 = arith.truncf %11 : vector<16x16xf32> to vector<16x16xbf16>
    %13 = vector.extract_strided_slice %2 {offsets = [16, 0], sizes = [16, 48], strides = [1, 1]} : vector<32x48xbf16> to vector<16x48xbf16>
    %cst_9 = arith.constant dense<0.000000e+00> : vector<16x48xf32>
    %14 = tpu.matmul %12, %13, %cst_9 {dimension_numbers = #tpu.dot_dimension_numbers<[1], [0], [0], [1], [0, 0, 1, 1], [], []>} : vector<16x16xbf16>, vector<16x48xbf16>, vector<16x48xf32> -> vector<16x48xf32>
    %15 = arith.addf %8, %14 : vector<16x48xf32>
    %c0_10 = arith.constant 0 : index
    %c0_11 = arith.constant 0 : index
    %c0_12 = arith.constant 0 : index
    %16 = vector.load %arg4[%c0_10, %c0_11, %c0_12] : memref<1x1x48xf32, #tpu.memory_space<vmem>>, vector<1x1x48xf32>
    %17 = vector.shape_cast %16 : vector<1x1x48xf32> to vector<1x48xf32>
    %18 = vector.broadcast %17 : vector<1x48xf32> to vector<16x48xf32>
    %19 = arith.addf %15, %18 : vector<16x48xf32>
    %20 = vector.shape_cast %19 : vector<16x48xf32> to vector<8x2x48xf32>
    %c0_13 = arith.constant 0 : index
    %c0_14 = arith.constant 0 : index
    %c0_15 = arith.constant 0 : index
    %21 = vector.load %arg7[%c0_13, %c0_14, %c0_15] : memref<8x2x48xf32, #tpu.memory_space<vmem>>, vector<8x2x48xf32>
    tpu.vector_store %arg7[%c0_13, %c0_14, %c0_15], %20 {strides = array<i32>} : memref<8x2x48xf32, #tpu.memory_space<vmem>>, vector<8x2x48xf32>,
    %c0_16 = arith.constant 0 : index
    %c0_17 = arith.constant 0 : index
    %c0_18 = arith.constant 0 : index
    %22 = vector.load %arg3[%c0_16, %c0_17, %c0_18] : memref<1x16x48xf32, #tpu.memory_space<vmem>>, vector<1x16x48xf32>
    %23 = vector.shape_cast %22 : vector<1x16x48xf32> to vector<16x48xf32>
    %24 = arith.truncf %23 : vector<16x48xf32> to vector<16x48xbf16>
    %c0_19 = arith.constant 0 : index
    %c0_20 = arith.constant 0 : index
    %c0_21 = arith.constant 0 : index
    %25 = vector.load %arg5[%c0_19, %c0_20, %c0_21] : memref<1x1x48xf32, #tpu.memory_space<vmem>>, vector<1x1x48xf32>
    %26 = vector.shape_cast %25 : vector<1x1x48xf32> to vector<1x48xf32>
    %cst_22 = arith.constant 0.000000e+00 : f32
    %27 = vector.broadcast %cst_22 : f32 to vector<2x16xf32>
    %c0_i32 = arith.constant 0 : i32
    %c0_i32_23 = arith.constant 0 : i32
    %28 = arith.cmpi eq, %arg0, %c0_i32_23 : i32
    %c7_i32 = arith.constant 7 : i32
    %29 = arith.subi %c7_i32, %c0_i32 : i32
    %30 = arith.select %28, %c0_i32, %29 : i32
    %31 = arith.index_cast %30 : i32 to index
    %c0_24 = arith.constant 0 : index
    %c0_25 = arith.constant 0 : index
    %32 = vector.load %arg7[%31, %c0_24, %c0_25] : memref<8x2x48xf32, #tpu.memory_space<vmem>>, vector<1x2x48xf32>
    %33 = vector.shape_cast %32 : vector<1x2x48xf32> to vector<2x48xf32>
    %34 = arith.truncf %27 : vector<2x16xf32> to vector<2x16xbf16>
    %cst_26 = arith.constant dense<0.000000e+00> : vector<2x48xf32>
    %35 = tpu.matmul %34, %24, %cst_26 {dimension_numbers = #tpu.dot_dimension_numbers<[1], [0], [0], [1], [0, 0, 1, 1], [], []>} : vector<2x16xbf16>, vector<16x48xbf16>, vector<2x48xf32> -> vector<2x48xf32>
    %36 = vector.broadcast %26 : vector<1x48xf32> to vector<2x48xf32>
    %37 = arith.addf %35, %36 : vector<2x48xf32>
    %38 = vector.extract_strided_slice %33 {offsets = [0, 0], sizes = [2, 16], strides = [1, 1]} : vector<2x48xf32> to vector<2x16xf32>
    %39 = vector.extract_strided_slice %37 {offsets = [0, 0], sizes = [2, 16], strides = [1, 1]} : vector<2x48xf32> to vector<2x16xf32>
    %40 = arith.addf %38, %39 : vector<2x16xf32>
    %41 = arith.negf %40 : vector<2x16xf32>
    %42 = math.exp %41 : vector<2x16xf32>
    %cst_27 = arith.constant 1.000000e+00 : f32
    %43 = vector.broadcast %cst_27 : f32 to vector<2x16xf32>
    %44 = arith.addf %43, %42 : vector<2x16xf32>
    %45 = arith.divf %43, %44 : vector<2x16xf32>
    %46 = vector.extract_strided_slice %33 {offsets = [0, 16], sizes = [2, 16], strides = [1, 1]} : vector<2x48xf32> to vector<2x16xf32>
    %47 = vector.extract_strided_slice %37 {offsets = [0, 16], sizes = [2, 16], strides = [1, 1]} : vector<2x48xf32> to vector<2x16xf32>
    %48 = arith.addf %46, %47 : vector<2x16xf32>
    %49 = arith.negf %48 : vector<2x16xf32>
    %50 = math.exp %49 : vector<2x16xf32>
    %cst_28 = arith.constant 1.000000e+00 : f32
    %51 = vector.broadcast %cst_28 : f32 to vector<2x16xf32>
    %52 = arith.addf %51, %50 : vector<2x16xf32>
    %53 = arith.divf %51, %52 : vector<2x16xf32>
    %54 = vector.extract_strided_slice %33 {offsets = [0, 32], sizes = [2, 16], strides = [1, 1]} : vector<2x48xf32> to vector<2x16xf32>
    %55 = vector.extract_strided_slice %37 {offsets = [0, 32], sizes = [2, 16], strides = [1, 1]} : vector<2x48xf32> to vector<2x16xf32>
    %56 = arith.mulf %45, %55 : vector<2x16xf32>
    %57 = arith.addf %54, %56 : vector<2x16xf32>
    %58 = math.tanh %57 : vector<2x16xf32>
    %cst_29 = arith.constant 1.000000e+00 : f32
    %59 = vector.broadcast %cst_29 : f32 to vector<2x16xf32>
    %60 = arith.subf %59, %53 : vector<2x16xf32>
    %61 = arith.mulf %60, %58 : vector<2x16xf32>
    %62 = arith.mulf %53, %27 : vector<2x16xf32>
    %63 = arith.addf %61, %62 : vector<2x16xf32>
    %c0_30 = arith.constant 0 : index
    %64 = arith.index_cast %30 : i32 to index
    %c0_31 = arith.constant 0 : index
    %c0_32 = arith.constant 0 : index
    %65 = vector.load %arg6[%c0_30, %64, %c0_31, %c0_32] : memref<1x8x2x16xf32, #tpu.memory_space<vmem>>, vector<1x1x2x16xf32>
    %66 = vector.shape_cast %65 : vector<1x1x2x16xf32> to vector<2x16xf32>
    %67 = vector.shape_cast %63 : vector<2x16xf32> to vector<1x1x2x16xf32>
    tpu.vector_store %arg6[%c0_30, %64, %c0_31, %c0_32], %67 {strides = array<i32>} : memref<1x8x2x16xf32, #tpu.memory_space<vmem>>, vector<1x1x2x16xf32>,
    %c1_i32 = arith.constant 1 : i32
    %c0_i32_33 = arith.constant 0 : i32
    %68 = arith.cmpi eq, %arg0, %c0_i32_33 : i32
    %c7_i32_34 = arith.constant 7 : i32
    %69 = arith.subi %c7_i32_34, %c1_i32 : i32
    %70 = arith.select %68, %c1_i32, %69 : i32
    %71 = arith.index_cast %70 : i32 to index
    %c0_35 = arith.constant 0 : index
    %c0_36 = arith.constant 0 : index
    %72 = vector.load %arg7[%71, %c0_35, %c0_36] : memref<8x2x48xf32, #tpu.memory_space<vmem>>, vector<1x2x48xf32>
    %73 = vector.shape_cast %72 : vector<1x2x48xf32> to vector<2x48xf32>
    %74 = arith.truncf %63 : vector<2x16xf32> to vector<2x16xbf16>
    %cst_37 = arith.constant dense<0.000000e+00> : vector<2x48xf32>
    %75 = tpu.matmul %74, %24, %cst_37 {dimension_numbers = #tpu.dot_dimension_numbers<[1], [0], [0], [1], [0, 0, 1, 1], [], []>} : vector<2x16xbf16>, vector<16x48xbf16>, vector<2x48xf32> -> vector<2x48xf32>
    %76 = vector.broadcast %26 : vector<1x48xf32> to vector<2x48xf32>
    %77 = arith.addf %75, %76 : vector<2x48xf32>
    %78 = vector.extract_strided_slice %73 {offsets = [0, 0], sizes = [2, 16], strides = [1, 1]} : vector<2x48xf32> to vector<2x16xf32>
    %79 = vector.extract_strided_slice %77 {offsets = [0, 0], sizes = [2, 16], strides = [1, 1]} : vector<2x48xf32> to vector<2x16xf32>
    %80 = arith.addf %78, %79 : vector<2x16xf32>
    %81 = arith.negf %80 : vector<2x16xf32>
    %82 = math.exp %81 : vector<2x16xf32>
    %cst_38 = arith.constant 1.000000e+00 : f32
    %83 = vector.broadcast %cst_38 : f32 to vector<2x16xf32>
    %84 = arith.addf %83, %82 : vector<2x16xf32>
    %85 = arith.divf %83, %84 : vector<2x16xf32>
    %86 = vector.extract_strided_slice %73 {offsets = [0, 16], sizes = [2, 16], strides = [1, 1]} : vector<2x48xf32> to vector<2x16xf32>
    %87 = vector.extract_strided_slice %77 {offsets = [0, 16], sizes = [2, 16], strides = [1, 1]} : vector<2x48xf32> to vector<2x16xf32>
    %88 = arith.addf %86, %87 : vector<2x16xf32>
    %89 = arith.negf %88 : vector<2x16xf32>
    %90 = math.exp %89 : vector<2x16xf32>
    %cst_39 = arith.constant 1.000000e+00 : f32
    %91 = vector.broadcast %cst_39 : f32 to vector<2x16xf32>
    %92 = arith.addf %91, %90 : vector<2x16xf32>
    %93 = arith.divf %91, %92 : vector<2x16xf32>
    %94 = vector.extract_strided_slice %73 {offsets = [0, 32], sizes = [2, 16], strides = [1, 1]} : vector<2x48xf32> to vector<2x16xf32>
    %95 = vector.extract_strided_slice %77 {offsets = [0, 32], sizes = [2, 16], strides = [1, 1]} : vector<2x48xf32> to vector<2x16xf32>
    %96 = arith.mulf %85, %95 : vector<2x16xf32>
    %97 = arith.addf %94, %96 : vector<2x16xf32>
    %98 = math.tanh %97 : vector<2x16xf32>
    %cst_40 = arith.constant 1.000000e+00 : f32
    %99 = vector.broadcast %cst_40 : f32 to vector<2x16xf32>
    %100 = arith.subf %99, %93 : vector<2x16xf32>
    %101 = arith.mulf %100, %98 : vector<2x16xf32>
    %102 = arith.mulf %93, %63 : vector<2x16xf32>
    %103 = arith.addf %101, %102 : vector<2x16xf32>
    %c0_41 = arith.constant 0 : index
    %104 = arith.index_cast %70 : i32 to index
    %c0_42 = arith.constant 0 : index
    %c0_43 = arith.constant 0 : index
    %105 = vector.load %arg6[%c0_41, %104, %c0_42, %c0_43] : memref<1x8x2x16xf32, #tpu.memory_space<vmem>>, vector<1x1x2x16xf32>
    %106 = vector.shape_cast %105 : vector<1x1x2x16xf32> to vector<2x16xf32>
    %107 = vector.shape_cast %103 : vector<2x16xf32> to vector<1x1x2x16xf32>
    tpu.vector_store %arg6[%c0_41, %104, %c0_42, %c0_43], %107 {strides = array<i32>} : memref<1x8x2x16xf32, #tpu.memory_space<vmem>>, vector<1x1x2x16xf32>,
    %c2_i32 = arith.constant 2 : i32
    %c0_i32_44 = arith.constant 0 : i32
    %108 = arith.cmpi eq, %arg0, %c0_i32_44 : i32
    %c7_i32_45 = arith.constant 7 : i32
    %109 = arith.subi %c7_i32_45, %c2_i32 : i32
    %110 = arith.select %108, %c2_i32, %109 : i32
    %111 = arith.index_cast %110 : i32 to index
    %c0_46 = arith.constant 0 : index
    %c0_47 = arith.constant 0 : index
    %112 = vector.load %arg7[%111, %c0_46, %c0_47] : memref<8x2x48xf32, #tpu.memory_space<vmem>>, vector<1x2x48xf32>
    %113 = vector.shape_cast %112 : vector<1x2x48xf32> to vector<2x48xf32>
    %114 = arith.truncf %103 : vector<2x16xf32> to vector<2x16xbf16>
    %cst_48 = arith.constant dense<0.000000e+00> : vector<2x48xf32>
    %115 = tpu.matmul %114, %24, %cst_48 {dimension_numbers = #tpu.dot_dimension_numbers<[1], [0], [0], [1], [0, 0, 1, 1], [], []>} : vector<2x16xbf16>, vector<16x48xbf16>, vector<2x48xf32> -> vector<2x48xf32>
    %116 = vector.broadcast %26 : vector<1x48xf32> to vector<2x48xf32>
    %117 = arith.addf %115, %116 : vector<2x48xf32>
    %118 = vector.extract_strided_slice %113 {offsets = [0, 0], sizes = [2, 16], strides = [1, 1]} : vector<2x48xf32> to vector<2x16xf32>
    %119 = vector.extract_strided_slice %117 {offsets = [0, 0], sizes = [2, 16], strides = [1, 1]} : vector<2x48xf32> to vector<2x16xf32>
    %120 = arith.addf %118, %119 : vector<2x16xf32>
    %121 = arith.negf %120 : vector<2x16xf32>
    %122 = math.exp %121 : vector<2x16xf32>
    %cst_49 = arith.constant 1.000000e+00 : f32
    %123 = vector.broadcast %cst_49 : f32 to vector<2x16xf32>
    %124 = arith.addf %123, %122 : vector<2x16xf32>
    %125 = arith.divf %123, %124 : vector<2x16xf32>
    %126 = vector.extract_strided_slice %113 {offsets = [0, 16], sizes = [2, 16], strides = [1, 1]} : vector<2x48xf32> to vector<2x16xf32>
    %127 = vector.extract_strided_slice %117 {offsets = [0, 16], sizes = [2, 16], strides = [1, 1]} : vector<2x48xf32> to vector<2x16xf32>
    %128 = arith.addf %126, %127 : vector<2x16xf32>
    %129 = arith.negf %128 : vector<2x16xf32>
    %130 = math.exp %129 : vector<2x16xf32>
    %cst_50 = arith.constant 1.000000e+00 : f32
    %131 = vector.broadcast %cst_50 : f32 to vector<2x16xf32>
    %132 = arith.addf %131, %130 : vector<2x16xf32>
    %133 = arith.divf %131, %132 : vector<2x16xf32>
    %134 = vector.extract_strided_slice %113 {offsets = [0, 32], sizes = [2, 16], strides = [1, 1]} : vector<2x48xf32> to vector<2x16xf32>
    %135 = vector.extract_strided_slice %117 {offsets = [0, 32], sizes = [2, 16], strides = [1, 1]} : vector<2x48xf32> to vector<2x16xf32>
    %136 = arith.mulf %125, %135 : vector<2x16xf32>
    %137 = arith.addf %134, %136 : vector<2x16xf32>
    %138 = math.tanh %137 : vector<2x16xf32>
    %cst_51 = arith.constant 1.000000e+00 : f32
    %139 = vector.broadcast %cst_51 : f32 to vector<2x16xf32>
    %140 = arith.subf %139, %133 : vector<2x16xf32>
    %141 = arith.mulf %140, %138 : vector<2x16xf32>
    %142 = arith.mulf %133, %103 : vector<2x16xf32>
    %143 = arith.addf %141, %142 : vector<2x16xf32>
    %c0_52 = arith.constant 0 : index
    %144 = arith.index_cast %110 : i32 to index
    %c0_53 = arith.constant 0 : index
    %c0_54 = arith.constant 0 : index
    %145 = vector.load %arg6[%c0_52, %144, %c0_53, %c0_54] : memref<1x8x2x16xf32, #tpu.memory_space<vmem>>, vector<1x1x2x16xf32>
    %146 = vector.shape_cast %145 : vector<1x1x2x16xf32> to vector<2x16xf32>
    %147 = vector.shape_cast %143 : vector<2x16xf32> to vector<1x1x2x16xf32>
    tpu.vector_store %arg6[%c0_52, %144, %c0_53, %c0_54], %147 {strides = array<i32>} : memref<1x8x2x16xf32, #tpu.memory_space<vmem>>, vector<1x1x2x16xf32>,
    %c3_i32 = arith.constant 3 : i32
    %c0_i32_55 = arith.constant 0 : i32
    %148 = arith.cmpi eq, %arg0, %c0_i32_55 : i32
    %c7_i32_56 = arith.constant 7 : i32
    %149 = arith.subi %c7_i32_56, %c3_i32 : i32
    %150 = arith.select %148, %c3_i32, %149 : i32
    %151 = arith.index_cast %150 : i32 to index
    %c0_57 = arith.constant 0 : index
    %c0_58 = arith.constant 0 : index
    %152 = vector.load %arg7[%151, %c0_57, %c0_58] : memref<8x2x48xf32, #tpu.memory_space<vmem>>, vector<1x2x48xf32>
    %153 = vector.shape_cast %152 : vector<1x2x48xf32> to vector<2x48xf32>
    %154 = arith.truncf %143 : vector<2x16xf32> to vector<2x16xbf16>
    %cst_59 = arith.constant dense<0.000000e+00> : vector<2x48xf32>
    %155 = tpu.matmul %154, %24, %cst_59 {dimension_numbers = #tpu.dot_dimension_numbers<[1], [0], [0], [1], [0, 0, 1, 1], [], []>} : vector<2x16xbf16>, vector<16x48xbf16>, vector<2x48xf32> -> vector<2x48xf32>
    %156 = vector.broadcast %26 : vector<1x48xf32> to vector<2x48xf32>
    %157 = arith.addf %155, %156 : vector<2x48xf32>
    %158 = vector.extract_strided_slice %153 {offsets = [0, 0], sizes = [2, 16], strides = [1, 1]} : vector<2x48xf32> to vector<2x16xf32>
    %159 = vector.extract_strided_slice %157 {offsets = [0, 0], sizes = [2, 16], strides = [1, 1]} : vector<2x48xf32> to vector<2x16xf32>
    %160 = arith.addf %158, %159 : vector<2x16xf32>
    %161 = arith.negf %160 : vector<2x16xf32>
    %162 = math.exp %161 : vector<2x16xf32>
    %cst_60 = arith.constant 1.000000e+00 : f32
    %163 = vector.broadcast %cst_60 : f32 to vector<2x16xf32>
    %164 = arith.addf %163, %162 : vector<2x16xf32>
    %165 = arith.divf %163, %164 : vector<2x16xf32>
    %166 = vector.extract_strided_slice %153 {offsets = [0, 16], sizes = [2, 16], strides = [1, 1]} : vector<2x48xf32> to vector<2x16xf32>
    %167 = vector.extract_strided_slice %157 {offsets = [0, 16], sizes = [2, 16], strides = [1, 1]} : vector<2x48xf32> to vector<2x16xf32>
    %168 = arith.addf %166, %167 : vector<2x16xf32>
    %169 = arith.negf %168 : vector<2x16xf32>
    %170 = math.exp %169 : vector<2x16xf32>
    %cst_61 = arith.constant 1.000000e+00 : f32
    %171 = vector.broadcast %cst_61 : f32 to vector<2x16xf32>
    %172 = arith.addf %171, %170 : vector<2x16xf32>
    %173 = arith.divf %171, %172 : vector<2x16xf32>
    %174 = vector.extract_strided_slice %153 {offsets = [0, 32], sizes = [2, 16], strides = [1, 1]} : vector<2x48xf32> to vector<2x16xf32>
    %175 = vector.extract_strided_slice %157 {offsets = [0, 32], sizes = [2, 16], strides = [1, 1]} : vector<2x48xf32> to vector<2x16xf32>
    %176 = arith.mulf %165, %175 : vector<2x16xf32>
    %177 = arith.addf %174, %176 : vector<2x16xf32>
    %178 = math.tanh %177 : vector<2x16xf32>
    %cst_62 = arith.constant 1.000000e+00 : f32
    %179 = vector.broadcast %cst_62 : f32 to vector<2x16xf32>
    %180 = arith.subf %179, %173 : vector<2x16xf32>
    %181 = arith.mulf %180, %178 : vector<2x16xf32>
    %182 = arith.mulf %173, %143 : vector<2x16xf32>
    %183 = arith.addf %181, %182 : vector<2x16xf32>
    %c0_63 = arith.constant 0 : index
    %184 = arith.index_cast %150 : i32 to index
    %c0_64 = arith.constant 0 : index
    %c0_65 = arith.constant 0 : index
    %185 = vector.load %arg6[%c0_63, %184, %c0_64, %c0_65] : memref<1x8x2x16xf32, #tpu.memory_space<vmem>>, vector<1x1x2x16xf32>
    %186 = vector.shape_cast %185 : vector<1x1x2x16xf32> to vector<2x16xf32>
    %187 = vector.shape_cast %183 : vector<2x16xf32> to vector<1x1x2x16xf32>
    tpu.vector_store %arg6[%c0_63, %184, %c0_64, %c0_65], %187 {strides = array<i32>} : memref<1x8x2x16xf32, #tpu.memory_space<vmem>>, vector<1x1x2x16xf32>,
    %c4_i32 = arith.constant 4 : i32
    %c0_i32_66 = arith.constant 0 : i32
    %188 = arith.cmpi eq, %arg0, %c0_i32_66 : i32
    %c7_i32_67 = arith.constant 7 : i32
    %189 = arith.subi %c7_i32_67, %c4_i32 : i32
    %190 = arith.select %188, %c4_i32, %189 : i32
    %191 = arith.index_cast %190 : i32 to index
    %c0_68 = arith.constant 0 : index
    %c0_69 = arith.constant 0 : index
    %192 = vector.load %arg7[%191, %c0_68, %c0_69] : memref<8x2x48xf32, #tpu.memory_space<vmem>>, vector<1x2x48xf32>
    %193 = vector.shape_cast %192 : vector<1x2x48xf32> to vector<2x48xf32>
    %194 = arith.truncf %183 : vector<2x16xf32> to vector<2x16xbf16>
    %cst_70 = arith.constant dense<0.000000e+00> : vector<2x48xf32>
    %195 = tpu.matmul %194, %24, %cst_70 {dimension_numbers = #tpu.dot_dimension_numbers<[1], [0], [0], [1], [0, 0, 1, 1], [], []>} : vector<2x16xbf16>, vector<16x48xbf16>, vector<2x48xf32> -> vector<2x48xf32>
    %196 = vector.broadcast %26 : vector<1x48xf32> to vector<2x48xf32>
    %197 = arith.addf %195, %196 : vector<2x48xf32>
    %198 = vector.extract_strided_slice %193 {offsets = [0, 0], sizes = [2, 16], strides = [1, 1]} : vector<2x48xf32> to vector<2x16xf32>
    %199 = vector.extract_strided_slice %197 {offsets = [0, 0], sizes = [2, 16], strides = [1, 1]} : vector<2x48xf32> to vector<2x16xf32>
    %200 = arith.addf %198, %199 : vector<2x16xf32>
    %201 = arith.negf %200 : vector<2x16xf32>
    %202 = math.exp %201 : vector<2x16xf32>
    %cst_71 = arith.constant 1.000000e+00 : f32
    %203 = vector.broadcast %cst_71 : f32 to vector<2x16xf32>
    %204 = arith.addf %203, %202 : vector<2x16xf32>
    %205 = arith.divf %203, %204 : vector<2x16xf32>
    %206 = vector.extract_strided_slice %193 {offsets = [0, 16], sizes = [2, 16], strides = [1, 1]} : vector<2x48xf32> to vector<2x16xf32>
    %207 = vector.extract_strided_slice %197 {offsets = [0, 16], sizes = [2, 16], strides = [1, 1]} : vector<2x48xf32> to vector<2x16xf32>
    %208 = arith.addf %206, %207 : vector<2x16xf32>
    %209 = arith.negf %208 : vector<2x16xf32>
    %210 = math.exp %209 : vector<2x16xf32>
    %cst_72 = arith.constant 1.000000e+00 : f32
    %211 = vector.broadcast %cst_72 : f32 to vector<2x16xf32>
    %212 = arith.addf %211, %210 : vector<2x16xf32>
    %213 = arith.divf %211, %212 : vector<2x16xf32>
    %214 = vector.extract_strided_slice %193 {offsets = [0, 32], sizes = [2, 16], strides = [1, 1]} : vector<2x48xf32> to vector<2x16xf32>
    %215 = vector.extract_strided_slice %197 {offsets = [0, 32], sizes = [2, 16], strides = [1, 1]} : vector<2x48xf32> to vector<2x16xf32>
    %216 = arith.mulf %205, %215 : vector<2x16xf32>
    %217 = arith.addf %214, %216 : vector<2x16xf32>
    %218 = math.tanh %217 : vector<2x16xf32>
    %cst_73 = arith.constant 1.000000e+00 : f32
    %219 = vector.broadcast %cst_73 : f32 to vector<2x16xf32>
    %220 = arith.subf %219, %213 : vector<2x16xf32>
    %221 = arith.mulf %220, %218 : vector<2x16xf32>
    %222 = arith.mulf %213, %183 : vector<2x16xf32>
    %223 = arith.addf %221, %222 : vector<2x16xf32>
    %c0_74 = arith.constant 0 : index
    %224 = arith.index_cast %190 : i32 to index
    %c0_75 = arith.constant 0 : index
    %c0_76 = arith.constant 0 : index
    %225 = vector.load %arg6[%c0_74, %224, %c0_75, %c0_76] : memref<1x8x2x16xf32, #tpu.memory_space<vmem>>, vector<1x1x2x16xf32>
    %226 = vector.shape_cast %225 : vector<1x1x2x16xf32> to vector<2x16xf32>
    %227 = vector.shape_cast %223 : vector<2x16xf32> to vector<1x1x2x16xf32>
    tpu.vector_store %arg6[%c0_74, %224, %c0_75, %c0_76], %227 {strides = array<i32>} : memref<1x8x2x16xf32, #tpu.memory_space<vmem>>, vector<1x1x2x16xf32>,
    %c5_i32 = arith.constant 5 : i32
    %c0_i32_77 = arith.constant 0 : i32
    %228 = arith.cmpi eq, %arg0, %c0_i32_77 : i32
    %c7_i32_78 = arith.constant 7 : i32
    %229 = arith.subi %c7_i32_78, %c5_i32 : i32
    %230 = arith.select %228, %c5_i32, %229 : i32
    %231 = arith.index_cast %230 : i32 to index
    %c0_79 = arith.constant 0 : index
    %c0_80 = arith.constant 0 : index
    %232 = vector.load %arg7[%231, %c0_79, %c0_80] : memref<8x2x48xf32, #tpu.memory_space<vmem>>, vector<1x2x48xf32>
    %233 = vector.shape_cast %232 : vector<1x2x48xf32> to vector<2x48xf32>
    %234 = arith.truncf %223 : vector<2x16xf32> to vector<2x16xbf16>
    %cst_81 = arith.constant dense<0.000000e+00> : vector<2x48xf32>
    %235 = tpu.matmul %234, %24, %cst_81 {dimension_numbers = #tpu.dot_dimension_numbers<[1], [0], [0], [1], [0, 0, 1, 1], [], []>} : vector<2x16xbf16>, vector<16x48xbf16>, vector<2x48xf32> -> vector<2x48xf32>
    %236 = vector.broadcast %26 : vector<1x48xf32> to vector<2x48xf32>
    %237 = arith.addf %235, %236 : vector<2x48xf32>
    %238 = vector.extract_strided_slice %233 {offsets = [0, 0], sizes = [2, 16], strides = [1, 1]} : vector<2x48xf32> to vector<2x16xf32>
    %239 = vector.extract_strided_slice %237 {offsets = [0, 0], sizes = [2, 16], strides = [1, 1]} : vector<2x48xf32> to vector<2x16xf32>
    %240 = arith.addf %238, %239 : vector<2x16xf32>
    %241 = arith.negf %240 : vector<2x16xf32>
    %242 = math.exp %241 : vector<2x16xf32>
    %cst_82 = arith.constant 1.000000e+00 : f32
    %243 = vector.broadcast %cst_82 : f32 to vector<2x16xf32>
    %244 = arith.addf %243, %242 : vector<2x16xf32>
    %245 = arith.divf %243, %244 : vector<2x16xf32>
    %246 = vector.extract_strided_slice %233 {offsets = [0, 16], sizes = [2, 16], strides = [1, 1]} : vector<2x48xf32> to vector<2x16xf32>
    %247 = vector.extract_strided_slice %237 {offsets = [0, 16], sizes = [2, 16], strides = [1, 1]} : vector<2x48xf32> to vector<2x16xf32>
    %248 = arith.addf %246, %247 : vector<2x16xf32>
    %249 = arith.negf %248 : vector<2x16xf32>
    %250 = math.exp %249 : vector<2x16xf32>
    %cst_83 = arith.constant 1.000000e+00 : f32
    %251 = vector.broadcast %cst_83 : f32 to vector<2x16xf32>
    %252 = arith.addf %251, %250 : vector<2x16xf32>
    %253 = arith.divf %251, %252 : vector<2x16xf32>
    %254 = vector.extract_strided_slice %233 {offsets = [0, 32], sizes = [2, 16], strides = [1, 1]} : vector<2x48xf32> to vector<2x16xf32>
    %255 = vector.extract_strided_slice %237 {offsets = [0, 32], sizes = [2, 16], strides = [1, 1]} : vector<2x48xf32> to vector<2x16xf32>
    %256 = arith.mulf %245, %255 : vector<2x16xf32>
    %257 = arith.addf %254, %256 : vector<2x16xf32>
    %258 = math.tanh %257 : vector<2x16xf32>
    %cst_84 = arith.constant 1.000000e+00 : f32
    %259 = vector.broadcast %cst_84 : f32 to vector<2x16xf32>
    %260 = arith.subf %259, %253 : vector<2x16xf32>
    %261 = arith.mulf %260, %258 : vector<2x16xf32>
    %262 = arith.mulf %253, %223 : vector<2x16xf32>
    %263 = arith.addf %261, %262 : vector<2x16xf32>
    %c0_85 = arith.constant 0 : index
    %264 = arith.index_cast %230 : i32 to index
    %c0_86 = arith.constant 0 : index
    %c0_87 = arith.constant 0 : index
    %265 = vector.load %arg6[%c0_85, %264, %c0_86, %c0_87] : memref<1x8x2x16xf32, #tpu.memory_space<vmem>>, vector<1x1x2x16xf32>
    %266 = vector.shape_cast %265 : vector<1x1x2x16xf32> to vector<2x16xf32>
    %267 = vector.shape_cast %263 : vector<2x16xf32> to vector<1x1x2x16xf32>
    tpu.vector_store %arg6[%c0_85, %264, %c0_86, %c0_87], %267 {strides = array<i32>} : memref<1x8x2x16xf32, #tpu.memory_space<vmem>>, vector<1x1x2x16xf32>,
    %c6_i32 = arith.constant 6 : i32
    %c0_i32_88 = arith.constant 0 : i32
    %268 = arith.cmpi eq, %arg0, %c0_i32_88 : i32
    %c7_i32_89 = arith.constant 7 : i32
    %269 = arith.subi %c7_i32_89, %c6_i32 : i32
    %270 = arith.select %268, %c6_i32, %269 : i32
    %271 = arith.index_cast %270 : i32 to index
    %c0_90 = arith.constant 0 : index
    %c0_91 = arith.constant 0 : index
    %272 = vector.load %arg7[%271, %c0_90, %c0_91] : memref<8x2x48xf32, #tpu.memory_space<vmem>>, vector<1x2x48xf32>
    %273 = vector.shape_cast %272 : vector<1x2x48xf32> to vector<2x48xf32>
    %274 = arith.truncf %263 : vector<2x16xf32> to vector<2x16xbf16>
    %cst_92 = arith.constant dense<0.000000e+00> : vector<2x48xf32>
    %275 = tpu.matmul %274, %24, %cst_92 {dimension_numbers = #tpu.dot_dimension_numbers<[1], [0], [0], [1], [0, 0, 1, 1], [], []>} : vector<2x16xbf16>, vector<16x48xbf16>, vector<2x48xf32> -> vector<2x48xf32>
    %276 = vector.broadcast %26 : vector<1x48xf32> to vector<2x48xf32>
    %277 = arith.addf %275, %276 : vector<2x48xf32>
    %278 = vector.extract_strided_slice %273 {offsets = [0, 0], sizes = [2, 16], strides = [1, 1]} : vector<2x48xf32> to vector<2x16xf32>
    %279 = vector.extract_strided_slice %277 {offsets = [0, 0], sizes = [2, 16], strides = [1, 1]} : vector<2x48xf32> to vector<2x16xf32>
    %280 = arith.addf %278, %279 : vector<2x16xf32>
    %281 = arith.negf %280 : vector<2x16xf32>
    %282 = math.exp %281 : vector<2x16xf32>
    %cst_93 = arith.constant 1.000000e+00 : f32
    %283 = vector.broadcast %cst_93 : f32 to vector<2x16xf32>
    %284 = arith.addf %283, %282 : vector<2x16xf32>
    %285 = arith.divf %283, %284 : vector<2x16xf32>
    %286 = vector.extract_strided_slice %273 {offsets = [0, 16], sizes = [2, 16], strides = [1, 1]} : vector<2x48xf32> to vector<2x16xf32>
    %287 = vector.extract_strided_slice %277 {offsets = [0, 16], sizes = [2, 16], strides = [1, 1]} : vector<2x48xf32> to vector<2x16xf32>
    %288 = arith.addf %286, %287 : vector<2x16xf32>
    %289 = arith.negf %288 : vector<2x16xf32>
    %290 = math.exp %289 : vector<2x16xf32>
    %cst_94 = arith.constant 1.000000e+00 : f32
    %291 = vector.broadcast %cst_94 : f32 to vector<2x16xf32>
    %292 = arith.addf %291, %290 : vector<2x16xf32>
    %293 = arith.divf %291, %292 : vector<2x16xf32>
    %294 = vector.extract_strided_slice %273 {offsets = [0, 32], sizes = [2, 16], strides = [1, 1]} : vector<2x48xf32> to vector<2x16xf32>
    %295 = vector.extract_strided_slice %277 {offsets = [0, 32], sizes = [2, 16], strides = [1, 1]} : vector<2x48xf32> to vector<2x16xf32>
    %296 = arith.mulf %285, %295 : vector<2x16xf32>
    %297 = arith.addf %294, %296 : vector<2x16xf32>
    %298 = math.tanh %297 : vector<2x16xf32>
    %cst_95 = arith.constant 1.000000e+00 : f32
    %299 = vector.broadcast %cst_95 : f32 to vector<2x16xf32>
    %300 = arith.subf %299, %293 : vector<2x16xf32>
    %301 = arith.mulf %300, %298 : vector<2x16xf32>
    %302 = arith.mulf %293, %263 : vector<2x16xf32>
    %303 = arith.addf %301, %302 : vector<2x16xf32>
    %c0_96 = arith.constant 0 : index
    %304 = arith.index_cast %270 : i32 to index
    %c0_97 = arith.constant 0 : index
    %c0_98 = arith.constant 0 : index
    %305 = vector.load %arg6[%c0_96, %304, %c0_97, %c0_98] : memref<1x8x2x16xf32, #tpu.memory_space<vmem>>, vector<1x1x2x16xf32>
    %306 = vector.shape_cast %305 : vector<1x1x2x16xf32> to vector<2x16xf32>
    %307 = vector.shape_cast %303 : vector<2x16xf32> to vector<1x1x2x16xf32>
    tpu.vector_store %arg6[%c0_96, %304, %c0_97, %c0_98], %307 {strides = array<i32>} : memref<1x8x2x16xf32, #tpu.memory_space<vmem>>, vector<1x1x2x16xf32>,
    %c7_i32_99 = arith.constant 7 : i32
    %c0_i32_100 = arith.constant 0 : i32
    %308 = arith.cmpi eq, %arg0, %c0_i32_100 : i32
    %c7_i32_101 = arith.constant 7 : i32
    %309 = arith.subi %c7_i32_101, %c7_i32_99 : i32
    %310 = arith.select %308, %c7_i32_99, %309 : i32
    %311 = arith.index_cast %310 : i32 to index
    %c0_102 = arith.constant 0 : index
    %c0_103 = arith.constant 0 : index
    %312 = vector.load %arg7[%311, %c0_102, %c0_103] : memref<8x2x48xf32, #tpu.memory_space<vmem>>, vector<1x2x48xf32>
    %313 = vector.shape_cast %312 : vector<1x2x48xf32> to vector<2x48xf32>
    %314 = arith.truncf %303 : vector<2x16xf32> to vector<2x16xbf16>
    %cst_104 = arith.constant dense<0.000000e+00> : vector<2x48xf32>
    %315 = tpu.matmul %314, %24, %cst_104 {dimension_numbers = #tpu.dot_dimension_numbers<[1], [0], [0], [1], [0, 0, 1, 1], [], []>} : vector<2x16xbf16>, vector<16x48xbf16>, vector<2x48xf32> -> vector<2x48xf32>
    %316 = vector.broadcast %26 : vector<1x48xf32> to vector<2x48xf32>
    %317 = arith.addf %315, %316 : vector<2x48xf32>
    %318 = vector.extract_strided_slice %313 {offsets = [0, 0], sizes = [2, 16], strides = [1, 1]} : vector<2x48xf32> to vector<2x16xf32>
    %319 = vector.extract_strided_slice %317 {offsets = [0, 0], sizes = [2, 16], strides = [1, 1]} : vector<2x48xf32> to vector<2x16xf32>
    %320 = arith.addf %318, %319 : vector<2x16xf32>
    %321 = arith.negf %320 : vector<2x16xf32>
    %322 = math.exp %321 : vector<2x16xf32>
    %cst_105 = arith.constant 1.000000e+00 : f32
    %323 = vector.broadcast %cst_105 : f32 to vector<2x16xf32>
    %324 = arith.addf %323, %322 : vector<2x16xf32>
    %325 = arith.divf %323, %324 : vector<2x16xf32>
    %326 = vector.extract_strided_slice %313 {offsets = [0, 16], sizes = [2, 16], strides = [1, 1]} : vector<2x48xf32> to vector<2x16xf32>
    %327 = vector.extract_strided_slice %317 {offsets = [0, 16], sizes = [2, 16], strides = [1, 1]} : vector<2x48xf32> to vector<2x16xf32>
    %328 = arith.addf %326, %327 : vector<2x16xf32>
    %329 = arith.negf %328 : vector<2x16xf32>
    %330 = math.exp %329 : vector<2x16xf32>
    %cst_106 = arith.constant 1.000000e+00 : f32
    %331 = vector.broadcast %cst_106 : f32 to vector<2x16xf32>
    %332 = arith.addf %331, %330 : vector<2x16xf32>
    %333 = arith.divf %331, %332 : vector<2x16xf32>
    %334 = vector.extract_strided_slice %313 {offsets = [0, 32], sizes = [2, 16], strides = [1, 1]} : vector<2x48xf32> to vector<2x16xf32>
    %335 = vector.extract_strided_slice %317 {offsets = [0, 32], sizes = [2, 16], strides = [1, 1]} : vector<2x48xf32> to vector<2x16xf32>
    %336 = arith.mulf %325, %335 : vector<2x16xf32>
    %337 = arith.addf %334, %336 : vector<2x16xf32>
    %338 = math.tanh %337 : vector<2x16xf32>
    %cst_107 = arith.constant 1.000000e+00 : f32
    %339 = vector.broadcast %cst_107 : f32 to vector<2x16xf32>
    %340 = arith.subf %339, %333 : vector<2x16xf32>
    %341 = arith.mulf %340, %338 : vector<2x16xf32>
    %342 = arith.mulf %333, %303 : vector<2x16xf32>
    %343 = arith.addf %341, %342 : vector<2x16xf32>
    %c0_108 = arith.constant 0 : index
    %344 = arith.index_cast %310 : i32 to index
    %c0_109 = arith.constant 0 : index
    %c0_110 = arith.constant 0 : index
    %345 = vector.load %arg6[%c0_108, %344, %c0_109, %c0_110] : memref<1x8x2x16xf32, #tpu.memory_space<vmem>>, vector<1x1x2x16xf32>
    %346 = vector.shape_cast %345 : vector<1x1x2x16xf32> to vector<2x16xf32>
    %347 = vector.shape_cast %343 : vector<2x16xf32> to vector<1x1x2x16xf32>
    tpu.vector_store %arg6[%c0_108, %344, %c0_109, %c0_110], %347 {strides = array<i32>} : memref<1x8x2x16xf32, #tpu.memory_space<vmem>>, vector<1x1x2x16xf32>,
    %c8_i32 = arith.constant 8 : i32
    return
  }
  func.func @transform_0(%arg0: i32) -> (i32, i32, i32, i32) {
    %c0_i32 = arith.constant 0 : i32
    %c0_i32_0 = arith.constant 0 : i32
    %c0_i32_1 = arith.constant 0 : i32
    %c0_i32_2 = arith.constant 0 : i32
    %c0_i32_3 = arith.constant 0 : i32
    return %c0_i32, %c0_i32_0, %c0_i32_1, %c0_i32_2 : i32, i32, i32, i32
  }
  func.func @transform_1(%arg0: i32) -> (i32, i32, i32) {
    %c0_i32 = arith.constant 0 : i32
    %c0_i32_0 = arith.constant 0 : i32
    %c0_i32_1 = arith.constant 0 : i32
    return %arg0, %c0_i32, %c0_i32_0 : i32, i32, i32
  }
  func.func @transform_2(%arg0: i32) -> (i32, i32, i32) {
    %c0_i32 = arith.constant 0 : i32
    %c0_i32_0 = arith.constant 0 : i32
    %c0_i32_1 = arith.constant 0 : i32
    return %arg0, %c0_i32, %c0_i32_0 : i32, i32, i32
  }
  func.func @transform_3(%arg0: i32) -> (i32, i32, i32) {
    %c0_i32 = arith.constant 0 : i32
    %c0_i32_0 = arith.constant 0 : i32
    %c0_i32_1 = arith.constant 0 : i32
    return %arg0, %c0_i32, %c0_i32_0 : i32, i32, i32
  }
  func.func @transform_4(%arg0: i32) -> (i32, i32, i32) {
    %c0_i32 = arith.constant 0 : i32
    %c0_i32_0 = arith.constant 0 : i32
    %c0_i32_1 = arith.constant 0 : i32
    return %arg0, %c0_i32, %c0_i32_0 : i32, i32, i32
  }
  func.func @transform_5(%arg0: i32) -> (i32, i32, i32, i32) {
    %c0_i32 = arith.constant 0 : i32
    %c0_i32_0 = arith.constant 0 : i32
    %c0_i32_1 = arith.constant 0 : i32
    %c0_i32_2 = arith.constant 0 : i32
    return %arg0, %c0_i32, %c0_i32_0, %c0_i32_1 : i32, i32, i32, i32
  }
}

module attributes {stable_mosaic.version = 11 : i64} {
  func.func @gru_layer_kernel(%arg0: i32, %arg1: memref<1x8x2x300xf32, #tpu.memory_space<vmem>>, %arg2: memref<1x300x48xf32, #tpu.memory_space<vmem>>, %arg3: memref<1x16x48xf32, #tpu.memory_space<vmem>>, %arg4: memref<1x1x48xf32, #tpu.memory_space<vmem>>, %arg5: memref<1x1x48xf32, #tpu.memory_space<vmem>>, %arg6: memref<1x8x2x16xf32, #tpu.memory_space<vmem>>, %arg7: memref<8x2x48xf32, #tpu.memory_space<vmem>>) attributes {dimension_semantics = [#tpu.dimension_semantics<parallel>], iteration_bounds = array<i64: 2>, scalar_prefetch = 0 : i64, scratch_operands = 1 : i64, tpu.core_type = #tpu.core_type<tc>, window_params = [{pipeline_mode = #tpu.pipeline_mode<synchronous>, transform_indices = @transform_0, window_bounds = array<i64: 1, 8, 2, 300>}, {transform_indices = @transform_1, window_bounds = array<i64: 1, 300, 48>}, {transform_indices = @transform_2, window_bounds = array<i64: 1, 16, 48>}, {transform_indices = @transform_3, window_bounds = array<i64: 1, 1, 48>}, {transform_indices = @transform_4, window_bounds = array<i64: 1, 1, 48>}, {transform_indices = @transform_5, window_bounds = array<i64: 1, 8, 2, 16>}]} {
    %c0 = arith.constant 0 : index
    %c0_0 = arith.constant 0 : index
    %c0_1 = arith.constant 0 : index
    %0 = vector.load %arg2[%c0, %c0_0, %c0_1] : memref<1x300x48xf32, #tpu.memory_space<vmem>>, vector<1x300x48xf32>
    %1 = vector.shape_cast %0 : vector<1x300x48xf32> to vector<300x48xf32>
    %2 = arith.truncf %1 : vector<300x48xf32> to vector<300x48xbf16>
    %c0_2 = arith.constant 0 : index
    %c0_3 = arith.constant 0 : index
    %c0_4 = arith.constant 0 : index
    %c0_5 = arith.constant 0 : index
    %3 = vector.load %arg1[%c0_2, %c0_3, %c0_4, %c0_5] : memref<1x8x2x300xf32, #tpu.memory_space<vmem>>, vector<1x8x2x300xf32>
    %4 = vector.shape_cast %3 : vector<1x8x2x300xf32> to vector<8x2x300xf32>
    %5 = vector.shape_cast %4 : vector<8x2x300xf32> to vector<16x300xf32>
    %6 = arith.truncf %5 : vector<16x300xf32> to vector<16x300xbf16>
    %cst = arith.constant dense<0.000000e+00> : vector<16x48xf32>
    %7 = tpu.matmul %6, %2, %cst {dimension_numbers = #tpu.dot_dimension_numbers<[1], [0], [0], [1], [0, 0, 1, 1], [], []>} : vector<16x300xbf16>, vector<300x48xbf16>, vector<16x48xf32> -> vector<16x48xf32>
    %c0_6 = arith.constant 0 : index
    %c0_7 = arith.constant 0 : index
    %c0_8 = arith.constant 0 : index
    %8 = vector.load %arg4[%c0_6, %c0_7, %c0_8] : memref<1x1x48xf32, #tpu.memory_space<vmem>>, vector<1x1x48xf32>
    %9 = vector.shape_cast %8 : vector<1x1x48xf32> to vector<1x48xf32>
    %10 = vector.broadcast %9 : vector<1x48xf32> to vector<16x48xf32>
    %11 = arith.addf %7, %10 : vector<16x48xf32>
    %12 = vector.shape_cast %11 : vector<16x48xf32> to vector<8x2x48xf32>
    %c0_9 = arith.constant 0 : index
    %c0_10 = arith.constant 0 : index
    %c0_11 = arith.constant 0 : index
    %13 = vector.load %arg7[%c0_9, %c0_10, %c0_11] : memref<8x2x48xf32, #tpu.memory_space<vmem>>, vector<8x2x48xf32>
    tpu.vector_store %arg7[%c0_9, %c0_10, %c0_11], %12 {strides = array<i32>} : memref<8x2x48xf32, #tpu.memory_space<vmem>>, vector<8x2x48xf32>,
    %c0_12 = arith.constant 0 : index
    %c0_13 = arith.constant 0 : index
    %c0_14 = arith.constant 0 : index
    %14 = vector.load %arg3[%c0_12, %c0_13, %c0_14] : memref<1x16x48xf32, #tpu.memory_space<vmem>>, vector<1x16x48xf32>
    %15 = vector.shape_cast %14 : vector<1x16x48xf32> to vector<16x48xf32>
    %16 = arith.truncf %15 : vector<16x48xf32> to vector<16x48xbf16>
    %c0_15 = arith.constant 0 : index
    %c0_16 = arith.constant 0 : index
    %c0_17 = arith.constant 0 : index
    %17 = vector.load %arg5[%c0_15, %c0_16, %c0_17] : memref<1x1x48xf32, #tpu.memory_space<vmem>>, vector<1x1x48xf32>
    %18 = vector.shape_cast %17 : vector<1x1x48xf32> to vector<1x48xf32>
    %cst_18 = arith.constant 0.000000e+00 : f32
    %19 = vector.broadcast %cst_18 : f32 to vector<2x16xf32>
    %c0_i32 = arith.constant 0 : i32
    %c0_i32_19 = arith.constant 0 : i32
    %20 = arith.cmpi eq, %arg0, %c0_i32_19 : i32
    %c7_i32 = arith.constant 7 : i32
    %21 = arith.subi %c7_i32, %c0_i32 : i32
    %22 = arith.select %20, %c0_i32, %21 : i32
    %23 = arith.index_cast %22 : i32 to index
    %c0_20 = arith.constant 0 : index
    %c0_21 = arith.constant 0 : index
    %24 = vector.load %arg7[%23, %c0_20, %c0_21] : memref<8x2x48xf32, #tpu.memory_space<vmem>>, vector<1x2x48xf32>
    %25 = vector.shape_cast %24 : vector<1x2x48xf32> to vector<2x48xf32>
    %26 = arith.truncf %19 : vector<2x16xf32> to vector<2x16xbf16>
    %cst_22 = arith.constant dense<0.000000e+00> : vector<2x48xf32>
    %27 = tpu.matmul %26, %16, %cst_22 {dimension_numbers = #tpu.dot_dimension_numbers<[1], [0], [0], [1], [0, 0, 1, 1], [], []>} : vector<2x16xbf16>, vector<16x48xbf16>, vector<2x48xf32> -> vector<2x48xf32>
    %28 = vector.broadcast %18 : vector<1x48xf32> to vector<2x48xf32>
    %29 = arith.addf %27, %28 : vector<2x48xf32>
    %30 = vector.extract_strided_slice %25 {offsets = [0, 0], sizes = [2, 16], strides = [1, 1]} : vector<2x48xf32> to vector<2x16xf32>
    %31 = vector.extract_strided_slice %29 {offsets = [0, 0], sizes = [2, 16], strides = [1, 1]} : vector<2x48xf32> to vector<2x16xf32>
    %32 = arith.addf %30, %31 : vector<2x16xf32>
    %33 = arith.negf %32 : vector<2x16xf32>
    %34 = math.exp %33 : vector<2x16xf32>
    %cst_23 = arith.constant 1.000000e+00 : f32
    %35 = vector.broadcast %cst_23 : f32 to vector<2x16xf32>
    %36 = arith.addf %35, %34 : vector<2x16xf32>
    %37 = arith.divf %35, %36 : vector<2x16xf32>
    %38 = vector.extract_strided_slice %25 {offsets = [0, 16], sizes = [2, 16], strides = [1, 1]} : vector<2x48xf32> to vector<2x16xf32>
    %39 = vector.extract_strided_slice %29 {offsets = [0, 16], sizes = [2, 16], strides = [1, 1]} : vector<2x48xf32> to vector<2x16xf32>
    %40 = arith.addf %38, %39 : vector<2x16xf32>
    %41 = arith.negf %40 : vector<2x16xf32>
    %42 = math.exp %41 : vector<2x16xf32>
    %cst_24 = arith.constant 1.000000e+00 : f32
    %43 = vector.broadcast %cst_24 : f32 to vector<2x16xf32>
    %44 = arith.addf %43, %42 : vector<2x16xf32>
    %45 = arith.divf %43, %44 : vector<2x16xf32>
    %46 = vector.extract_strided_slice %25 {offsets = [0, 32], sizes = [2, 16], strides = [1, 1]} : vector<2x48xf32> to vector<2x16xf32>
    %47 = vector.extract_strided_slice %29 {offsets = [0, 32], sizes = [2, 16], strides = [1, 1]} : vector<2x48xf32> to vector<2x16xf32>
    %48 = arith.mulf %37, %47 : vector<2x16xf32>
    %49 = arith.addf %46, %48 : vector<2x16xf32>
    %50 = math.tanh %49 : vector<2x16xf32>
    %cst_25 = arith.constant 1.000000e+00 : f32
    %51 = vector.broadcast %cst_25 : f32 to vector<2x16xf32>
    %52 = arith.subf %51, %45 : vector<2x16xf32>
    %53 = arith.mulf %52, %50 : vector<2x16xf32>
    %54 = arith.mulf %45, %19 : vector<2x16xf32>
    %55 = arith.addf %53, %54 : vector<2x16xf32>
    %c0_26 = arith.constant 0 : index
    %56 = arith.index_cast %22 : i32 to index
    %c0_27 = arith.constant 0 : index
    %c0_28 = arith.constant 0 : index
    %57 = vector.load %arg6[%c0_26, %56, %c0_27, %c0_28] : memref<1x8x2x16xf32, #tpu.memory_space<vmem>>, vector<1x1x2x16xf32>
    %58 = vector.shape_cast %57 : vector<1x1x2x16xf32> to vector<2x16xf32>
    %59 = vector.shape_cast %55 : vector<2x16xf32> to vector<1x1x2x16xf32>
    tpu.vector_store %arg6[%c0_26, %56, %c0_27, %c0_28], %59 {strides = array<i32>} : memref<1x8x2x16xf32, #tpu.memory_space<vmem>>, vector<1x1x2x16xf32>,
    %c1_i32 = arith.constant 1 : i32
    %c0_i32_29 = arith.constant 0 : i32
    %60 = arith.cmpi eq, %arg0, %c0_i32_29 : i32
    %c7_i32_30 = arith.constant 7 : i32
    %61 = arith.subi %c7_i32_30, %c1_i32 : i32
    %62 = arith.select %60, %c1_i32, %61 : i32
    %63 = arith.index_cast %62 : i32 to index
    %c0_31 = arith.constant 0 : index
    %c0_32 = arith.constant 0 : index
    %64 = vector.load %arg7[%63, %c0_31, %c0_32] : memref<8x2x48xf32, #tpu.memory_space<vmem>>, vector<1x2x48xf32>
    %65 = vector.shape_cast %64 : vector<1x2x48xf32> to vector<2x48xf32>
    %66 = arith.truncf %55 : vector<2x16xf32> to vector<2x16xbf16>
    %cst_33 = arith.constant dense<0.000000e+00> : vector<2x48xf32>
    %67 = tpu.matmul %66, %16, %cst_33 {dimension_numbers = #tpu.dot_dimension_numbers<[1], [0], [0], [1], [0, 0, 1, 1], [], []>} : vector<2x16xbf16>, vector<16x48xbf16>, vector<2x48xf32> -> vector<2x48xf32>
    %68 = vector.broadcast %18 : vector<1x48xf32> to vector<2x48xf32>
    %69 = arith.addf %67, %68 : vector<2x48xf32>
    %70 = vector.extract_strided_slice %65 {offsets = [0, 0], sizes = [2, 16], strides = [1, 1]} : vector<2x48xf32> to vector<2x16xf32>
    %71 = vector.extract_strided_slice %69 {offsets = [0, 0], sizes = [2, 16], strides = [1, 1]} : vector<2x48xf32> to vector<2x16xf32>
    %72 = arith.addf %70, %71 : vector<2x16xf32>
    %73 = arith.negf %72 : vector<2x16xf32>
    %74 = math.exp %73 : vector<2x16xf32>
    %cst_34 = arith.constant 1.000000e+00 : f32
    %75 = vector.broadcast %cst_34 : f32 to vector<2x16xf32>
    %76 = arith.addf %75, %74 : vector<2x16xf32>
    %77 = arith.divf %75, %76 : vector<2x16xf32>
    %78 = vector.extract_strided_slice %65 {offsets = [0, 16], sizes = [2, 16], strides = [1, 1]} : vector<2x48xf32> to vector<2x16xf32>
    %79 = vector.extract_strided_slice %69 {offsets = [0, 16], sizes = [2, 16], strides = [1, 1]} : vector<2x48xf32> to vector<2x16xf32>
    %80 = arith.addf %78, %79 : vector<2x16xf32>
    %81 = arith.negf %80 : vector<2x16xf32>
    %82 = math.exp %81 : vector<2x16xf32>
    %cst_35 = arith.constant 1.000000e+00 : f32
    %83 = vector.broadcast %cst_35 : f32 to vector<2x16xf32>
    %84 = arith.addf %83, %82 : vector<2x16xf32>
    %85 = arith.divf %83, %84 : vector<2x16xf32>
    %86 = vector.extract_strided_slice %65 {offsets = [0, 32], sizes = [2, 16], strides = [1, 1]} : vector<2x48xf32> to vector<2x16xf32>
    %87 = vector.extract_strided_slice %69 {offsets = [0, 32], sizes = [2, 16], strides = [1, 1]} : vector<2x48xf32> to vector<2x16xf32>
    %88 = arith.mulf %77, %87 : vector<2x16xf32>
    %89 = arith.addf %86, %88 : vector<2x16xf32>
    %90 = math.tanh %89 : vector<2x16xf32>
    %cst_36 = arith.constant 1.000000e+00 : f32
    %91 = vector.broadcast %cst_36 : f32 to vector<2x16xf32>
    %92 = arith.subf %91, %85 : vector<2x16xf32>
    %93 = arith.mulf %92, %90 : vector<2x16xf32>
    %94 = arith.mulf %85, %55 : vector<2x16xf32>
    %95 = arith.addf %93, %94 : vector<2x16xf32>
    %c0_37 = arith.constant 0 : index
    %96 = arith.index_cast %62 : i32 to index
    %c0_38 = arith.constant 0 : index
    %c0_39 = arith.constant 0 : index
    %97 = vector.load %arg6[%c0_37, %96, %c0_38, %c0_39] : memref<1x8x2x16xf32, #tpu.memory_space<vmem>>, vector<1x1x2x16xf32>
    %98 = vector.shape_cast %97 : vector<1x1x2x16xf32> to vector<2x16xf32>
    %99 = vector.shape_cast %95 : vector<2x16xf32> to vector<1x1x2x16xf32>
    tpu.vector_store %arg6[%c0_37, %96, %c0_38, %c0_39], %99 {strides = array<i32>} : memref<1x8x2x16xf32, #tpu.memory_space<vmem>>, vector<1x1x2x16xf32>,
    %c2_i32 = arith.constant 2 : i32
    %c0_i32_40 = arith.constant 0 : i32
    %100 = arith.cmpi eq, %arg0, %c0_i32_40 : i32
    %c7_i32_41 = arith.constant 7 : i32
    %101 = arith.subi %c7_i32_41, %c2_i32 : i32
    %102 = arith.select %100, %c2_i32, %101 : i32
    %103 = arith.index_cast %102 : i32 to index
    %c0_42 = arith.constant 0 : index
    %c0_43 = arith.constant 0 : index
    %104 = vector.load %arg7[%103, %c0_42, %c0_43] : memref<8x2x48xf32, #tpu.memory_space<vmem>>, vector<1x2x48xf32>
    %105 = vector.shape_cast %104 : vector<1x2x48xf32> to vector<2x48xf32>
    %106 = arith.truncf %95 : vector<2x16xf32> to vector<2x16xbf16>
    %cst_44 = arith.constant dense<0.000000e+00> : vector<2x48xf32>
    %107 = tpu.matmul %106, %16, %cst_44 {dimension_numbers = #tpu.dot_dimension_numbers<[1], [0], [0], [1], [0, 0, 1, 1], [], []>} : vector<2x16xbf16>, vector<16x48xbf16>, vector<2x48xf32> -> vector<2x48xf32>
    %108 = vector.broadcast %18 : vector<1x48xf32> to vector<2x48xf32>
    %109 = arith.addf %107, %108 : vector<2x48xf32>
    %110 = vector.extract_strided_slice %105 {offsets = [0, 0], sizes = [2, 16], strides = [1, 1]} : vector<2x48xf32> to vector<2x16xf32>
    %111 = vector.extract_strided_slice %109 {offsets = [0, 0], sizes = [2, 16], strides = [1, 1]} : vector<2x48xf32> to vector<2x16xf32>
    %112 = arith.addf %110, %111 : vector<2x16xf32>
    %113 = arith.negf %112 : vector<2x16xf32>
    %114 = math.exp %113 : vector<2x16xf32>
    %cst_45 = arith.constant 1.000000e+00 : f32
    %115 = vector.broadcast %cst_45 : f32 to vector<2x16xf32>
    %116 = arith.addf %115, %114 : vector<2x16xf32>
    %117 = arith.divf %115, %116 : vector<2x16xf32>
    %118 = vector.extract_strided_slice %105 {offsets = [0, 16], sizes = [2, 16], strides = [1, 1]} : vector<2x48xf32> to vector<2x16xf32>
    %119 = vector.extract_strided_slice %109 {offsets = [0, 16], sizes = [2, 16], strides = [1, 1]} : vector<2x48xf32> to vector<2x16xf32>
    %120 = arith.addf %118, %119 : vector<2x16xf32>
    %121 = arith.negf %120 : vector<2x16xf32>
    %122 = math.exp %121 : vector<2x16xf32>
    %cst_46 = arith.constant 1.000000e+00 : f32
    %123 = vector.broadcast %cst_46 : f32 to vector<2x16xf32>
    %124 = arith.addf %123, %122 : vector<2x16xf32>
    %125 = arith.divf %123, %124 : vector<2x16xf32>
    %126 = vector.extract_strided_slice %105 {offsets = [0, 32], sizes = [2, 16], strides = [1, 1]} : vector<2x48xf32> to vector<2x16xf32>
    %127 = vector.extract_strided_slice %109 {offsets = [0, 32], sizes = [2, 16], strides = [1, 1]} : vector<2x48xf32> to vector<2x16xf32>
    %128 = arith.mulf %117, %127 : vector<2x16xf32>
    %129 = arith.addf %126, %128 : vector<2x16xf32>
    %130 = math.tanh %129 : vector<2x16xf32>
    %cst_47 = arith.constant 1.000000e+00 : f32
    %131 = vector.broadcast %cst_47 : f32 to vector<2x16xf32>
    %132 = arith.subf %131, %125 : vector<2x16xf32>
    %133 = arith.mulf %132, %130 : vector<2x16xf32>
    %134 = arith.mulf %125, %95 : vector<2x16xf32>
    %135 = arith.addf %133, %134 : vector<2x16xf32>
    %c0_48 = arith.constant 0 : index
    %136 = arith.index_cast %102 : i32 to index
    %c0_49 = arith.constant 0 : index
    %c0_50 = arith.constant 0 : index
    %137 = vector.load %arg6[%c0_48, %136, %c0_49, %c0_50] : memref<1x8x2x16xf32, #tpu.memory_space<vmem>>, vector<1x1x2x16xf32>
    %138 = vector.shape_cast %137 : vector<1x1x2x16xf32> to vector<2x16xf32>
    %139 = vector.shape_cast %135 : vector<2x16xf32> to vector<1x1x2x16xf32>
    tpu.vector_store %arg6[%c0_48, %136, %c0_49, %c0_50], %139 {strides = array<i32>} : memref<1x8x2x16xf32, #tpu.memory_space<vmem>>, vector<1x1x2x16xf32>,
    %c3_i32 = arith.constant 3 : i32
    %c0_i32_51 = arith.constant 0 : i32
    %140 = arith.cmpi eq, %arg0, %c0_i32_51 : i32
    %c7_i32_52 = arith.constant 7 : i32
    %141 = arith.subi %c7_i32_52, %c3_i32 : i32
    %142 = arith.select %140, %c3_i32, %141 : i32
    %143 = arith.index_cast %142 : i32 to index
    %c0_53 = arith.constant 0 : index
    %c0_54 = arith.constant 0 : index
    %144 = vector.load %arg7[%143, %c0_53, %c0_54] : memref<8x2x48xf32, #tpu.memory_space<vmem>>, vector<1x2x48xf32>
    %145 = vector.shape_cast %144 : vector<1x2x48xf32> to vector<2x48xf32>
    %146 = arith.truncf %135 : vector<2x16xf32> to vector<2x16xbf16>
    %cst_55 = arith.constant dense<0.000000e+00> : vector<2x48xf32>
    %147 = tpu.matmul %146, %16, %cst_55 {dimension_numbers = #tpu.dot_dimension_numbers<[1], [0], [0], [1], [0, 0, 1, 1], [], []>} : vector<2x16xbf16>, vector<16x48xbf16>, vector<2x48xf32> -> vector<2x48xf32>
    %148 = vector.broadcast %18 : vector<1x48xf32> to vector<2x48xf32>
    %149 = arith.addf %147, %148 : vector<2x48xf32>
    %150 = vector.extract_strided_slice %145 {offsets = [0, 0], sizes = [2, 16], strides = [1, 1]} : vector<2x48xf32> to vector<2x16xf32>
    %151 = vector.extract_strided_slice %149 {offsets = [0, 0], sizes = [2, 16], strides = [1, 1]} : vector<2x48xf32> to vector<2x16xf32>
    %152 = arith.addf %150, %151 : vector<2x16xf32>
    %153 = arith.negf %152 : vector<2x16xf32>
    %154 = math.exp %153 : vector<2x16xf32>
    %cst_56 = arith.constant 1.000000e+00 : f32
    %155 = vector.broadcast %cst_56 : f32 to vector<2x16xf32>
    %156 = arith.addf %155, %154 : vector<2x16xf32>
    %157 = arith.divf %155, %156 : vector<2x16xf32>
    %158 = vector.extract_strided_slice %145 {offsets = [0, 16], sizes = [2, 16], strides = [1, 1]} : vector<2x48xf32> to vector<2x16xf32>
    %159 = vector.extract_strided_slice %149 {offsets = [0, 16], sizes = [2, 16], strides = [1, 1]} : vector<2x48xf32> to vector<2x16xf32>
    %160 = arith.addf %158, %159 : vector<2x16xf32>
    %161 = arith.negf %160 : vector<2x16xf32>
    %162 = math.exp %161 : vector<2x16xf32>
    %cst_57 = arith.constant 1.000000e+00 : f32
    %163 = vector.broadcast %cst_57 : f32 to vector<2x16xf32>
    %164 = arith.addf %163, %162 : vector<2x16xf32>
    %165 = arith.divf %163, %164 : vector<2x16xf32>
    %166 = vector.extract_strided_slice %145 {offsets = [0, 32], sizes = [2, 16], strides = [1, 1]} : vector<2x48xf32> to vector<2x16xf32>
    %167 = vector.extract_strided_slice %149 {offsets = [0, 32], sizes = [2, 16], strides = [1, 1]} : vector<2x48xf32> to vector<2x16xf32>
    %168 = arith.mulf %157, %167 : vector<2x16xf32>
    %169 = arith.addf %166, %168 : vector<2x16xf32>
    %170 = math.tanh %169 : vector<2x16xf32>
    %cst_58 = arith.constant 1.000000e+00 : f32
    %171 = vector.broadcast %cst_58 : f32 to vector<2x16xf32>
    %172 = arith.subf %171, %165 : vector<2x16xf32>
    %173 = arith.mulf %172, %170 : vector<2x16xf32>
    %174 = arith.mulf %165, %135 : vector<2x16xf32>
    %175 = arith.addf %173, %174 : vector<2x16xf32>
    %c0_59 = arith.constant 0 : index
    %176 = arith.index_cast %142 : i32 to index
    %c0_60 = arith.constant 0 : index
    %c0_61 = arith.constant 0 : index
    %177 = vector.load %arg6[%c0_59, %176, %c0_60, %c0_61] : memref<1x8x2x16xf32, #tpu.memory_space<vmem>>, vector<1x1x2x16xf32>
    %178 = vector.shape_cast %177 : vector<1x1x2x16xf32> to vector<2x16xf32>
    %179 = vector.shape_cast %175 : vector<2x16xf32> to vector<1x1x2x16xf32>
    tpu.vector_store %arg6[%c0_59, %176, %c0_60, %c0_61], %179 {strides = array<i32>} : memref<1x8x2x16xf32, #tpu.memory_space<vmem>>, vector<1x1x2x16xf32>,
    %c4_i32 = arith.constant 4 : i32
    %c0_i32_62 = arith.constant 0 : i32
    %180 = arith.cmpi eq, %arg0, %c0_i32_62 : i32
    %c7_i32_63 = arith.constant 7 : i32
    %181 = arith.subi %c7_i32_63, %c4_i32 : i32
    %182 = arith.select %180, %c4_i32, %181 : i32
    %183 = arith.index_cast %182 : i32 to index
    %c0_64 = arith.constant 0 : index
    %c0_65 = arith.constant 0 : index
    %184 = vector.load %arg7[%183, %c0_64, %c0_65] : memref<8x2x48xf32, #tpu.memory_space<vmem>>, vector<1x2x48xf32>
    %185 = vector.shape_cast %184 : vector<1x2x48xf32> to vector<2x48xf32>
    %186 = arith.truncf %175 : vector<2x16xf32> to vector<2x16xbf16>
    %cst_66 = arith.constant dense<0.000000e+00> : vector<2x48xf32>
    %187 = tpu.matmul %186, %16, %cst_66 {dimension_numbers = #tpu.dot_dimension_numbers<[1], [0], [0], [1], [0, 0, 1, 1], [], []>} : vector<2x16xbf16>, vector<16x48xbf16>, vector<2x48xf32> -> vector<2x48xf32>
    %188 = vector.broadcast %18 : vector<1x48xf32> to vector<2x48xf32>
    %189 = arith.addf %187, %188 : vector<2x48xf32>
    %190 = vector.extract_strided_slice %185 {offsets = [0, 0], sizes = [2, 16], strides = [1, 1]} : vector<2x48xf32> to vector<2x16xf32>
    %191 = vector.extract_strided_slice %189 {offsets = [0, 0], sizes = [2, 16], strides = [1, 1]} : vector<2x48xf32> to vector<2x16xf32>
    %192 = arith.addf %190, %191 : vector<2x16xf32>
    %193 = arith.negf %192 : vector<2x16xf32>
    %194 = math.exp %193 : vector<2x16xf32>
    %cst_67 = arith.constant 1.000000e+00 : f32
    %195 = vector.broadcast %cst_67 : f32 to vector<2x16xf32>
    %196 = arith.addf %195, %194 : vector<2x16xf32>
    %197 = arith.divf %195, %196 : vector<2x16xf32>
    %198 = vector.extract_strided_slice %185 {offsets = [0, 16], sizes = [2, 16], strides = [1, 1]} : vector<2x48xf32> to vector<2x16xf32>
    %199 = vector.extract_strided_slice %189 {offsets = [0, 16], sizes = [2, 16], strides = [1, 1]} : vector<2x48xf32> to vector<2x16xf32>
    %200 = arith.addf %198, %199 : vector<2x16xf32>
    %201 = arith.negf %200 : vector<2x16xf32>
    %202 = math.exp %201 : vector<2x16xf32>
    %cst_68 = arith.constant 1.000000e+00 : f32
    %203 = vector.broadcast %cst_68 : f32 to vector<2x16xf32>
    %204 = arith.addf %203, %202 : vector<2x16xf32>
    %205 = arith.divf %203, %204 : vector<2x16xf32>
    %206 = vector.extract_strided_slice %185 {offsets = [0, 32], sizes = [2, 16], strides = [1, 1]} : vector<2x48xf32> to vector<2x16xf32>
    %207 = vector.extract_strided_slice %189 {offsets = [0, 32], sizes = [2, 16], strides = [1, 1]} : vector<2x48xf32> to vector<2x16xf32>
    %208 = arith.mulf %197, %207 : vector<2x16xf32>
    %209 = arith.addf %206, %208 : vector<2x16xf32>
    %210 = math.tanh %209 : vector<2x16xf32>
    %cst_69 = arith.constant 1.000000e+00 : f32
    %211 = vector.broadcast %cst_69 : f32 to vector<2x16xf32>
    %212 = arith.subf %211, %205 : vector<2x16xf32>
    %213 = arith.mulf %212, %210 : vector<2x16xf32>
    %214 = arith.mulf %205, %175 : vector<2x16xf32>
    %215 = arith.addf %213, %214 : vector<2x16xf32>
    %c0_70 = arith.constant 0 : index
    %216 = arith.index_cast %182 : i32 to index
    %c0_71 = arith.constant 0 : index
    %c0_72 = arith.constant 0 : index
    %217 = vector.load %arg6[%c0_70, %216, %c0_71, %c0_72] : memref<1x8x2x16xf32, #tpu.memory_space<vmem>>, vector<1x1x2x16xf32>
    %218 = vector.shape_cast %217 : vector<1x1x2x16xf32> to vector<2x16xf32>
    %219 = vector.shape_cast %215 : vector<2x16xf32> to vector<1x1x2x16xf32>
    tpu.vector_store %arg6[%c0_70, %216, %c0_71, %c0_72], %219 {strides = array<i32>} : memref<1x8x2x16xf32, #tpu.memory_space<vmem>>, vector<1x1x2x16xf32>,
    %c5_i32 = arith.constant 5 : i32
    %c0_i32_73 = arith.constant 0 : i32
    %220 = arith.cmpi eq, %arg0, %c0_i32_73 : i32
    %c7_i32_74 = arith.constant 7 : i32
    %221 = arith.subi %c7_i32_74, %c5_i32 : i32
    %222 = arith.select %220, %c5_i32, %221 : i32
    %223 = arith.index_cast %222 : i32 to index
    %c0_75 = arith.constant 0 : index
    %c0_76 = arith.constant 0 : index
    %224 = vector.load %arg7[%223, %c0_75, %c0_76] : memref<8x2x48xf32, #tpu.memory_space<vmem>>, vector<1x2x48xf32>
    %225 = vector.shape_cast %224 : vector<1x2x48xf32> to vector<2x48xf32>
    %226 = arith.truncf %215 : vector<2x16xf32> to vector<2x16xbf16>
    %cst_77 = arith.constant dense<0.000000e+00> : vector<2x48xf32>
    %227 = tpu.matmul %226, %16, %cst_77 {dimension_numbers = #tpu.dot_dimension_numbers<[1], [0], [0], [1], [0, 0, 1, 1], [], []>} : vector<2x16xbf16>, vector<16x48xbf16>, vector<2x48xf32> -> vector<2x48xf32>
    %228 = vector.broadcast %18 : vector<1x48xf32> to vector<2x48xf32>
    %229 = arith.addf %227, %228 : vector<2x48xf32>
    %230 = vector.extract_strided_slice %225 {offsets = [0, 0], sizes = [2, 16], strides = [1, 1]} : vector<2x48xf32> to vector<2x16xf32>
    %231 = vector.extract_strided_slice %229 {offsets = [0, 0], sizes = [2, 16], strides = [1, 1]} : vector<2x48xf32> to vector<2x16xf32>
    %232 = arith.addf %230, %231 : vector<2x16xf32>
    %233 = arith.negf %232 : vector<2x16xf32>
    %234 = math.exp %233 : vector<2x16xf32>
    %cst_78 = arith.constant 1.000000e+00 : f32
    %235 = vector.broadcast %cst_78 : f32 to vector<2x16xf32>
    %236 = arith.addf %235, %234 : vector<2x16xf32>
    %237 = arith.divf %235, %236 : vector<2x16xf32>
    %238 = vector.extract_strided_slice %225 {offsets = [0, 16], sizes = [2, 16], strides = [1, 1]} : vector<2x48xf32> to vector<2x16xf32>
    %239 = vector.extract_strided_slice %229 {offsets = [0, 16], sizes = [2, 16], strides = [1, 1]} : vector<2x48xf32> to vector<2x16xf32>
    %240 = arith.addf %238, %239 : vector<2x16xf32>
    %241 = arith.negf %240 : vector<2x16xf32>
    %242 = math.exp %241 : vector<2x16xf32>
    %cst_79 = arith.constant 1.000000e+00 : f32
    %243 = vector.broadcast %cst_79 : f32 to vector<2x16xf32>
    %244 = arith.addf %243, %242 : vector<2x16xf32>
    %245 = arith.divf %243, %244 : vector<2x16xf32>
    %246 = vector.extract_strided_slice %225 {offsets = [0, 32], sizes = [2, 16], strides = [1, 1]} : vector<2x48xf32> to vector<2x16xf32>
    %247 = vector.extract_strided_slice %229 {offsets = [0, 32], sizes = [2, 16], strides = [1, 1]} : vector<2x48xf32> to vector<2x16xf32>
    %248 = arith.mulf %237, %247 : vector<2x16xf32>
    %249 = arith.addf %246, %248 : vector<2x16xf32>
    %250 = math.tanh %249 : vector<2x16xf32>
    %cst_80 = arith.constant 1.000000e+00 : f32
    %251 = vector.broadcast %cst_80 : f32 to vector<2x16xf32>
    %252 = arith.subf %251, %245 : vector<2x16xf32>
    %253 = arith.mulf %252, %250 : vector<2x16xf32>
    %254 = arith.mulf %245, %215 : vector<2x16xf32>
    %255 = arith.addf %253, %254 : vector<2x16xf32>
    %c0_81 = arith.constant 0 : index
    %256 = arith.index_cast %222 : i32 to index
    %c0_82 = arith.constant 0 : index
    %c0_83 = arith.constant 0 : index
    %257 = vector.load %arg6[%c0_81, %256, %c0_82, %c0_83] : memref<1x8x2x16xf32, #tpu.memory_space<vmem>>, vector<1x1x2x16xf32>
    %258 = vector.shape_cast %257 : vector<1x1x2x16xf32> to vector<2x16xf32>
    %259 = vector.shape_cast %255 : vector<2x16xf32> to vector<1x1x2x16xf32>
    tpu.vector_store %arg6[%c0_81, %256, %c0_82, %c0_83], %259 {strides = array<i32>} : memref<1x8x2x16xf32, #tpu.memory_space<vmem>>, vector<1x1x2x16xf32>,
    %c6_i32 = arith.constant 6 : i32
    %c0_i32_84 = arith.constant 0 : i32
    %260 = arith.cmpi eq, %arg0, %c0_i32_84 : i32
    %c7_i32_85 = arith.constant 7 : i32
    %261 = arith.subi %c7_i32_85, %c6_i32 : i32
    %262 = arith.select %260, %c6_i32, %261 : i32
    %263 = arith.index_cast %262 : i32 to index
    %c0_86 = arith.constant 0 : index
    %c0_87 = arith.constant 0 : index
    %264 = vector.load %arg7[%263, %c0_86, %c0_87] : memref<8x2x48xf32, #tpu.memory_space<vmem>>, vector<1x2x48xf32>
    %265 = vector.shape_cast %264 : vector<1x2x48xf32> to vector<2x48xf32>
    %266 = arith.truncf %255 : vector<2x16xf32> to vector<2x16xbf16>
    %cst_88 = arith.constant dense<0.000000e+00> : vector<2x48xf32>
    %267 = tpu.matmul %266, %16, %cst_88 {dimension_numbers = #tpu.dot_dimension_numbers<[1], [0], [0], [1], [0, 0, 1, 1], [], []>} : vector<2x16xbf16>, vector<16x48xbf16>, vector<2x48xf32> -> vector<2x48xf32>
    %268 = vector.broadcast %18 : vector<1x48xf32> to vector<2x48xf32>
    %269 = arith.addf %267, %268 : vector<2x48xf32>
    %270 = vector.extract_strided_slice %265 {offsets = [0, 0], sizes = [2, 16], strides = [1, 1]} : vector<2x48xf32> to vector<2x16xf32>
    %271 = vector.extract_strided_slice %269 {offsets = [0, 0], sizes = [2, 16], strides = [1, 1]} : vector<2x48xf32> to vector<2x16xf32>
    %272 = arith.addf %270, %271 : vector<2x16xf32>
    %273 = arith.negf %272 : vector<2x16xf32>
    %274 = math.exp %273 : vector<2x16xf32>
    %cst_89 = arith.constant 1.000000e+00 : f32
    %275 = vector.broadcast %cst_89 : f32 to vector<2x16xf32>
    %276 = arith.addf %275, %274 : vector<2x16xf32>
    %277 = arith.divf %275, %276 : vector<2x16xf32>
    %278 = vector.extract_strided_slice %265 {offsets = [0, 16], sizes = [2, 16], strides = [1, 1]} : vector<2x48xf32> to vector<2x16xf32>
    %279 = vector.extract_strided_slice %269 {offsets = [0, 16], sizes = [2, 16], strides = [1, 1]} : vector<2x48xf32> to vector<2x16xf32>
    %280 = arith.addf %278, %279 : vector<2x16xf32>
    %281 = arith.negf %280 : vector<2x16xf32>
    %282 = math.exp %281 : vector<2x16xf32>
    %cst_90 = arith.constant 1.000000e+00 : f32
    %283 = vector.broadcast %cst_90 : f32 to vector<2x16xf32>
    %284 = arith.addf %283, %282 : vector<2x16xf32>
    %285 = arith.divf %283, %284 : vector<2x16xf32>
    %286 = vector.extract_strided_slice %265 {offsets = [0, 32], sizes = [2, 16], strides = [1, 1]} : vector<2x48xf32> to vector<2x16xf32>
    %287 = vector.extract_strided_slice %269 {offsets = [0, 32], sizes = [2, 16], strides = [1, 1]} : vector<2x48xf32> to vector<2x16xf32>
    %288 = arith.mulf %277, %287 : vector<2x16xf32>
    %289 = arith.addf %286, %288 : vector<2x16xf32>
    %290 = math.tanh %289 : vector<2x16xf32>
    %cst_91 = arith.constant 1.000000e+00 : f32
    %291 = vector.broadcast %cst_91 : f32 to vector<2x16xf32>
    %292 = arith.subf %291, %285 : vector<2x16xf32>
    %293 = arith.mulf %292, %290 : vector<2x16xf32>
    %294 = arith.mulf %285, %255 : vector<2x16xf32>
    %295 = arith.addf %293, %294 : vector<2x16xf32>
    %c0_92 = arith.constant 0 : index
    %296 = arith.index_cast %262 : i32 to index
    %c0_93 = arith.constant 0 : index
    %c0_94 = arith.constant 0 : index
    %297 = vector.load %arg6[%c0_92, %296, %c0_93, %c0_94] : memref<1x8x2x16xf32, #tpu.memory_space<vmem>>, vector<1x1x2x16xf32>
    %298 = vector.shape_cast %297 : vector<1x1x2x16xf32> to vector<2x16xf32>
    %299 = vector.shape_cast %295 : vector<2x16xf32> to vector<1x1x2x16xf32>
    tpu.vector_store %arg6[%c0_92, %296, %c0_93, %c0_94], %299 {strides = array<i32>} : memref<1x8x2x16xf32, #tpu.memory_space<vmem>>, vector<1x1x2x16xf32>,
    %c7_i32_95 = arith.constant 7 : i32
    %c0_i32_96 = arith.constant 0 : i32
    %300 = arith.cmpi eq, %arg0, %c0_i32_96 : i32
    %c7_i32_97 = arith.constant 7 : i32
    %301 = arith.subi %c7_i32_97, %c7_i32_95 : i32
    %302 = arith.select %300, %c7_i32_95, %301 : i32
    %303 = arith.index_cast %302 : i32 to index
    %c0_98 = arith.constant 0 : index
    %c0_99 = arith.constant 0 : index
    %304 = vector.load %arg7[%303, %c0_98, %c0_99] : memref<8x2x48xf32, #tpu.memory_space<vmem>>, vector<1x2x48xf32>
    %305 = vector.shape_cast %304 : vector<1x2x48xf32> to vector<2x48xf32>
    %306 = arith.truncf %295 : vector<2x16xf32> to vector<2x16xbf16>
    %cst_100 = arith.constant dense<0.000000e+00> : vector<2x48xf32>
    %307 = tpu.matmul %306, %16, %cst_100 {dimension_numbers = #tpu.dot_dimension_numbers<[1], [0], [0], [1], [0, 0, 1, 1], [], []>} : vector<2x16xbf16>, vector<16x48xbf16>, vector<2x48xf32> -> vector<2x48xf32>
    %308 = vector.broadcast %18 : vector<1x48xf32> to vector<2x48xf32>
    %309 = arith.addf %307, %308 : vector<2x48xf32>
    %310 = vector.extract_strided_slice %305 {offsets = [0, 0], sizes = [2, 16], strides = [1, 1]} : vector<2x48xf32> to vector<2x16xf32>
    %311 = vector.extract_strided_slice %309 {offsets = [0, 0], sizes = [2, 16], strides = [1, 1]} : vector<2x48xf32> to vector<2x16xf32>
    %312 = arith.addf %310, %311 : vector<2x16xf32>
    %313 = arith.negf %312 : vector<2x16xf32>
    %314 = math.exp %313 : vector<2x16xf32>
    %cst_101 = arith.constant 1.000000e+00 : f32
    %315 = vector.broadcast %cst_101 : f32 to vector<2x16xf32>
    %316 = arith.addf %315, %314 : vector<2x16xf32>
    %317 = arith.divf %315, %316 : vector<2x16xf32>
    %318 = vector.extract_strided_slice %305 {offsets = [0, 16], sizes = [2, 16], strides = [1, 1]} : vector<2x48xf32> to vector<2x16xf32>
    %319 = vector.extract_strided_slice %309 {offsets = [0, 16], sizes = [2, 16], strides = [1, 1]} : vector<2x48xf32> to vector<2x16xf32>
    %320 = arith.addf %318, %319 : vector<2x16xf32>
    %321 = arith.negf %320 : vector<2x16xf32>
    %322 = math.exp %321 : vector<2x16xf32>
    %cst_102 = arith.constant 1.000000e+00 : f32
    %323 = vector.broadcast %cst_102 : f32 to vector<2x16xf32>
    %324 = arith.addf %323, %322 : vector<2x16xf32>
    %325 = arith.divf %323, %324 : vector<2x16xf32>
    %326 = vector.extract_strided_slice %305 {offsets = [0, 32], sizes = [2, 16], strides = [1, 1]} : vector<2x48xf32> to vector<2x16xf32>
    %327 = vector.extract_strided_slice %309 {offsets = [0, 32], sizes = [2, 16], strides = [1, 1]} : vector<2x48xf32> to vector<2x16xf32>
    %328 = arith.mulf %317, %327 : vector<2x16xf32>
    %329 = arith.addf %326, %328 : vector<2x16xf32>
    %330 = math.tanh %329 : vector<2x16xf32>
    %cst_103 = arith.constant 1.000000e+00 : f32
    %331 = vector.broadcast %cst_103 : f32 to vector<2x16xf32>
    %332 = arith.subf %331, %325 : vector<2x16xf32>
    %333 = arith.mulf %332, %330 : vector<2x16xf32>
    %334 = arith.mulf %325, %295 : vector<2x16xf32>
    %335 = arith.addf %333, %334 : vector<2x16xf32>
    %c0_104 = arith.constant 0 : index
    %336 = arith.index_cast %302 : i32 to index
    %c0_105 = arith.constant 0 : index
    %c0_106 = arith.constant 0 : index
    %337 = vector.load %arg6[%c0_104, %336, %c0_105, %c0_106] : memref<1x8x2x16xf32, #tpu.memory_space<vmem>>, vector<1x1x2x16xf32>
    %338 = vector.shape_cast %337 : vector<1x1x2x16xf32> to vector<2x16xf32>
    %339 = vector.shape_cast %335 : vector<2x16xf32> to vector<1x1x2x16xf32>
    tpu.vector_store %arg6[%c0_104, %336, %c0_105, %c0_106], %339 {strides = array<i32>} : memref<1x8x2x16xf32, #tpu.memory_space<vmem>>, vector<1x1x2x16xf32>,
    %c8_i32 = arith.constant 8 : i32
    return
  }
  func.func @transform_0(%arg0: i32) -> (i32, i32, i32, i32) {
    %c0_i32 = arith.constant 0 : i32
    %c0_i32_0 = arith.constant 0 : i32
    %c0_i32_1 = arith.constant 0 : i32
    %c0_i32_2 = arith.constant 0 : i32
    %c0_i32_3 = arith.constant 0 : i32
    return %c0_i32, %c0_i32_0, %c0_i32_1, %c0_i32_2 : i32, i32, i32, i32
  }
  func.func @transform_1(%arg0: i32) -> (i32, i32, i32) {
    %c0_i32 = arith.constant 0 : i32
    %c0_i32_0 = arith.constant 0 : i32
    %c0_i32_1 = arith.constant 0 : i32
    return %arg0, %c0_i32, %c0_i32_0 : i32, i32, i32
  }
  func.func @transform_2(%arg0: i32) -> (i32, i32, i32) {
    %c0_i32 = arith.constant 0 : i32
    %c0_i32_0 = arith.constant 0 : i32
    %c0_i32_1 = arith.constant 0 : i32
    return %arg0, %c0_i32, %c0_i32_0 : i32, i32, i32
  }
  func.func @transform_3(%arg0: i32) -> (i32, i32, i32) {
    %c0_i32 = arith.constant 0 : i32
    %c0_i32_0 = arith.constant 0 : i32
    %c0_i32_1 = arith.constant 0 : i32
    return %arg0, %c0_i32, %c0_i32_0 : i32, i32, i32
  }
  func.func @transform_4(%arg0: i32) -> (i32, i32, i32) {
    %c0_i32 = arith.constant 0 : i32
    %c0_i32_0 = arith.constant 0 : i32
    %c0_i32_1 = arith.constant 0 : i32
    return %arg0, %c0_i32, %c0_i32_0 : i32, i32, i32
  }
  func.func @transform_5(%arg0: i32) -> (i32, i32, i32, i32) {
    %c0_i32 = arith.constant 0 : i32
    %c0_i32_0 = arith.constant 0 : i32
    %c0_i32_1 = arith.constant 0 : i32
    %c0_i32_2 = arith.constant 0 : i32
    return %arg0, %c0_i32, %c0_i32_0, %c0_i32_1 : i32, i32, i32, i32
  }
}

module attributes {stable_mosaic.version = 11 : i64} {
  func.func @crf_nll_kernel(%arg0: memref<2x8x2x16xf32, #tpu.memory_space<vmem>>, %arg1: memref<32x5xf32, #tpu.memory_space<vmem>>, %arg2: memref<1x5xf32, #tpu.memory_space<vmem>>, %arg3: memref<8x2x1xf32, #tpu.memory_space<vmem>>, %arg4: memref<8x2x5xf32, #tpu.memory_space<vmem>>, %arg5: memref<2x1xf32, #tpu.memory_space<vmem>>, %arg6: memref<5x5xf32, #tpu.memory_space<vmem>>, %arg7: memref<1x5xf32, #tpu.memory_space<vmem>>, %arg8: memref<1x5xf32, #tpu.memory_space<vmem>>, %arg9: memref<1x1xf32, #tpu.memory_space<vmem>>, %arg10: memref<8x2x5xf32, #tpu.memory_space<vmem>>) attributes {dimension_semantics = [], scalar_prefetch = 0 : i64, scratch_operands = 1 : i64, tpu.core_type = #tpu.core_type<tc>} {
    %c0 = arith.constant 0 : index
    %c0_0 = arith.constant 0 : index
    %0 = vector.load %arg1[%c0, %c0_0] : memref<32x5xf32, #tpu.memory_space<vmem>>, vector<32x5xf32>
    %1 = arith.truncf %0 : vector<32x5xf32> to vector<32x5xbf16>
    %c0_1 = arith.constant 0 : index
    %c0_2 = arith.constant 0 : index
    %c0_3 = arith.constant 0 : index
    %c0_4 = arith.constant 0 : index
    %2 = vector.load %arg0[%c0_1, %c0_2, %c0_3, %c0_4] : memref<2x8x2x16xf32, #tpu.memory_space<vmem>>, vector<1x8x2x16xf32>
    %3 = vector.shape_cast %2 : vector<1x8x2x16xf32> to vector<8x2x16xf32>
    %4 = vector.shape_cast %3 : vector<8x2x16xf32> to vector<16x16xf32>
    %5 = arith.truncf %4 : vector<16x16xf32> to vector<16x16xbf16>
    %6 = vector.extract_strided_slice %1 {offsets = [0, 0], sizes = [16, 5], strides = [1, 1]} : vector<32x5xbf16> to vector<16x5xbf16>
    %cst = arith.constant dense<0.000000e+00> : vector<16x5xf32>
    %7 = tpu.matmul %5, %6, %cst {dimension_numbers = #tpu.dot_dimension_numbers<[1], [0], [0], [1], [0, 0, 1, 1], [], []>} : vector<16x16xbf16>, vector<16x5xbf16>, vector<16x5xf32> -> vector<16x5xf32>
    %c1 = arith.constant 1 : index
    %c0_5 = arith.constant 0 : index
    %c0_6 = arith.constant 0 : index
    %c0_7 = arith.constant 0 : index
    %8 = vector.load %arg0[%c1, %c0_5, %c0_6, %c0_7] : memref<2x8x2x16xf32, #tpu.memory_space<vmem>>, vector<1x8x2x16xf32>
    %9 = vector.shape_cast %8 : vector<1x8x2x16xf32> to vector<8x2x16xf32>
    %10 = vector.shape_cast %9 : vector<8x2x16xf32> to vector<16x16xf32>
    %11 = arith.truncf %10 : vector<16x16xf32> to vector<16x16xbf16>
    %12 = vector.extract_strided_slice %1 {offsets = [16, 0], sizes = [16, 5], strides = [1, 1]} : vector<32x5xbf16> to vector<16x5xbf16>
    %cst_8 = arith.constant dense<0.000000e+00> : vector<16x5xf32>
    %13 = tpu.matmul %11, %12, %cst_8 {dimension_numbers = #tpu.dot_dimension_numbers<[1], [0], [0], [1], [0, 0, 1, 1], [], []>} : vector<16x16xbf16>, vector<16x5xbf16>, vector<16x5xf32> -> vector<16x5xf32>
    %14 = arith.addf %7, %13 : vector<16x5xf32>
    %c0_9 = arith.constant 0 : index
    %c0_10 = arith.constant 0 : index
    %15 = vector.load %arg2[%c0_9, %c0_10] : memref<1x5xf32, #tpu.memory_space<vmem>>, vector<1x5xf32>
    %16 = vector.broadcast %15 : vector<1x5xf32> to vector<16x5xf32>
    %17 = arith.addf %14, %16 : vector<16x5xf32>
    %18 = vector.shape_cast %17 : vector<16x5xf32> to vector<8x2x5xf32>
    %c0_11 = arith.constant 0 : index
    %c0_12 = arith.constant 0 : index
    %c0_13 = arith.constant 0 : index
    %19 = vector.load %arg10[%c0_11, %c0_12, %c0_13] : memref<8x2x5xf32, #tpu.memory_space<vmem>>, vector<8x2x5xf32>
    tpu.vector_store %arg10[%c0_11, %c0_12, %c0_13], %18 {strides = array<i32>} : memref<8x2x5xf32, #tpu.memory_space<vmem>>, vector<8x2x5xf32>,
    %c0_14 = arith.constant 0 : index
    %c0_15 = arith.constant 0 : index
    %20 = vector.load %arg6[%c0_14, %c0_15] : memref<5x5xf32, #tpu.memory_space<vmem>>, vector<5x5xf32>
    %c0_16 = arith.constant 0 : index
    %c0_17 = arith.constant 0 : index
    %21 = vector.load %arg7[%c0_16, %c0_17] : memref<1x5xf32, #tpu.memory_space<vmem>>, vector<1x5xf32>
    %c0_18 = arith.constant 0 : index
    %c0_19 = arith.constant 0 : index
    %22 = vector.load %arg8[%c0_18, %c0_19] : memref<1x5xf32, #tpu.memory_space<vmem>>, vector<1x5xf32>
    %c0_20 = arith.constant 0 : index
    %c0_21 = arith.constant 0 : index
    %c0_22 = arith.constant 0 : index
    %23 = vector.load %arg3[%c0_20, %c0_21, %c0_22] : memref<8x2x1xf32, #tpu.memory_space<vmem>>, vector<8x2x1xf32>
    %c0_23 = arith.constant 0 : index
    %c0_24 = arith.constant 0 : index
    %c0_25 = arith.constant 0 : index
    %24 = vector.load %arg4[%c0_23, %c0_24, %c0_25] : memref<8x2x5xf32, #tpu.memory_space<vmem>>, vector<8x2x5xf32>
    %25 = arith.mulf %24, %18 : vector<8x2x5xf32>
    %cst_26 = arith.constant dense<0.000000e+00> : vector<8x2xf32>
    %26 = vector.multi_reduction <add>, %25, %cst_26 [2] : vector<8x2x5xf32> to vector<8x2xf32>
    %27 = vector.shape_cast %26 : vector<8x2xf32> to vector<8x2x1xf32>
    %28 = arith.mulf %27, %23 : vector<8x2x1xf32>
    %cst_27 = arith.constant dense<0.000000e+00> : vector<2x1xf32>
    %29 = vector.multi_reduction <add>, %28, %cst_27 [0] : vector<8x2x1xf32> to vector<2x1xf32>
    %c0_28 = arith.constant 0 : index
    %c0_29 = arith.constant 0 : index
    %30 = vector.load %arg5[%c0_28, %c0_29] : memref<2x1xf32, #tpu.memory_space<vmem>>, vector<2x1xf32>
    %31 = arith.addf %30, %29 : vector<2x1xf32>
    %32 = vector.shape_cast %20 : vector<5x5xf32> to vector<1x5x5xf32>
    %c0_30 = arith.constant 0 : index
    %c0_31 = arith.constant 0 : index
    %c0_32 = arith.constant 0 : index
    %33 = vector.load %arg10[%c0_30, %c0_31, %c0_32] : memref<8x2x5xf32, #tpu.memory_space<vmem>>, vector<1x2x5xf32>
    %34 = vector.shape_cast %33 : vector<1x2x5xf32> to vector<2x5xf32>
    %35 = vector.broadcast %21 : vector<1x5xf32> to vector<2x5xf32>
    %36 = arith.addf %35, %34 : vector<2x5xf32>
    %c1_i32 = arith.constant 1 : i32
    %37 = arith.index_cast %c1_i32 : i32 to index
    %c0_33 = arith.constant 0 : index
    %c0_34 = arith.constant 0 : index
    %38 = vector.load %arg10[%37, %c0_33, %c0_34] : memref<8x2x5xf32, #tpu.memory_space<vmem>>, vector<1x2x5xf32>
    %39 = vector.shape_cast %38 : vector<1x2x5xf32> to vector<2x5xf32>
    %40 = arith.index_cast %c1_i32 : i32 to index
    %c0_35 = arith.constant 0 : index
    %c0_36 = arith.constant 0 : index
    %41 = vector.load %arg3[%40, %c0_35, %c0_36] : memref<8x2x1xf32, #tpu.memory_space<vmem>>, vector<1x2x1xf32>
    %42 = vector.shape_cast %41 : vector<1x2x1xf32> to vector<2x1xf32>
    %43 = vector.shape_cast %36 : vector<2x5xf32> to vector<2x5x1xf32>
    %44 = vector.broadcast %43 : vector<2x5x1xf32> to vector<2x5x5xf32>
    %45 = vector.broadcast %32 : vector<1x5x5xf32> to vector<2x5x5xf32>
    %46 = arith.addf %44, %45 : vector<2x5x5xf32>
    %47 = vector.shape_cast %39 : vector<2x5xf32> to vector<2x1x5xf32>
    %48 = vector.broadcast %47 : vector<2x1x5xf32> to vector<2x5x5xf32>
    %49 = arith.addf %46, %48 : vector<2x5x5xf32>
    %cst_37 = arith.constant dense<0xFF800000> : vector<2x5xf32>
    %50 = vector.multi_reduction <maximumf>, %49, %cst_37 [1] : vector<2x5x5xf32> to vector<2x5xf32>
    %51 = vector.shape_cast %50 : vector<2x5xf32> to vector<2x1x5xf32>
    %52 = vector.broadcast %51 : vector<2x1x5xf32> to vector<2x5x5xf32>
    %53 = arith.subf %49, %52 : vector<2x5x5xf32>
    %54 = math.exp %53 : vector<2x5x5xf32>
    %cst_38 = arith.constant dense<0.000000e+00> : vector<2x5xf32>
    %55 = vector.multi_reduction <add>, %54, %cst_38 [1] : vector<2x5x5xf32> to vector<2x5xf32>
    %56 = math.log %55 : vector<2x5xf32>
    %57 = vector.shape_cast %51 : vector<2x1x5xf32> to vector<2x5xf32>
    %58 = arith.addf %56, %57 : vector<2x5xf32>
    %cst_39 = arith.constant 5.000000e-01 : f32
    %59 = vector.broadcast %cst_39 : f32 to vector<2x1xf32>
    %60 = arith.cmpf ogt, %42, %59 : vector<2x1xf32>
    %61 = vector.shape_cast %60 : vector<2x1xi1> to vector<2x1xi1>
    %62 = vector.broadcast %61 : vector<2x1xi1> to vector<2x5xi1>
    %63 = arith.select %62, %58, %36 : vector<2x5xi1>, vector<2x5xf32>
    %c2_i32 = arith.constant 2 : i32
    %64 = arith.index_cast %c2_i32 : i32 to index
    %c0_40 = arith.constant 0 : index
    %c0_41 = arith.constant 0 : index
    %65 = vector.load %arg10[%64, %c0_40, %c0_41] : memref<8x2x5xf32, #tpu.memory_space<vmem>>, vector<1x2x5xf32>
    %66 = vector.shape_cast %65 : vector<1x2x5xf32> to vector<2x5xf32>
    %67 = arith.index_cast %c2_i32 : i32 to index
    %c0_42 = arith.constant 0 : index
    %c0_43 = arith.constant 0 : index
    %68 = vector.load %arg3[%67, %c0_42, %c0_43] : memref<8x2x1xf32, #tpu.memory_space<vmem>>, vector<1x2x1xf32>
    %69 = vector.shape_cast %68 : vector<1x2x1xf32> to vector<2x1xf32>
    %70 = vector.shape_cast %63 : vector<2x5xf32> to vector<2x5x1xf32>
    %71 = vector.broadcast %70 : vector<2x5x1xf32> to vector<2x5x5xf32>
    %72 = vector.broadcast %32 : vector<1x5x5xf32> to vector<2x5x5xf32>
    %73 = arith.addf %71, %72 : vector<2x5x5xf32>
    %74 = vector.shape_cast %66 : vector<2x5xf32> to vector<2x1x5xf32>
    %75 = vector.broadcast %74 : vector<2x1x5xf32> to vector<2x5x5xf32>
    %76 = arith.addf %73, %75 : vector<2x5x5xf32>
    %cst_44 = arith.constant dense<0xFF800000> : vector<2x5xf32>
    %77 = vector.multi_reduction <maximumf>, %76, %cst_44 [1] : vector<2x5x5xf32> to vector<2x5xf32>
    %78 = vector.shape_cast %77 : vector<2x5xf32> to vector<2x1x5xf32>
    %79 = vector.broadcast %78 : vector<2x1x5xf32> to vector<2x5x5xf32>
    %80 = arith.subf %76, %79 : vector<2x5x5xf32>
    %81 = math.exp %80 : vector<2x5x5xf32>
    %cst_45 = arith.constant dense<0.000000e+00> : vector<2x5xf32>
    %82 = vector.multi_reduction <add>, %81, %cst_45 [1] : vector<2x5x5xf32> to vector<2x5xf32>
    %83 = math.log %82 : vector<2x5xf32>
    %84 = vector.shape_cast %78 : vector<2x1x5xf32> to vector<2x5xf32>
    %85 = arith.addf %83, %84 : vector<2x5xf32>
    %cst_46 = arith.constant 5.000000e-01 : f32
    %86 = vector.broadcast %cst_46 : f32 to vector<2x1xf32>
    %87 = arith.cmpf ogt, %69, %86 : vector<2x1xf32>
    %88 = vector.shape_cast %87 : vector<2x1xi1> to vector<2x1xi1>
    %89 = vector.broadcast %88 : vector<2x1xi1> to vector<2x5xi1>
    %90 = arith.select %89, %85, %63 : vector<2x5xi1>, vector<2x5xf32>
    %c3_i32 = arith.constant 3 : i32
    %91 = arith.index_cast %c3_i32 : i32 to index
    %c0_47 = arith.constant 0 : index
    %c0_48 = arith.constant 0 : index
    %92 = vector.load %arg10[%91, %c0_47, %c0_48] : memref<8x2x5xf32, #tpu.memory_space<vmem>>, vector<1x2x5xf32>
    %93 = vector.shape_cast %92 : vector<1x2x5xf32> to vector<2x5xf32>
    %94 = arith.index_cast %c3_i32 : i32 to index
    %c0_49 = arith.constant 0 : index
    %c0_50 = arith.constant 0 : index
    %95 = vector.load %arg3[%94, %c0_49, %c0_50] : memref<8x2x1xf32, #tpu.memory_space<vmem>>, vector<1x2x1xf32>
    %96 = vector.shape_cast %95 : vector<1x2x1xf32> to vector<2x1xf32>
    %97 = vector.shape_cast %90 : vector<2x5xf32> to vector<2x5x1xf32>
    %98 = vector.broadcast %97 : vector<2x5x1xf32> to vector<2x5x5xf32>
    %99 = vector.broadcast %32 : vector<1x5x5xf32> to vector<2x5x5xf32>
    %100 = arith.addf %98, %99 : vector<2x5x5xf32>
    %101 = vector.shape_cast %93 : vector<2x5xf32> to vector<2x1x5xf32>
    %102 = vector.broadcast %101 : vector<2x1x5xf32> to vector<2x5x5xf32>
    %103 = arith.addf %100, %102 : vector<2x5x5xf32>
    %cst_51 = arith.constant dense<0xFF800000> : vector<2x5xf32>
    %104 = vector.multi_reduction <maximumf>, %103, %cst_51 [1] : vector<2x5x5xf32> to vector<2x5xf32>
    %105 = vector.shape_cast %104 : vector<2x5xf32> to vector<2x1x5xf32>
    %106 = vector.broadcast %105 : vector<2x1x5xf32> to vector<2x5x5xf32>
    %107 = arith.subf %103, %106 : vector<2x5x5xf32>
    %108 = math.exp %107 : vector<2x5x5xf32>
    %cst_52 = arith.constant dense<0.000000e+00> : vector<2x5xf32>
    %109 = vector.multi_reduction <add>, %108, %cst_52 [1] : vector<2x5x5xf32> to vector<2x5xf32>
    %110 = math.log %109 : vector<2x5xf32>
    %111 = vector.shape_cast %105 : vector<2x1x5xf32> to vector<2x5xf32>
    %112 = arith.addf %110, %111 : vector<2x5xf32>
    %cst_53 = arith.constant 5.000000e-01 : f32
    %113 = vector.broadcast %cst_53 : f32 to vector<2x1xf32>
    %114 = arith.cmpf ogt, %96, %113 : vector<2x1xf32>
    %115 = vector.shape_cast %114 : vector<2x1xi1> to vector<2x1xi1>
    %116 = vector.broadcast %115 : vector<2x1xi1> to vector<2x5xi1>
    %117 = arith.select %116, %112, %90 : vector<2x5xi1>, vector<2x5xf32>
    %c4_i32 = arith.constant 4 : i32
    %118 = arith.index_cast %c4_i32 : i32 to index
    %c0_54 = arith.constant 0 : index
    %c0_55 = arith.constant 0 : index
    %119 = vector.load %arg10[%118, %c0_54, %c0_55] : memref<8x2x5xf32, #tpu.memory_space<vmem>>, vector<1x2x5xf32>
    %120 = vector.shape_cast %119 : vector<1x2x5xf32> to vector<2x5xf32>
    %121 = arith.index_cast %c4_i32 : i32 to index
    %c0_56 = arith.constant 0 : index
    %c0_57 = arith.constant 0 : index
    %122 = vector.load %arg3[%121, %c0_56, %c0_57] : memref<8x2x1xf32, #tpu.memory_space<vmem>>, vector<1x2x1xf32>
    %123 = vector.shape_cast %122 : vector<1x2x1xf32> to vector<2x1xf32>
    %124 = vector.shape_cast %117 : vector<2x5xf32> to vector<2x5x1xf32>
    %125 = vector.broadcast %124 : vector<2x5x1xf32> to vector<2x5x5xf32>
    %126 = vector.broadcast %32 : vector<1x5x5xf32> to vector<2x5x5xf32>
    %127 = arith.addf %125, %126 : vector<2x5x5xf32>
    %128 = vector.shape_cast %120 : vector<2x5xf32> to vector<2x1x5xf32>
    %129 = vector.broadcast %128 : vector<2x1x5xf32> to vector<2x5x5xf32>
    %130 = arith.addf %127, %129 : vector<2x5x5xf32>
    %cst_58 = arith.constant dense<0xFF800000> : vector<2x5xf32>
    %131 = vector.multi_reduction <maximumf>, %130, %cst_58 [1] : vector<2x5x5xf32> to vector<2x5xf32>
    %132 = vector.shape_cast %131 : vector<2x5xf32> to vector<2x1x5xf32>
    %133 = vector.broadcast %132 : vector<2x1x5xf32> to vector<2x5x5xf32>
    %134 = arith.subf %130, %133 : vector<2x5x5xf32>
    %135 = math.exp %134 : vector<2x5x5xf32>
    %cst_59 = arith.constant dense<0.000000e+00> : vector<2x5xf32>
    %136 = vector.multi_reduction <add>, %135, %cst_59 [1] : vector<2x5x5xf32> to vector<2x5xf32>
    %137 = math.log %136 : vector<2x5xf32>
    %138 = vector.shape_cast %132 : vector<2x1x5xf32> to vector<2x5xf32>
    %139 = arith.addf %137, %138 : vector<2x5xf32>
    %cst_60 = arith.constant 5.000000e-01 : f32
    %140 = vector.broadcast %cst_60 : f32 to vector<2x1xf32>
    %141 = arith.cmpf ogt, %123, %140 : vector<2x1xf32>
    %142 = vector.shape_cast %141 : vector<2x1xi1> to vector<2x1xi1>
    %143 = vector.broadcast %142 : vector<2x1xi1> to vector<2x5xi1>
    %144 = arith.select %143, %139, %117 : vector<2x5xi1>, vector<2x5xf32>
    %c5_i32 = arith.constant 5 : i32
    %145 = arith.index_cast %c5_i32 : i32 to index
    %c0_61 = arith.constant 0 : index
    %c0_62 = arith.constant 0 : index
    %146 = vector.load %arg10[%145, %c0_61, %c0_62] : memref<8x2x5xf32, #tpu.memory_space<vmem>>, vector<1x2x5xf32>
    %147 = vector.shape_cast %146 : vector<1x2x5xf32> to vector<2x5xf32>
    %148 = arith.index_cast %c5_i32 : i32 to index
    %c0_63 = arith.constant 0 : index
    %c0_64 = arith.constant 0 : index
    %149 = vector.load %arg3[%148, %c0_63, %c0_64] : memref<8x2x1xf32, #tpu.memory_space<vmem>>, vector<1x2x1xf32>
    %150 = vector.shape_cast %149 : vector<1x2x1xf32> to vector<2x1xf32>
    %151 = vector.shape_cast %144 : vector<2x5xf32> to vector<2x5x1xf32>
    %152 = vector.broadcast %151 : vector<2x5x1xf32> to vector<2x5x5xf32>
    %153 = vector.broadcast %32 : vector<1x5x5xf32> to vector<2x5x5xf32>
    %154 = arith.addf %152, %153 : vector<2x5x5xf32>
    %155 = vector.shape_cast %147 : vector<2x5xf32> to vector<2x1x5xf32>
    %156 = vector.broadcast %155 : vector<2x1x5xf32> to vector<2x5x5xf32>
    %157 = arith.addf %154, %156 : vector<2x5x5xf32>
    %cst_65 = arith.constant dense<0xFF800000> : vector<2x5xf32>
    %158 = vector.multi_reduction <maximumf>, %157, %cst_65 [1] : vector<2x5x5xf32> to vector<2x5xf32>
    %159 = vector.shape_cast %158 : vector<2x5xf32> to vector<2x1x5xf32>
    %160 = vector.broadcast %159 : vector<2x1x5xf32> to vector<2x5x5xf32>
    %161 = arith.subf %157, %160 : vector<2x5x5xf32>
    %162 = math.exp %161 : vector<2x5x5xf32>
    %cst_66 = arith.constant dense<0.000000e+00> : vector<2x5xf32>
    %163 = vector.multi_reduction <add>, %162, %cst_66 [1] : vector<2x5x5xf32> to vector<2x5xf32>
    %164 = math.log %163 : vector<2x5xf32>
    %165 = vector.shape_cast %159 : vector<2x1x5xf32> to vector<2x5xf32>
    %166 = arith.addf %164, %165 : vector<2x5xf32>
    %cst_67 = arith.constant 5.000000e-01 : f32
    %167 = vector.broadcast %cst_67 : f32 to vector<2x1xf32>
    %168 = arith.cmpf ogt, %150, %167 : vector<2x1xf32>
    %169 = vector.shape_cast %168 : vector<2x1xi1> to vector<2x1xi1>
    %170 = vector.broadcast %169 : vector<2x1xi1> to vector<2x5xi1>
    %171 = arith.select %170, %166, %144 : vector<2x5xi1>, vector<2x5xf32>
    %c6_i32 = arith.constant 6 : i32
    %172 = arith.index_cast %c6_i32 : i32 to index
    %c0_68 = arith.constant 0 : index
    %c0_69 = arith.constant 0 : index
    %173 = vector.load %arg10[%172, %c0_68, %c0_69] : memref<8x2x5xf32, #tpu.memory_space<vmem>>, vector<1x2x5xf32>
    %174 = vector.shape_cast %173 : vector<1x2x5xf32> to vector<2x5xf32>
    %175 = arith.index_cast %c6_i32 : i32 to index
    %c0_70 = arith.constant 0 : index
    %c0_71 = arith.constant 0 : index
    %176 = vector.load %arg3[%175, %c0_70, %c0_71] : memref<8x2x1xf32, #tpu.memory_space<vmem>>, vector<1x2x1xf32>
    %177 = vector.shape_cast %176 : vector<1x2x1xf32> to vector<2x1xf32>
    %178 = vector.shape_cast %171 : vector<2x5xf32> to vector<2x5x1xf32>
    %179 = vector.broadcast %178 : vector<2x5x1xf32> to vector<2x5x5xf32>
    %180 = vector.broadcast %32 : vector<1x5x5xf32> to vector<2x5x5xf32>
    %181 = arith.addf %179, %180 : vector<2x5x5xf32>
    %182 = vector.shape_cast %174 : vector<2x5xf32> to vector<2x1x5xf32>
    %183 = vector.broadcast %182 : vector<2x1x5xf32> to vector<2x5x5xf32>
    %184 = arith.addf %181, %183 : vector<2x5x5xf32>
    %cst_72 = arith.constant dense<0xFF800000> : vector<2x5xf32>
    %185 = vector.multi_reduction <maximumf>, %184, %cst_72 [1] : vector<2x5x5xf32> to vector<2x5xf32>
    %186 = vector.shape_cast %185 : vector<2x5xf32> to vector<2x1x5xf32>
    %187 = vector.broadcast %186 : vector<2x1x5xf32> to vector<2x5x5xf32>
    %188 = arith.subf %184, %187 : vector<2x5x5xf32>
    %189 = math.exp %188 : vector<2x5x5xf32>
    %cst_73 = arith.constant dense<0.000000e+00> : vector<2x5xf32>
    %190 = vector.multi_reduction <add>, %189, %cst_73 [1] : vector<2x5x5xf32> to vector<2x5xf32>
    %191 = math.log %190 : vector<2x5xf32>
    %192 = vector.shape_cast %186 : vector<2x1x5xf32> to vector<2x5xf32>
    %193 = arith.addf %191, %192 : vector<2x5xf32>
    %cst_74 = arith.constant 5.000000e-01 : f32
    %194 = vector.broadcast %cst_74 : f32 to vector<2x1xf32>
    %195 = arith.cmpf ogt, %177, %194 : vector<2x1xf32>
    %196 = vector.shape_cast %195 : vector<2x1xi1> to vector<2x1xi1>
    %197 = vector.broadcast %196 : vector<2x1xi1> to vector<2x5xi1>
    %198 = arith.select %197, %193, %171 : vector<2x5xi1>, vector<2x5xf32>
    %c7_i32 = arith.constant 7 : i32
    %199 = arith.index_cast %c7_i32 : i32 to index
    %c0_75 = arith.constant 0 : index
    %c0_76 = arith.constant 0 : index
    %200 = vector.load %arg10[%199, %c0_75, %c0_76] : memref<8x2x5xf32, #tpu.memory_space<vmem>>, vector<1x2x5xf32>
    %201 = vector.shape_cast %200 : vector<1x2x5xf32> to vector<2x5xf32>
    %202 = arith.index_cast %c7_i32 : i32 to index
    %c0_77 = arith.constant 0 : index
    %c0_78 = arith.constant 0 : index
    %203 = vector.load %arg3[%202, %c0_77, %c0_78] : memref<8x2x1xf32, #tpu.memory_space<vmem>>, vector<1x2x1xf32>
    %204 = vector.shape_cast %203 : vector<1x2x1xf32> to vector<2x1xf32>
    %205 = vector.shape_cast %198 : vector<2x5xf32> to vector<2x5x1xf32>
    %206 = vector.broadcast %205 : vector<2x5x1xf32> to vector<2x5x5xf32>
    %207 = vector.broadcast %32 : vector<1x5x5xf32> to vector<2x5x5xf32>
    %208 = arith.addf %206, %207 : vector<2x5x5xf32>
    %209 = vector.shape_cast %201 : vector<2x5xf32> to vector<2x1x5xf32>
    %210 = vector.broadcast %209 : vector<2x1x5xf32> to vector<2x5x5xf32>
    %211 = arith.addf %208, %210 : vector<2x5x5xf32>
    %cst_79 = arith.constant dense<0xFF800000> : vector<2x5xf32>
    %212 = vector.multi_reduction <maximumf>, %211, %cst_79 [1] : vector<2x5x5xf32> to vector<2x5xf32>
    %213 = vector.shape_cast %212 : vector<2x5xf32> to vector<2x1x5xf32>
    %214 = vector.broadcast %213 : vector<2x1x5xf32> to vector<2x5x5xf32>
    %215 = arith.subf %211, %214 : vector<2x5x5xf32>
    %216 = math.exp %215 : vector<2x5x5xf32>
    %cst_80 = arith.constant dense<0.000000e+00> : vector<2x5xf32>
    %217 = vector.multi_reduction <add>, %216, %cst_80 [1] : vector<2x5x5xf32> to vector<2x5xf32>
    %218 = math.log %217 : vector<2x5xf32>
    %219 = vector.shape_cast %213 : vector<2x1x5xf32> to vector<2x5xf32>
    %220 = arith.addf %218, %219 : vector<2x5xf32>
    %cst_81 = arith.constant 5.000000e-01 : f32
    %221 = vector.broadcast %cst_81 : f32 to vector<2x1xf32>
    %222 = arith.cmpf ogt, %204, %221 : vector<2x1xf32>
    %223 = vector.shape_cast %222 : vector<2x1xi1> to vector<2x1xi1>
    %224 = vector.broadcast %223 : vector<2x1xi1> to vector<2x5xi1>
    %225 = arith.select %224, %220, %198 : vector<2x5xi1>, vector<2x5xf32>
    %c7_i32_82 = arith.constant 7 : i32
    %226 = vector.broadcast %22 : vector<1x5xf32> to vector<2x5xf32>
    %227 = arith.addf %225, %226 : vector<2x5xf32>
    %cst_83 = arith.constant dense<0xFF800000> : vector<2xf32>
    %228 = vector.multi_reduction <maximumf>, %227, %cst_83 [1] : vector<2x5xf32> to vector<2xf32>
    %229 = vector.shape_cast %228 : vector<2xf32> to vector<2x1xf32>
    %230 = vector.broadcast %229 : vector<2x1xf32> to vector<2x5xf32>
    %231 = arith.subf %227, %230 : vector<2x5xf32>
    %232 = math.exp %231 : vector<2x5xf32>
    %cst_84 = arith.constant dense<0.000000e+00> : vector<2xf32>
    %233 = vector.multi_reduction <add>, %232, %cst_84 [1] : vector<2x5xf32> to vector<2xf32>
    %234 = vector.shape_cast %233 : vector<2xf32> to vector<2x1xf32>
    %235 = math.log %234 : vector<2x1xf32>
    %236 = arith.addf %235, %229 : vector<2x1xf32>
    %237 = arith.subf %236, %31 : vector<2x1xf32>
    %cst_85 = arith.constant dense<0.000000e+00> : vector<1xf32>
    %238 = vector.multi_reduction <add>, %237, %cst_85 [0] : vector<2x1xf32> to vector<1xf32>
    %239 = vector.shape_cast %238 : vector<1xf32> to vector<1x1xf32>
    %c0_86 = arith.constant 0 : index
    %c0_87 = arith.constant 0 : index
    %240 = vector.load %arg9[%c0_86, %c0_87] : memref<1x1xf32, #tpu.memory_space<vmem>>, vector<1x1xf32>
    tpu.vector_store %arg9[%c0_86, %c0_87], %239 {strides = array<i32>} : memref<1x1xf32, #tpu.memory_space<vmem>>, vector<1x1xf32>,
    return
  }
}

</mosaic_0001>

<llo_original>
// kernel: gru_crf_forward.4
$region0: #{gru_crf_forward.4}
  #allocation0 [shape = 'u32[]', space=smem, size = 0x4, offset = 0x4, fixed_abs, tag = 'smem constant byte address 0x4 - core index']
  #allocation1 [shape = 'u32[144,128]{1,0:T(1,128)}', space=vmem, size = 0x12000, scoped, tag = 'internal scratch']
  #allocation2 [shape = 'f32[8,2,48]{2,1,0:T(2,128)}', space=vmem, size = 0x2000, scoped, tag = 'scratch operand']
  %s0 = inlined_call_operand.vmem [shape: f32[2,8,2,16], index: 0, kind: input, shape index: {}]
  %s1 = inlined_call_operand.vmem [shape: f32[2,32,48], index: 1, kind: input, shape index: {}]
  %s2 = inlined_call_operand.vmem [shape: f32[2,16,48], index: 2, kind: input, shape index: {}]
  %s3 = inlined_call_operand.vmem [shape: f32[2,1,48], index: 3, kind: input, shape index: {}]
  %s4 = inlined_call_operand.vmem [shape: f32[2,1,48], index: 4, kind: input, shape index: {}]
  %s5 = inlined_call_operand.vmem [shape: f32[2,8,2,16], index: 5, kind: output, shape index: {}]
  %s6 = sld [smem:[#allocation0]]
  $region53: #{gru_crf_forward.4} parent=0
    _
  %s8 = ssub.s32 1, %s6
  %s9 = scalar_select 0, %s8, %s6
  loop: start=0, step=1, limit=4
  $region2: #{gru_crf_forward.4} parent=0 // loop_pre_header
    _
  $region3: #{gru_crf_forward.4} parent=0 // loop_header
    %s11 = sphi 0, %s15
    %p12 = scmp.ge.s32.totalorder %s11, 4
    %s19 = sphi 0, %s19
    %s21 = sphi 0, %s19
    %s22 = sphi 0, %s21
    %s36 = sphi 0, %s22
    %s42 = sphi 0, %s44
    %s45 = sphi 0, %s42
    %s46 = sphi 0, %s45
    %s62 = sphi 0, %s46
    %s68 = sphi 0, %s70
    %s71 = sphi 0, %s68
    %s72 = sphi 0, %s71
    %s88 = sphi 0, %s72
    %s94 = sphi 0, %s96
    %s97 = sphi 0, %s94
    %s98 = sphi 0, %s97
    %s114 = sphi 0, %s98
    %s120 = sphi 0, %s122
    %s123 = sphi 0, %s120
    %s124 = sphi 0, %s123
    %s140 = sphi 0, %s124
    %s146 = sphi 0, %s148
    %s149 = sphi 0, %s146
    %s150 = sphi 0, %s149
    %s166 = sphi 0, %s150
  $region4: #{gru_crf_forward.4} parent=0 // loop_header_branch
    %14 = sbr.rel (%p12) target = $region8
  $region5: #{gru_crf_forward.4} parent=0 // loop_body
    %s16 = ssub.s32 %s11, 1
    %s17 = ssub.s32 %s11, 2
    %s18 = sadd.s32 %s11, 1
    %s20 = sadd.s32 %s19, 1
    %p23 = scmp.eq.s32.totalorder %s11, 1
    %p24 = scmp.ne.s32.totalorder %s19, %s21
    %p25 = scmp.eq.s32.totalorder %s11, 0
    %p26 = por %p24, %p25
    %p27 = scmp.ne.s32.totalorder %s19, %s21
    %p28 = scmp.eq.s32.totalorder %s16, 1
    %p29 = por %p27, %p28
    %p30 = scmp.ne.s32.totalorder %s21, %s22
    %p31 = scmp.eq.s32.totalorder %s16, 0
    %p32 = por %p30, %p31
    %p33 = scmp.ne.s32.totalorder %s21, %s22
    %p34 = scmp.eq.s32.totalorder %s17, 1
    %p35 = por %p33, %p34
    %p37 = scmp.ne.s32.totalorder %s22, %s36
    %p38 = scmp.eq.s32.totalorder %s17, 0
    %p39 = por %p37, %p38
    %s40 = ssub.s32 %s11, %s18
    %p41 = scmp.eq.s32.totalorder %s40, 0
    %s43 = sadd.s32 %s42, 1
    %s44 = scalar_select %p41, %s42, %s43
    %p47 = pneg %p41
    %p48 = scmp.eq.s32.totalorder %s11, 1
    %p49 = por %p47, %p48
    %p50 = scmp.ne.s32.totalorder %s42, %s45
    %p51 = scmp.eq.s32.totalorder %s11, 0
    %p52 = por %p50, %p51
    %p53 = scmp.ne.s32.totalorder %s42, %s45
    %p54 = scmp.eq.s32.totalorder %s16, 1
    %p55 = por %p53, %p54
    %p56 = scmp.ne.s32.totalorder %s45, %s46
    %p57 = scmp.eq.s32.totalorder %s16, 0
    %p58 = por %p56, %p57
    %p59 = scmp.ne.s32.totalorder %s45, %s46
    %p60 = scmp.eq.s32.totalorder %s17, 1
    %p61 = por %p59, %p60
    %p63 = scmp.ne.s32.totalorder %s46, %s62
    %p64 = scmp.eq.s32.totalorder %s17, 0
    %p65 = por %p63, %p64
    %s66 = ssub.s32 %s11, %s18
    %p67 = scmp.eq.s32.totalorder %s66, 0
    %s69 = sadd.s32 %s68, 1
    %s70 = scalar_select %p67, %s68, %s69
    %p73 = pneg %p67
    %p74 = scmp.eq.s32.totalorder %s11, 1
    %p75 = por %p73, %p74
    %p76 = scmp.ne.s32.totalorder %s68, %s71
    %p77 = scmp.eq.s32.totalorder %s11, 0
    %p78 = por %p76, %p77
    %p79 = scmp.ne.s32.totalorder %s68, %s71
    %p80 = scmp.eq.s32.totalorder %s16, 1
    %p81 = por %p79, %p80
    %p82 = scmp.ne.s32.totalorder %s71, %s72
    %p83 = scmp.eq.s32.totalorder %s16, 0
    %p84 = por %p82, %p83
    %p85 = scmp.ne.s32.totalorder %s71, %s72
    %p86 = scmp.eq.s32.totalorder %s17, 1
    %p87 = por %p85, %p86
    %p89 = scmp.ne.s32.totalorder %s72, %s88
    %p90 = scmp.eq.s32.totalorder %s17, 0
    %p91 = por %p89, %p90
    %s92 = ssub.s32 %s11, %s18
    %p93 = scmp.eq.s32.totalorder %s92, 0
    %s95 = sadd.s32 %s94, 1
    %s96 = scalar_select %p93, %s94, %s95
    %p99 = pneg %p93
    %p100 = scmp.eq.s32.totalorder %s11, 1
    %p101 = por %p99, %p100
    %p102 = scmp.ne.s32.totalorder %s94, %s97
    %p103 = scmp.eq.s32.totalorder %s11, 0
    %p104 = por %p102, %p103
    %p105 = scmp.ne.s32.totalorder %s94, %s97
    %p106 = scmp.eq.s32.totalorder %s16, 1
    %p107 = por %p105, %p106
    %p108 = scmp.ne.s32.totalorder %s97, %s98
    %p109 = scmp.eq.s32.totalorder %s16, 0
    %p110 = por %p108, %p109
    %p111 = scmp.ne.s32.totalorder %s97, %s98
    %p112 = scmp.eq.s32.totalorder %s17, 1
    %p113 = por %p111, %p112
    %p115 = scmp.ne.s32.totalorder %s98, %s114
    %p116 = scmp.eq.s32.totalorder %s17, 0
    %p117 = por %p115, %p116
    %s118 = ssub.s32 %s11, %s18
    %p119 = scmp.eq.s32.totalorder %s118, 0
    %s121 = sadd.s32 %s120, 1
    %s122 = scalar_select %p119, %s120, %s121
    %p125 = pneg %p119
    %p126 = scmp.eq.s32.totalorder %s11, 1
    %p127 = por %p125, %p126
    %p128 = scmp.ne.s32.totalorder %s120, %s123
    %p129 = scmp.eq.s32.totalorder %s11, 0
    %p130 = por %p128, %p129
    %p131 = scmp.ne.s32.totalorder %s120, %s123
    %p132 = scmp.eq.s32.totalorder %s16, 1
    %p133 = por %p131, %p132
    %p134 = scmp.ne.s32.totalorder %s123, %s124
    %p135 = scmp.eq.s32.totalorder %s16, 0
    %p136 = por %p134, %p135
    %p137 = scmp.ne.s32.totalorder %s123, %s124
    %p138 = scmp.eq.s32.totalorder %s17, 1
    %p139 = por %p137, %p138
    %p141 = scmp.ne.s32.totalorder %s124, %s140
    %p142 = scmp.eq.s32.totalorder %s17, 0
    %p143 = por %p141, %p142
    %s144 = ssub.s32 %s11, %s18
    %p145 = scmp.eq.s32.totalorder %s144, 0
    %s147 = sadd.s32 %s146, 1
    %s148 = scalar_select %p145, %s146, %s147
    %p151 = pneg %p145
    %p152 = scmp.eq.s32.totalorder %s11, 1
    %p153 = por %p151, %p152
    %p154 = scmp.ne.s32.totalorder %s146, %s149
    %p155 = scmp.eq.s32.totalorder %s11, 0
    %p156 = por %p154, %p155
    %p157 = scmp.ne.s32.totalorder %s146, %s149
    %p158 = scmp.eq.s32.totalorder %s16, 1
    %p159 = por %p157, %p158
    %p160 = scmp.ne.s32.totalorder %s149, %s150
    %p161 = scmp.eq.s32.totalorder %s16, 0
    %p162 = por %p160, %p161
    %p163 = scmp.ne.s32.totalorder %s149, %s150
    %p164 = scmp.eq.s32.totalorder %s17, 1
    %p165 = por %p163, %p164
    %p167 = scmp.ne.s32.totalorder %s150, %s166
    %p168 = scmp.eq.s32.totalorder %s17, 0
    %p169 = por %p167, %p168
    %p170 = scmp.le.s32.totalorder 1, %s11
    %p171 = scmp.lt.s32.totalorder %s11, 3
    %p172 = pnand %p170, %p171
    %p173 = pneg %p172
    // Predicated region
    $region9: #{gru_crf_forward.4} parent=5 // pred_check
      _
    $region10: #{gru_crf_forward.4} parent=5 // pred_check_branch
      %175 = sbr.rel (%p172) target = $region12
    $region11: #{gru_crf_forward.4} parent=5 // pred_region
      %s176 = ssub.s32 %s11, 1
      // Predicated region
      $region13: #{gru_crf_forward.4} parent=11 // pred_check
        %p177 = pneg %p32
      $region14: #{gru_crf_forward.4} parent=11 // pred_check_branch
        %179 = sbr.rel (%p177) target = $region16
      $region15: #{gru_crf_forward.4} parent=11 // pred_region
        _
      $region16: #{gru_crf_forward.4} parent=11 // pred_fallthru
        _
    $region12: #{gru_crf_forward.4} parent=5 // pred_fallthru
      _
    %p180 = scmp.lt.s32.totalorder %s11, 2
    // Predicated region
    $region17: #{gru_crf_forward.4} parent=5 // pred_check
      %p181 = pneg %p180
    $region18: #{gru_crf_forward.4} parent=5 // pred_check_branch
      %183 = sbr.rel (%p181) target = $region20
    $region19: #{gru_crf_forward.4} parent=5 // pred_region
      // Predicated region
      $region21: #{gru_crf_forward.4} parent=19 // pred_check
        %p184 = pneg %p52
      $region22: #{gru_crf_forward.4} parent=19 // pred_check_branch
        %186 = sbr.rel (%p184) target = $region24
      $region23: #{gru_crf_forward.4} parent=19 // pred_region
        %p187 = scmp.lt.s32.totalorder %s11, 1
        %s188 = scalar_select %p187, %s11, 1
        %s189 = smul.addr %s188, 4
        %s190 = smul.addr %s189, 8
        %s191 = scalar_lea.vmem %s1, %s190
      $region24: #{gru_crf_forward.4} parent=19 // pred_fallthru
        _
      // Predicated region
      $region25: #{gru_crf_forward.4} parent=19 // pred_check
        %p192 = pneg %p78
      $region26: #{gru_crf_forward.4} parent=19 // pred_check_branch
        %194 = sbr.rel (%p192) target = $region28
      $region27: #{gru_crf_forward.4} parent=19 // pred_region
        %p195 = scmp.lt.s32.totalorder %s11, 1
        %s196 = scalar_select %p195, %s11, 1
        %s197 = smul.addr %s196, 2
        %s198 = smul.addr %s197, 8
        %s199 = scalar_lea.vmem %s2, %s198
      $region28: #{gru_crf_forward.4} parent=19 // pred_fallthru
        _
      // Predicated region
      $region29: #{gru_crf_forward.4} parent=19 // pred_check
        %p200 = pneg %p104
      $region30: #{gru_crf_forward.4} parent=19 // pred_check_branch
        %202 = sbr.rel (%p200) target = $region32
      $region31: #{gru_crf_forward.4} parent=19 // pred_region
        %p203 = scmp.lt.s32.totalorder %s11, 1
        %s204 = scalar_select %p203, %s11, 1
        %s205 = scalar_lea.vmem %s3, %s204
      $region32: #{gru_crf_forward.4} parent=19 // pred_fallthru
        _
      // Predicated region
      $region33: #{gru_crf_forward.4} parent=19 // pred_check
        %p206 = pneg %p130
      $region34: #{gru_crf_forward.4} parent=19 // pred_check_branch
        %208 = sbr.rel (%p206) target = $region36
      $region35: #{gru_crf_forward.4} parent=19 // pred_region
        %p209 = scmp.lt.s32.totalorder %s11, 1
        %s210 = scalar_select %p209, %s11, 1
        %s211 = scalar_lea.vmem %s4, %s210
      $region36: #{gru_crf_forward.4} parent=19 // pred_fallthru
        _
    $region20: #{gru_crf_forward.4} parent=5 // pred_fallthru
      _
    %p212 = scmp.le.s32.totalorder 1, %s11
    %p213 = scmp.lt.s32.totalorder %s11, 3
    %p214 = pnand %p212, %p213
    %p215 = pneg %p214
    // Predicated region
    $region37: #{gru_crf_forward.4} parent=5 // pred_check
      _
    $region38: #{gru_crf_forward.4} parent=5 // pred_check_branch
      %217 = sbr.rel (%p214) target = $region40
    $region39: #{gru_crf_forward.4} parent=5 // pred_region
      %s218 = ssub.s32 %s11, 1
      %p219 = pneg %p32
      %p220 = pneg %p29
      %p221 = scmp.lt.s32.totalorder %s16, 1
      %s222 = scalar_select %p221, %s16, 1
      %s223 = smul.addr %s222, 4
      %s224 = smul.addr %s223, 8
      %s225 = scalar_lea.vmem %s1, %s224
      %p226 = pneg %p58
      %p227 = pneg %p55
      %p228 = scmp.lt.s32.totalorder %s16, 1
      %s229 = scalar_select %p228, %s16, 1
      %s230 = smul.addr %s229, 2
      %s231 = smul.addr %s230, 8
      %s232 = scalar_lea.vmem %s2, %s231
      %p233 = pneg %p84
      %p234 = pneg %p81
      %p235 = scmp.lt.s32.totalorder %s16, 1
      %s236 = scalar_select %p235, %s16, 1
      %s237 = scalar_lea.vmem %s3, %s236
      %p238 = pneg %p110
      %p239 = pneg %p107
      %p240 = scmp.lt.s32.totalorder %s16, 1
      %s241 = scalar_select %p240, %s16, 1
      %s242 = scalar_lea.vmem %s4, %s241
      %p243 = pneg %p136
      %p244 = pneg %p133
      %p245 = pneg %p162
      %p246 = pneg %p159
      %p247 = scmp.lt.s32.totalorder %s16, 1
      %s248 = scalar_select %p247, %s16, 1
      %s249 = smul.addr %s248, 8
      %s250 = smul.addr %s249, 2
      %s251 = scalar_lea.vmem %s5, %s250
      %p252 = scmp.lt.s32.totalorder %s16, 1
      %s253 = scalar_select %p252, %s16, 1
      %s254 = smul.addr %s253, 4
      %s255 = smul.addr %s254, 8
      %s256 = scalar_lea.vmem %s1, %s255
      %p257 = scmp.lt.s32.totalorder %s16, 1
      %s258 = scalar_select %p257, %s16, 1
      %s259 = smul.addr %s258, 2
      %s260 = smul.addr %s259, 8
      %s261 = scalar_lea.vmem %s2, %s260
      %p262 = scmp.lt.s32.totalorder %s16, 1
      %s263 = scalar_select %p262, %s16, 1
      %s264 = scalar_lea.vmem %s3, %s263
      %p265 = scmp.lt.s32.totalorder %s16, 1
      %s266 = scalar_select %p265, %s16, 1
      %s267 = scalar_lea.vmem %s4, %s266
      %p268 = scmp.lt.s32.totalorder %s16, 1
      %s269 = scalar_select %p268, %s16, 1
      %s270 = smul.addr %s269, 8
      %s271 = smul.addr %s270, 2
      %s272 = scalar_lea.vmem %s5, %s271
      %v274 = vld [vmem:[%s256] sm:$0xff]
      %v275 = vld [vmem:[%s256 + $0x8] sm:$0xff]
      %v276 = vld [vmem:[%s256 + $0x10] sm:$0xff]
      %v277 = vld [vmem:[%s256 + $0x18] sm:$0xff]
      %v278 = vpack.c.bf16 %v275, %v274
      %v279 = vpack.c.bf16 %v277, %v276
      %v280 = vld [vmem:[%s0] sm:$0x3]
      %v281 = vld [vmem:[%s0 + $0x2] sm:$0x3]
      %v282 = vld [vmem:[%s0 + $0x4] sm:$0x3]
      %v283 = vld [vmem:[%s0 + $0x6] sm:$0x3]
      %v284 = vld [vmem:[%s0 + $0x8] sm:$0x3]
      %v285 = vld [vmem:[%s0 + $0xa] sm:$0x3]
      %v286 = vld [vmem:[%s0 + $0xc] sm:$0x3]
      %v287 = vld [vmem:[%s0 + $0xe] sm:$0x3]
      %v296 = vcombine.low %v280, %v281
      %v297 = vcombine.low %v282, %v283
      %v299 = vunpack.c.l.s4 1983009808
      %v300 = vunpack.c.0.s8 %v299
      %v301 = vlaneseq
      %v302 = vshrl.u32 %v301, 7
      %v303 = vsub.s32 %v300, %v302
      %v304 = vrot.slane %v296, %v303
      %v306 = vunpack.c.l.s4 1983009808
      %v307 = vunpack.c.0.s8 %v306
      %v308 = vlaneseq
      %v309 = vshrl.u32 %v308, 7
      %v310 = vsub.s32 %v307, %v309
      %v311 = vrot.slane %v297, %v310
      %v312 = vcombine.low %v304, %v311
      %v313 = vcombine.low %v284, %v285
      %v314 = vcombine.low %v286, %v287
      %v316 = vunpack.c.l.s4 1983009808
      %v317 = vunpack.c.0.s8 %v316
      %v318 = vlaneseq
      %v319 = vshrl.u32 %v318, 7
      %v320 = vsub.s32 %v317, %v319
      %v321 = vrot.slane %v313, %v320
      %v323 = vunpack.c.l.s4 1983009808
      %v324 = vunpack.c.0.s8 %v323
      %v325 = vlaneseq
      %v326 = vshrl.u32 %v325, 7
      %v327 = vsub.s32 %v324, %v326
      %v328 = vrot.slane %v314, %v327
      %v329 = vcombine.low %v321, %v328
      %v332 = vpack.c.bf16 %v329, %v312
      %s333 = scalar_lea.vmem %s0, 16
      %v334 = vld [vmem:[%s333] sm:$0x3]
      %v335 = vld [vmem:[%s333 + $0x2] sm:$0x3]
      %v336 = vld [vmem:[%s333 + $0x4] sm:$0x3]
      %v337 = vld [vmem:[%s333 + $0x6] sm:$0x3]
      %v338 = vld [vmem:[%s333 + $0x8] sm:$0x3]
      %v339 = vld [vmem:[%s333 + $0xa] sm:$0x3]
      %v340 = vld [vmem:[%s333 + $0xc] sm:$0x3]
      %v341 = vld [vmem:[%s333 + $0xe] sm:$0x3]
      %v350 = vcombine.low %v334, %v335
      %v351 = vcombine.low %v336, %v337
      %v353 = vunpack.c.l.s4 1983009808
      %v354 = vunpack.c.0.s8 %v353
      %v355 = vlaneseq
      %v356 = vshrl.u32 %v355, 7
      %v357 = vsub.s32 %v354, %v356
      %v358 = vrot.slane %v350, %v357
      %v360 = vunpack.c.l.s4 1983009808
      %v361 = vunpack.c.0.s8 %v360
      %v362 = vlaneseq
      %v363 = vshrl.u32 %v362, 7
      %v364 = vsub.s32 %v361, %v363
      %v365 = vrot.slane %v351, %v364
      %v366 = vcombine.low %v358, %v365
      %v367 = vcombine.low %v338, %v339
      %v368 = vcombine.low %v340, %v341
      %v370 = vunpack.c.l.s4 1983009808
      %v371 = vunpack.c.0.s8 %v370
      %v372 = vlaneseq
      %v373 = vshrl.u32 %v372, 7
      %v374 = vsub.s32 %v371, %v373
      %v375 = vrot.slane %v367, %v374
      %v377 = vunpack.c.l.s4 1983009808
      %v378 = vunpack.c.0.s8 %v377
      %v379 = vlaneseq
      %v380 = vshrl.u32 %v379, 7
      %v381 = vsub.s32 %v378, %v380
      %v382 = vrot.slane %v368, %v381
      %v383 = vcombine.low %v375, %v382
      %v386 = vpack.c.bf16 %v383, %v366
      %vm387 = vcmask 130048
      %v389 = vsel %vm387, %v386, 0
      %391 = vmatprep.subr.bf16.mxu0 0
      %392 = vmatpush1.bf16.msra.mxu0 %v279
      %393 = vmatprep.subr.bf16.mxu0 0
      %394 = vmatpush1.bf16.msra.mxu0 0
      %395 = vmatprep.subr.bf16.mxu0 0
      %396 = vmatpush1.bf16.msra.mxu0 0
      %397 = vmatprep.subr.bf16.mxu0 0
      %398 = vmatpush1.bf16.msra.mxu0 0
      %399 = vmatprep.subr.bf16.mxu0 0
      %400 = vmatpush1.bf16.msra.mxu0 0
      %401 = vmatprep.subr.bf16.mxu0 0
      %402 = vmatpush1.bf16.msra.mxu0 0
      %403 = vmatprep.subr.bf16.mxu0 0
      %404 = vmatpush1.bf16.msra.mxu0 0
      %405 = vmatprep.subr.bf16.mxu0 0
      %406 = vmatpush1.bf16.msra.mxu0 0
      %407 = vmatprep.subr.bf16.mxu0 0
      %408 = vmatpush1.bf16.msra.mxu0 0
      %409 = vmatprep.subr.bf16.mxu0 0
      %410 = vmatpush1.bf16.msra.mxu0 0
      %411 = vmatprep.subr.bf16.mxu0 0
      %412 = vmatpush1.bf16.msra.mxu0 0
      %413 = vmatprep.subr.bf16.mxu0 0
      %414 = vmatpush1.bf16.msra.mxu0 0
      %415 = vmatprep.subr.bf16.mxu0 0
      %416 = vmatpush1.bf16.msra.mxu0 0
      %417 = vmatprep.subr.bf16.mxu0 0
      %418 = vmatpush1.bf16.msra.mxu0 0
      %419 = vmatprep.subr.bf16.mxu0 0
      %420 = vmatpush1.bf16.msra.mxu0 0
      %421 = vmatprep.subr.bf16.mxu0 0
      %422 = vmatpush1.bf16.msra.mxu0 0
      %423 = vmatprep.mubr.bf16.mxu0 0
      %424 = vmatmul.mubr.bf16.gmra.mrb[0].mxu0 %v389
      %v425 = vpop.f32.mrb[0].mxu0
      %v426 = vadd.f32 0.0, %v425
      %v427 = vpop.f32.mrb[0].mxu0
      %v428 = vpop.f32.mrb[0].mxu0
      %v429 = vadd.f32 0.0, %v428
      %v430 = vpop.f32.mrb[0].mxu0
      %431 = vdwg.mxu0
      %v433 = vsel %vm387, %v332, 0
      %435 = vmatprep.subr.bf16.mxu0 0
      %436 = vmatpush1.bf16.msra.mxu0 %v278
      %437 = vmatprep.subr.bf16.mxu0 0
      %438 = vmatpush1.bf16.msra.mxu0 0
      %439 = vmatprep.subr.bf16.mxu0 0
      %440 = vmatpush1.bf16.msra.mxu0 0
      %441 = vmatprep.subr.bf16.mxu0 0
      %442 = vmatpush1.bf16.msra.mxu0 0
      %443 = vmatprep.subr.bf16.mxu0 0
      %444 = vmatpush1.bf16.msra.mxu0 0
      %445 = vmatprep.subr.bf16.mxu0 0
      %446 = vmatpush1.bf16.msra.mxu0 0
      %447 = vmatprep.subr.bf16.mxu0 0
      %448 = vmatpush1.bf16.msra.mxu0 0
      %449 = vmatprep.subr.bf16.mxu0 0
      %450 = vmatpush1.bf16.msra.mxu0 0
      %451 = vmatprep.subr.bf16.mxu0 0
      %452 = vmatpush1.bf16.msra.mxu0 0
      %453 = vmatprep.subr.bf16.mxu0 0
      %454 = vmatpush1.bf16.msra.mxu0 0
      %455 = vmatprep.subr.bf16.mxu0 0
      %456 = vmatpush1.bf16.msra.mxu0 0
      %457 = vmatprep.subr.bf16.mxu0 0
      %458 = vmatpush1.bf16.msra.mxu0 0
      %459 = vmatprep.subr.bf16.mxu0 0
      %460 = vmatpush1.bf16.msra.mxu0 0
      %461 = vmatprep.subr.bf16.mxu0 0
      %462 = vmatpush1.bf16.msra.mxu0 0
      %463 = vmatprep.subr.bf16.mxu0 0
      %464 = vmatpush1.bf16.msra.mxu0 0
      %465 = vmatprep.subr.bf16.mxu0 0
      %466 = vmatpush1.bf16.msra.mxu0 0
      %467 = vmatprep.mubr.bf16.mxu0 0
      %468 = vmatmul.mubr.bf16.gmra.mrb[0].mxu0 %v433
      %v469 = vpop.f32.mrb[0].mxu0
      %v470 = vadd.f32 %v426, %v469
      %v471 = vpop.f32.mrb[0].mxu0
      %v472 = vpop.f32.mrb[0].mxu0
      %v473 = vadd.f32 %v429, %v472
      %v474 = vpop.f32.mrb[0].mxu0
      %475 = vdwg.mxu0
      %v476 = vld [vmem:[%s264] sm:$0x1]
      %v478 = vlaneseq
      %v479 = vshrl.u32 %v478, 7
      %v480 = vsub.s32 0, %v479
      %v481 = vrot.slane %v476, %v480
      %v483 = vadd.f32 %v470, %v481
      %v484 = vadd.f32 %v473, %v481
      %v487 = vcombine.high %v483, %v483
      %v489 = vunpack.c.l.s4 1983009808
      %v490 = vunpack.c.0.s8 %v489
      %v491 = vlaneseq
      %v492 = vshrl.u32 %v491, 7
      %v493 = vsub.s32 %v490, %v492
      %v494 = vrot.slane %v483, %v493
      %v496 = vunpack.c.l.s4 1983009808
      %v497 = vunpack.c.0.s8 %v496
      %v498 = vlaneseq
      %v499 = vshrl.u32 %v498, 7
      %v500 = vsub.s32 %v497, %v499
      %v501 = vrot.slane %v487, %v500
      %v502 = vcombine.high %v494, %v494
      %v503 = vcombine.high %v501, %v501
      %v504 = vcombine.high %v484, %v484
      %v506 = vunpack.c.l.s4 1983009808
      %v507 = vunpack.c.0.s8 %v506
      %v508 = vlaneseq
      %v509 = vshrl.u32 %v508, 7
      %v510 = vsub.s32 %v507, %v509
      %v511 = vrot.slane %v484, %v510
      %v513 = vunpack.c.l.s4 1983009808
      %v514 = vunpack.c.0.s8 %v513
      %v515 = vlaneseq
      %v516 = vshrl.u32 %v515, 7
      %v517 = vsub.s32 %v514, %v516
      %v518 = vrot.slane %v504, %v517
      %v519 = vcombine.high %v511, %v511
      %v520 = vcombine.high %v518, %v518
      %vm529 = vcmask 386048
      %530 = vst.msk [vmem:[#allocation2] sm:$0x3] %vm529, %v494
      %531 = vst.msk [vmem:[#allocation2 + $0x2] sm:$0x3] %vm529, %v502
      %532 = vst.msk [vmem:[#allocation2 + $0x4] sm:$0x3] %vm529, %v501
      %533 = vst.msk [vmem:[#allocation2 + $0x6] sm:$0x3] %vm529, %v503
      %534 = vst.msk [vmem:[#allocation2 + $0x8] sm:$0x3] %vm529, %v511
      %535 = vst.msk [vmem:[#allocation2 + $0xa] sm:$0x3] %vm529, %v519
      %536 = vst.msk [vmem:[#allocation2 + $0xc] sm:$0x3] %vm529, %v518
      %537 = vst.msk [vmem:[#allocation2 + $0xe] sm:$0x3] %vm529, %v520
      %v538 = vld [vmem:[%s261] sm:$0xff]
      %v539 = vld [vmem:[%s261 + $0x8] sm:$0xff]
      %v540 = vpack.c.bf16 %v539, %v538
      %v541 = vld [vmem:[%s267] sm:$0x1]
      %p542 = scmp.eq.s32.totalorder %s16, 0
      %s543 = scalar_select %p542, 0, 7
      %s544 = smul.u32 %s543, 2
      %s545 = scalar_lea.vmem [#allocation2], %s544
      %v546 = vld [vmem:[%s545] sm:$0x3]
      %v548 = vlaneseq
      %v549 = vshrl.u32 %v548, 7
      %v550 = vsub.s32 0, %v549
      %v551 = vrot.slane %v541, %v550
      %v554 = vsel %vm387, 0, 0
      %556 = vmatprep.subr.bf16.mxu0 0
      %557 = vmatpush1.bf16.msra.mxu0 %v540
      %558 = vmatprep.subr.bf16.mxu0 0
      %559 = vmatpush1.bf16.msra.mxu0 0
      %560 = vmatprep.subr.bf16.mxu0 0
      %561 = vmatpush1.bf16.msra.mxu0 0
      %562 = vmatprep.subr.bf16.mxu0 0
      %563 = vmatpush1.bf16.msra.mxu0 0
      %564 = vmatprep.subr.bf16.mxu0 0
      %565 = vmatpush1.bf16.msra.mxu0 0
      %566 = vmatprep.subr.bf16.mxu0 0
      %567 = vmatpush1.bf16.msra.mxu0 0
      %568 = vmatprep.subr.bf16.mxu0 0
      %569 = vmatpush1.bf16.msra.mxu0 0
      %570 = vmatprep.subr.bf16.mxu0 0
      %571 = vmatpush1.bf16.msra.mxu0 0
      %572 = vmatprep.subr.bf16.mxu0 0
      %573 = vmatpush1.bf16.msra.mxu0 0
      %574 = vmatprep.subr.bf16.mxu0 0
      %575 = vmatpush1.bf16.msra.mxu0 0
      %576 = vmatprep.subr.bf16.mxu0 0
      %577 = vmatpush1.bf16.msra.mxu0 0
      %578 = vmatprep.subr.bf16.mxu0 0
      %579 = vmatpush1.bf16.msra.mxu0 0
      %580 = vmatprep.subr.bf16.mxu0 0
      %581 = vmatpush1.bf16.msra.mxu0 0
      %582 = vmatprep.subr.bf16.mxu0 0
      %583 = vmatpush1.bf16.msra.mxu0 0
      %584 = vmatprep.subr.bf16.mxu0 0
      %585 = vmatpush1.bf16.msra.mxu0 0
      %586 = vmatprep.subr.bf16.mxu0 0
      %587 = vmatpush1.bf16.msra.mxu0 0
      %588 = vmatprep.mubr.bf16.mxu0 0
      %589 = vmatmul.mubr.bf16.gmra.mrb[0].mxu0 %v554
      %v590 = vpop.f32.mrb[0].mxu0
      %v591 = vadd.f32 %v551, %v590
      %v592 = vpop.f32.mrb[0].mxu0
      %v593 = vpop.f32.mrb[0].mxu0
      %v594 = vpop.f32.mrb[0].mxu0
      %595 = vdwg.mxu0
      %v596 = vadd.f32 %v546, %v591
      %v597 = vxor.u32 %v596, 2147483648
      %v598 = vmul.f32 %v597, 1.442695
      %v599 = vpow.pop %v598
      %v600 = vadd.f32 %v599, 1.0
      %v601 = vrcp.pop %v600
      %v602 = vmul.f32 1.0, %v601
      %604 = vrot.lane.b32.xlu0 %v591, 96
      %v605 = vpop.permute.xlu0 %604
      %v607 = vmul.f32 %v602, %v605
      %609 = vrot.lane.b32.xlu0 %v607, 32
      %v610 = vpop.permute.xlu0 %609
      %v612 = vadd.f32 %v546, %v610
      %v613 = vtanh.pop %v612
      %v614 = vsub.f32 1.0, %v602
      %616 = vrot.lane.b32.xlu0 %v613, 112
      %v617 = vpop.permute.xlu0 %616
      %v619 = vmul.f32 %v614, %v617
      %v620 = vmul.f32 %v602, 0.0
      %v621 = vadd.f32 %v619, %v620
      %623 = vrot.lane.b32.xlu0 %v621, 112
      %v624 = vpop.permute.xlu0 %623
      %s626 = scalar_lea.vmem %s272, %s544
      %vm627 = vcmask 123904
      %628 = vst.msk [vmem:[%s626] sm:$0x3] %vm627, %v624
      %s629 = scalar_select %p542, 1, 6
      %s630 = smul.u32 %s629, 2
      %s631 = scalar_lea.vmem [#allocation2], %s630
      %v632 = vld [vmem:[%s631] sm:$0x3]
      %v633 = vpack.c.bf16 %v621, %v621
      %635 = vrot.lane.b32.xlu0 %v633, 112
      %v636 = vpop.permute.xlu0 %635
      %v638 = vsel %vm387, %v636, 0
      %640 = vmatprep.subr.bf16.mxu0 0
      %641 = vmatpush1.bf16.msra.mxu0 %v540
      %642 = vmatprep.subr.bf16.mxu0 0
      %643 = vmatpush1.bf16.msra.mxu0 0
      %644 = vmatprep.subr.bf16.mxu0 0
      %645 = vmatpush1.bf16.msra.mxu0 0
      %646 = vmatprep.subr.bf16.mxu0 0
      %647 = vmatpush1.bf16.msra.mxu0 0
      %648 = vmatprep.subr.bf16.mxu0 0
      %649 = vmatpush1.bf16.msra.mxu0 0
      %650 = vmatprep.subr.bf16.mxu0 0
      %651 = vmatpush1.bf16.msra.mxu0 0
      %652 = vmatprep.subr.bf16.mxu0 0
      %653 = vmatpush1.bf16.msra.mxu0 0
      %654 = vmatprep.subr.bf16.mxu0 0
      %655 = vmatpush1.bf16.msra.mxu0 0
      %656 = vmatprep.subr.bf16.mxu0 0
      %657 = vmatpush1.bf16.msra.mxu0 0
      %658 = vmatprep.subr.bf16.mxu0 0
      %659 = vmatpush1.bf16.msra.mxu0 0
      %660 = vmatprep.subr.bf16.mxu0 0
      %661 = vmatpush1.bf16.msra.mxu0 0
      %662 = vmatprep.subr.bf16.mxu0 0
      %663 = vmatpush1.bf16.msra.mxu0 0
      %664 = vmatprep.subr.bf16.mxu0 0
      %665 = vmatpush1.bf16.msra.mxu0 0
      %666 = vmatprep.subr.bf16.mxu0 0
      %667 = vmatpush1.bf16.msra.mxu0 0
      %668 = vmatprep.subr.bf16.mxu0 0
      %669 = vmatpush1.bf16.msra.mxu0 0
      %670 = vmatprep.subr.bf16.mxu0 0
      %671 = vmatpush1.bf16.msra.mxu0 0
      %672 = vmatprep.mubr.bf16.mxu0 0
      %673 = vmatmul.mubr.bf16.gmra.mrb[0].mxu0 %v638
      %v674 = vpop.f32.mrb[0].mxu0
      %v675 = vadd.f32 %v551, %v674
      %v676 = vpop.f32.mrb[0].mxu0
      %v677 = vpop.f32.mrb[0].mxu0
      %v678 = vpop.f32.mrb[0].mxu0
      %679 = vdwg.mxu0
      %v680 = vadd.f32 %v632, %v675
      %v681 = vxor.u32 %v680, 2147483648
      %v682 = vmul.f32 %v681, 1.442695
      %v683 = vpow.pop %v682
      %v684 = vadd.f32 %v683, 1.0
      %v685 = vrcp.pop %v684
      %v686 = vmul.f32 1.0, %v685
      %688 = vrot.lane.b32.xlu0 %v675, 96
      %v689 = vpop.permute.xlu0 %688
      %v691 = vmul.f32 %v686, %v689
      %693 = vrot.lane.b32.xlu0 %v691, 32
      %v694 = vpop.permute.xlu0 %693
      %v696 = vadd.f32 %v632, %v694
      %v697 = vtanh.pop %v696
      %v698 = vsub.f32 1.0, %v686
      %700 = vrot.lane.b32.xlu0 %v697, 112
      %v701 = vpop.permute.xlu0 %700
      %v703 = vmul.f32 %v698, %v701
      %v704 = vmul.f32 %v686, %v621
      %v705 = vadd.f32 %v703, %v704
      %707 = vrot.lane.b32.xlu0 %v705, 112
      %v708 = vpop.permute.xlu0 %707
      %s710 = scalar_lea.vmem %s272, %s630
      %711 = vst.msk [vmem:[%s710] sm:$0x3] %vm627, %v708
      %s712 = scalar_select %p542, 2, 5
      %s713 = smul.u32 %s712, 2
      %s714 = scalar_lea.vmem [#allocation2], %s713
      %v715 = vld [vmem:[%s714] sm:$0x3]
      %v716 = vpack.c.bf16 %v705, %v705
      %718 = vrot.lane.b32.xlu0 %v716, 112
      %v719 = vpop.permute.xlu0 %718
      %v721 = vsel %vm387, %v719, 0
      %723 = vmatprep.subr.bf16.mxu0 0
      %724 = vmatpush1.bf16.msra.mxu0 %v540
      %725 = vmatprep.subr.bf16.mxu0 0
      %726 = vmatpush1.bf16.msra.mxu0 0
      %727 = vmatprep.subr.bf16.mxu0 0
      %728 = vmatpush1.bf16.msra.mxu0 0
      %729 = vmatprep.subr.bf16.mxu0 0
      %730 = vmatpush1.bf16.msra.mxu0 0
      %731 = vmatprep.subr.bf16.mxu0 0
      %732 = vmatpush1.bf16.msra.mxu0 0
      %733 = vmatprep.subr.bf16.mxu0 0
      %734 = vmatpush1.bf16.msra.mxu0 0
      %735 = vmatprep.subr.bf16.mxu0 0
      %736 = vmatpush1.bf16.msra.mxu0 0
      %737 = vmatprep.subr.bf16.mxu0 0
      %738 = vmatpush1.bf16.msra.mxu0 0
      %739 = vmatprep.subr.bf16.mxu0 0
      %740 = vmatpush1.bf16.msra.mxu0 0
      %741 = vmatprep.subr.bf16.mxu0 0
      %742 = vmatpush1.bf16.msra.mxu0 0
      %743 = vmatprep.subr.bf16.mxu0 0
      %744 = vmatpush1.bf16.msra.mxu0 0
      %745 = vmatprep.subr.bf16.mxu0 0
      %746 = vmatpush1.bf16.msra.mxu0 0
      %747 = vmatprep.subr.bf16.mxu0 0
      %748 = vmatpush1.bf16.msra.mxu0 0
      %749 = vmatprep.subr.bf16.mxu0 0
      %750 = vmatpush1.bf16.msra.mxu0 0
      %751 = vmatprep.subr.bf16.mxu0 0
      %752 = vmatpush1.bf16.msra.mxu0 0
      %753 = vmatprep.subr.bf16.mxu0 0
      %754 = vmatpush1.bf16.msra.mxu0 0
      %755 = vmatprep.mubr.bf16.mxu0 0
      %756 = vmatmul.mubr.bf16.gmra.mrb[0].mxu0 %v721
      %v757 = vpop.f32.mrb[0].mxu0
      %v758 = vadd.f32 %v551, %v757
      %v759 = vpop.f32.mrb[0].mxu0
      %v760 = vpop.f32.mrb[0].mxu0
      %v761 = vpop.f32.mrb[0].mxu0
      %762 = vdwg.mxu0
      %v763 = vadd.f32 %v715, %v758
      %v764 = vxor.u32 %v763, 2147483648
      %v765 = vmul.f32 %v764, 1.442695
      %v766 = vpow.pop %v765
      %v767 = vadd.f32 %v766, 1.0
      %v768 = vrcp.pop %v767
      %v769 = vmul.f32 1.0, %v768
      %771 = vrot.lane.b32.xlu0 %v758, 96
      %v772 = vpop.permute.xlu0 %771
      %v774 = vmul.f32 %v769, %v772
      %776 = vrot.lane.b32.xlu0 %v774, 32
      %v777 = vpop.permute.xlu0 %776
      %v779 = vadd.f32 %v715, %v777
      %v780 = vtanh.pop %v779
      %v781 = vsub.f32 1.0, %v769
      %783 = vrot.lane.b32.xlu0 %v780, 112
      %v784 = vpop.permute.xlu0 %783
      %v786 = vmul.f32 %v781, %v784
      %v787 = vmul.f32 %v769, %v705
      %v788 = vadd.f32 %v786, %v787
      %790 = vrot.lane.b32.xlu0 %v788, 112
      %v791 = vpop.permute.xlu0 %790
      %s793 = scalar_lea.vmem %s272, %s713
      %794 = vst.msk [vmem:[%s793] sm:$0x3] %vm627, %v791
      %s795 = scalar_select %p542, 3, 4
      %s796 = smul.u32 %s795, 2
      %s797 = scalar_lea.vmem [#allocation2], %s796
      %v798 = vld [vmem:[%s797] sm:$0x3]
      %v799 = vpack.c.bf16 %v788, %v788
      %801 = vrot.lane.b32.xlu0 %v799, 112
      %v802 = vpop.permute.xlu0 %801
      %v804 = vsel %vm387, %v802, 0
      %806 = vmatprep.subr.bf16.mxu0 0
      %807 = vmatpush1.bf16.msra.mxu0 %v540
      %808 = vmatprep.subr.bf16.mxu0 0
      %809 = vmatpush1.bf16.msra.mxu0 0
      %810 = vmatprep.subr.bf16.mxu0 0
      %811 = vmatpush1.bf16.msra.mxu0 0
      %812 = vmatprep.subr.bf16.mxu0 0
      %813 = vmatpush1.bf16.msra.mxu0 0
      %814 = vmatprep.subr.bf16.mxu0 0
      %815 = vmatpush1.bf16.msra.mxu0 0
      %816 = vmatprep.subr.bf16.mxu0 0
      %817 = vmatpush1.bf16.msra.mxu0 0
      %818 = vmatprep.subr.bf16.mxu0 0
      %819 = vmatpush1.bf16.msra.mxu0 0
      %820 = vmatprep.subr.bf16.mxu0 0
      %821 = vmatpush1.bf16.msra.mxu0 0
      %822 = vmatprep.subr.bf16.mxu0 0
      %823 = vmatpush1.bf16.msra.mxu0 0
      %824 = vmatprep.subr.bf16.mxu0 0
      %825 = vmatpush1.bf16.msra.mxu0 0
      %826 = vmatprep.subr.bf16.mxu0 0
      %827 = vmatpush1.bf16.msra.mxu0 0
      %828 = vmatprep.subr.bf16.mxu0 0
      %829 = vmatpush1.bf16.msra.mxu0 0
      %830 = vmatprep.subr.bf16.mxu0 0
      %831 = vmatpush1.bf16.msra.mxu0 0
      %832 = vmatprep.subr.bf16.mxu0 0
      %833 = vmatpush1.bf16.msra.mxu0 0
      %834 = vmatprep.subr.bf16.mxu0 0
      %835 = vmatpush1.bf16.msra.mxu0 0
      %836 = vmatprep.subr.bf16.mxu0 0
      %837 = vmatpush1.bf16.msra.mxu0 0
      %838 = vmatprep.mubr.bf16.mxu0 0
      %839 = vmatmul.mubr.bf16.gmra.mrb[0].mxu0 %v804
      %v840 = vpop.f32.mrb[0].mxu0
      %v841 = vadd.f32 %v551, %v840
      %v842 = vpop.f32.mrb[0].mxu0
      %v843 = vpop.f32.mrb[0].mxu0
      %v844 = vpop.f32.mrb[0].mxu0
      %845 = vdwg.mxu0
      %v846 = vadd.f32 %v798, %v841
      %v847 = vxor.u32 %v846, 2147483648
      %v848 = vmul.f32 %v847, 1.442695
      %v849 = vpow.pop %v848
      %v850 = vadd.f32 %v849, 1.0
      %v851 = vrcp.pop %v850
      %v852 = vmul.f32 1.0, %v851
      %854 = vrot.lane.b32.xlu0 %v841, 96
      %v855 = vpop.permute.xlu0 %854
      %v857 = vmul.f32 %v852, %v855
      %859 = vrot.lane.b32.xlu0 %v857, 32
      %v860 = vpop.permute.xlu0 %859
      %v862 = vadd.f32 %v798, %v860
      %v863 = vtanh.pop %v862
      %v864 = vsub.f32 1.0, %v852
      %866 = vrot.lane.b32.xlu0 %v863, 112
      %v867 = vpop.permute.xlu0 %866
      %v869 = vmul.f32 %v864, %v867
      %v870 = vmul.f32 %v852, %v788
      %v871 = vadd.f32 %v869, %v870
      %873 = vrot.lane.b32.xlu0 %v871, 112
      %v874 = vpop.permute.xlu0 %873
      %s876 = scalar_lea.vmem %s272, %s796
      %877 = vst.msk [vmem:[%s876] sm:$0x3] %vm627, %v874
      %s878 = scalar_select %p542, 4, 3
      %s879 = smul.u32 %s878, 2
      %s880 = scalar_lea.vmem [#allocation2], %s879
      %v881 = vld [vmem:[%s880] sm:$0x3]
      %v882 = vpack.c.bf16 %v871, %v871
      %884 = vrot.lane.b32.xlu0 %v882, 112
      %v885 = vpop.permute.xlu0 %884
      %v887 = vsel %vm387, %v885, 0
      %889 = vmatprep.subr.bf16.mxu0 0
      %890 = vmatpush1.bf16.msra.mxu0 %v540
      %891 = vmatprep.subr.bf16.mxu0 0
      %892 = vmatpush1.bf16.msra.mxu0 0
      %893 = vmatprep.subr.bf16.mxu0 0
      %894 = vmatpush1.bf16.msra.mxu0 0
      %895 = vmatprep.subr.bf16.mxu0 0
      %896 = vmatpush1.bf16.msra.mxu0 0
      %897 = vmatprep.subr.bf16.mxu0 0
      %898 = vmatpush1.bf16.msra.mxu0 0
      %899 = vmatprep.subr.bf16.mxu0 0
      %900 = vmatpush1.bf16.msra.mxu0 0
      %901 = vmatprep.subr.bf16.mxu0 0
      %902 = vmatpush1.bf16.msra.mxu0 0
      %903 = vmatprep.subr.bf16.mxu0 0
      %904 = vmatpush1.bf16.msra.mxu0 0
      %905 = vmatprep.subr.bf16.mxu0 0
      %906 = vmatpush1.bf16.msra.mxu0 0
      %907 = vmatprep.subr.bf16.mxu0 0
      %908 = vmatpush1.bf16.msra.mxu0 0
      %909 = vmatprep.subr.bf16.mxu0 0
      %910 = vmatpush1.bf16.msra.mxu0 0
      %911 = vmatprep.subr.bf16.mxu0 0
      %912 = vmatpush1.bf16.msra.mxu0 0
      %913 = vmatprep.subr.bf16.mxu0 0
      %914 = vmatpush1.bf16.msra.mxu0 0
      %915 = vmatprep.subr.bf16.mxu0 0
      %916 = vmatpush1.bf16.msra.mxu0 0
      %917 = vmatprep.subr.bf16.mxu0 0
      %918 = vmatpush1.bf16.msra.mxu0 0
      %919 = vmatprep.subr.bf16.mxu0 0
      %920 = vmatpush1.bf16.msra.mxu0 0
      %921 = vmatprep.mubr.bf16.mxu0 0
      %922 = vmatmul.mubr.bf16.gmra.mrb[0].mxu0 %v887
      %v923 = vpop.f32.mrb[0].mxu0
      %v924 = vadd.f32 %v551, %v923
      %v925 = vpop.f32.mrb[0].mxu0
      %v926 = vpop.f32.mrb[0].mxu0
      %v927 = vpop.f32.mrb[0].mxu0
      %928 = vdwg.mxu0
      %v929 = vadd.f32 %v881, %v924
      %v930 = vxor.u32 %v929, 2147483648
      %v931 = vmul.f32 %v930, 1.442695
      %v932 = vpow.pop %v931
      %v933 = vadd.f32 %v932, 1.0
      %v934 = vrcp.pop %v933
      %v935 = vmul.f32 1.0, %v934
      %937 = vrot.lane.b32.xlu0 %v924, 96
      %v938 = vpop.permute.xlu0 %937
      %v940 = vmul.f32 %v935, %v938
      %942 = vrot.lane.b32.xlu0 %v940, 32
      %v943 = vpop.permute.xlu0 %942
      %v945 = vadd.f32 %v881, %v943
      %v946 = vtanh.pop %v945
      %v947 = vsub.f32 1.0, %v935
      %949 = vrot.lane.b32.xlu0 %v946, 112
      %v950 = vpop.permute.xlu0 %949
      %v952 = vmul.f32 %v947, %v950
      %v953 = vmul.f32 %v935, %v871
      %v954 = vadd.f32 %v952, %v953
      %956 = vrot.lane.b32.xlu0 %v954, 112
      %v957 = vpop.permute.xlu0 %956
      %s959 = scalar_lea.vmem %s272, %s879
      %960 = vst.msk [vmem:[%s959] sm:$0x3] %vm627, %v957
      %s961 = scalar_select %p542, 5, 2
      %s962 = smul.u32 %s961, 2
      %s963 = scalar_lea.vmem [#allocation2], %s962
      %v964 = vld [vmem:[%s963] sm:$0x3]
      %v965 = vpack.c.bf16 %v954, %v954
      %967 = vrot.lane.b32.xlu0 %v965, 112
      %v968 = vpop.permute.xlu0 %967
      %v970 = vsel %vm387, %v968, 0
      %972 = vmatprep.subr.bf16.mxu0 0
      %973 = vmatpush1.bf16.msra.mxu0 %v540
      %974 = vmatprep.subr.bf16.mxu0 0
      %975 = vmatpush1.bf16.msra.mxu0 0
      %976 = vmatprep.subr.bf16.mxu0 0
      %977 = vmatpush1.bf16.msra.mxu0 0
      %978 = vmatprep.subr.bf16.mxu0 0
      %979 = vmatpush1.bf16.msra.mxu0 0
      %980 = vmatprep.subr.bf16.mxu0 0
      %981 = vmatpush1.bf16.msra.mxu0 0
      %982 = vmatprep.subr.bf16.mxu0 0
      %983 = vmatpush1.bf16.msra.mxu0 0
      %984 = vmatprep.subr.bf16.mxu0 0
      %985 = vmatpush1.bf16.msra.mxu0 0
      %986 = vmatprep.subr.bf16.mxu0 0
      %987 = vmatpush1.bf16.msra.mxu0 0
      %988 = vmatprep.subr.bf16.mxu0 0
      %989 = vmatpush1.bf16.msra.mxu0 0
      %990 = vmatprep.subr.bf16.mxu0 0
      %991 = vmatpush1.bf16.msra.mxu0 0
      %992 = vmatprep.subr.bf16.mxu0 0
      %993 = vmatpush1.bf16.msra.mxu0 0
      %994 = vmatprep.subr.bf16.mxu0 0
      %995 = vmatpush1.bf16.msra.mxu0 0
      %996 = vmatprep.subr.bf16.mxu0 0
      %997 = vmatpush1.bf16.msra.mxu0 0
      %998 = vmatprep.subr.bf16.mxu0 0
      %999 = vmatpush1.bf16.msra.mxu0 0
      %1000 = vmatprep.subr.bf16.mxu0 0
      %1001 = vmatpush1.bf16.msra.mxu0 0
      %1002 = vmatprep.subr.bf16.mxu0 0
      %1003 = vmatpush1.bf16.msra.mxu0 0
      %1004 = vmatprep.mubr.bf16.mxu0 0
      %1005 = vmatmul.mubr.bf16.gmra.mrb[0].mxu0 %v970
      %v1006 = vpop.f32.mrb[0].mxu0
      %v1007 = vadd.f32 %v551, %v1006
      %v1008 = vpop.f32.mrb[0].mxu0
      %v1009 = vpop.f32.mrb[0].mxu0
      %v1010 = vpop.f32.mrb[0].mxu0
      %1011 = vdwg.mxu0
      %v1012 = vadd.f32 %v964, %v1007
      %v1013 = vxor.u32 %v1012, 2147483648
      %v1014 = vmul.f32 %v1013, 1.442695
      %v1015 = vpow.pop %v1014
      %v1016 = vadd.f32 %v1015, 1.0
      %v1017 = vrcp.pop %v1016
      %v1018 = vmul.f32 1.0, %v1017
      %1020 = vrot.lane.b32.xlu0 %v1007, 96
      %v1021 = vpop.permute.xlu0 %1020
      %v1023 = vmul.f32 %v1018, %v1021
      %1025 = vrot.lane.b32.xlu0 %v1023, 32
      %v1026 = vpop.permute.xlu0 %1025
      %v1028 = vadd.f32 %v964, %v1026
      %v1029 = vtanh.pop %v1028
      %v1030 = vsub.f32 1.0, %v1018
      %1032 = vrot.lane.b32.xlu0 %v1029, 112
      %v1033 = vpop.permute.xlu0 %1032
      %v1035 = vmul.f32 %v1030, %v1033
      %v1036 = vmul.f32 %v1018, %v954
      %v1037 = vadd.f32 %v1035, %v1036
      %1039 = vrot.lane.b32.xlu0 %v1037, 112
      %v1040 = vpop.permute.xlu0 %1039
      %s1042 = scalar_lea.vmem %s272, %s962
      %1043 = vst.msk [vmem:[%s1042] sm:$0x3] %vm627, %v1040
      %s1044 = scalar_select %p542, 6, 1
      %s1045 = smul.u32 %s1044, 2
      %s1046 = scalar_lea.vmem [#allocation2], %s1045
      %v1047 = vld [vmem:[%s1046] sm:$0x3]
      %v1048 = vpack.c.bf16 %v1037, %v1037
      %1050 = vrot.lane.b32.xlu0 %v1048, 112
      %v1051 = vpop.permute.xlu0 %1050
      %v1053 = vsel %vm387, %v1051, 0
      %1055 = vmatprep.subr.bf16.mxu0 0
      %1056 = vmatpush1.bf16.msra.mxu0 %v540
      %1057 = vmatprep.subr.bf16.mxu0 0
      %1058 = vmatpush1.bf16.msra.mxu0 0
      %1059 = vmatprep.subr.bf16.mxu0 0
      %1060 = vmatpush1.bf16.msra.mxu0 0
      %1061 = vmatprep.subr.bf16.mxu0 0
      %1062 = vmatpush1.bf16.msra.mxu0 0
      %1063 = vmatprep.subr.bf16.mxu0 0
      %1064 = vmatpush1.bf16.msra.mxu0 0
      %1065 = vmatprep.subr.bf16.mxu0 0
      %1066 = vmatpush1.bf16.msra.mxu0 0
      %1067 = vmatprep.subr.bf16.mxu0 0
      %1068 = vmatpush1.bf16.msra.mxu0 0
      %1069 = vmatprep.subr.bf16.mxu0 0
      %1070 = vmatpush1.bf16.msra.mxu0 0
      %1071 = vmatprep.subr.bf16.mxu0 0
      %1072 = vmatpush1.bf16.msra.mxu0 0
      %1073 = vmatprep.subr.bf16.mxu0 0
      %1074 = vmatpush1.bf16.msra.mxu0 0
      %1075 = vmatprep.subr.bf16.mxu0 0
      %1076 = vmatpush1.bf16.msra.mxu0 0
      %1077 = vmatprep.subr.bf16.mxu0 0
      %1078 = vmatpush1.bf16.msra.mxu0 0
      %1079 = vmatprep.subr.bf16.mxu0 0
      %1080 = vmatpush1.bf16.msra.mxu0 0
      %1081 = vmatprep.subr.bf16.mxu0 0
      %1082 = vmatpush1.bf16.msra.mxu0 0
      %1083 = vmatprep.subr.bf16.mxu0 0
      %1084 = vmatpush1.bf16.msra.mxu0 0
      %1085 = vmatprep.subr.bf16.mxu0 0
      %1086 = vmatpush1.bf16.msra.mxu0 0
      %1087 = vmatprep.mubr.bf16.mxu0 0
      %1088 = vmatmul.mubr.bf16.gmra.mrb[0].mxu0 %v1053
      %v1089 = vpop.f32.mrb[0].mxu0
      %v1090 = vadd.f32 %v551, %v1089
      %v1091 = vpop.f32.mrb[0].mxu0
      %v1092 = vpop.f32.mrb[0].mxu0
      %v1093 = vpop.f32.mrb[0].mxu0
      %1094 = vdwg.mxu0
      %v1095 = vadd.f32 %v1047, %v1090
      %v1096 = vxor.u32 %v1095, 2147483648
      %v1097 = vmul.f32 %v1096, 1.442695
      %v1098 = vpow.pop %v1097
      %v1099 = vadd.f32 %v1098, 1.0
      %v1100 = vrcp.pop %v1099
      %v1101 = vmul.f32 1.0, %v1100
      %1103 = vrot.lane.b32.xlu0 %v1090, 96
      %v1104 = vpop.permute.xlu0 %1103
      %v1106 = vmul.f32 %v1101, %v1104
      %1108 = vrot.lane.b32.xlu0 %v1106, 32
      %v1109 = vpop.permute.xlu0 %1108
      %v1111 = vadd.f32 %v1047, %v1109
      %v1112 = vtanh.pop %v1111
      %v1113 = vsub.f32 1.0, %v1101
      %1115 = vrot.lane.b32.xlu0 %v1112, 112
      %v1116 = vpop.permute.xlu0 %1115
      %v1118 = vmul.f32 %v1113, %v1116
      %v1119 = vmul.f32 %v1101, %v1037
      %v1120 = vadd.f32 %v1118, %v1119
      %1122 = vrot.lane.b32.xlu0 %v1120, 112
      %v1123 = vpop.permute.xlu0 %1122
      %s1125 = scalar_lea.vmem %s272, %s1045
      %1126 = vst.msk [vmem:[%s1125] sm:$0x3] %vm627, %v1123
      %s1127 = scalar_select %p542, 7, 0
      %s1128 = smul.u32 %s1127, 2
      %s1129 = scalar_lea.vmem [#allocation2], %s1128
      %v1130 = vld [vmem:[%s1129] sm:$0x3]
      %v1131 = vpack.c.bf16 %v1120, %v1120
      %1133 = vrot.lane.b32.xlu0 %v1131, 112
      %v1134 = vpop.permute.xlu0 %1133
      %v1136 = vsel %vm387, %v1134, 0
      %1138 = vmatprep.subr.bf16.mxu0 0
      %1139 = vmatpush1.bf16.msra.mxu0 %v540
      %1140 = vmatprep.subr.bf16.mxu0 0
      %1141 = vmatpush1.bf16.msra.mxu0 0
      %1142 = vmatprep.subr.bf16.mxu0 0
      %1143 = vmatpush1.bf16.msra.mxu0 0
      %1144 = vmatprep.subr.bf16.mxu0 0
      %1145 = vmatpush1.bf16.msra.mxu0 0
      %1146 = vmatprep.subr.bf16.mxu0 0
      %1147 = vmatpush1.bf16.msra.mxu0 0
      %1148 = vmatprep.subr.bf16.mxu0 0
      %1149 = vmatpush1.bf16.msra.mxu0 0
      %1150 = vmatprep.subr.bf16.mxu0 0
      %1151 = vmatpush1.bf16.msra.mxu0 0
      %1152 = vmatprep.subr.bf16.mxu0 0
      %1153 = vmatpush1.bf16.msra.mxu0 0
      %1154 = vmatprep.subr.bf16.mxu0 0
      %1155 = vmatpush1.bf16.msra.mxu0 0
      %1156 = vmatprep.subr.bf16.mxu0 0
      %1157 = vmatpush1.bf16.msra.mxu0 0
      %1158 = vmatprep.subr.bf16.mxu0 0
      %1159 = vmatpush1.bf16.msra.mxu0 0
      %1160 = vmatprep.subr.bf16.mxu0 0
      %1161 = vmatpush1.bf16.msra.mxu0 0
      %1162 = vmatprep.subr.bf16.mxu0 0
      %1163 = vmatpush1.bf16.msra.mxu0 0
      %1164 = vmatprep.subr.bf16.mxu0 0
      %1165 = vmatpush1.bf16.msra.mxu0 0
      %1166 = vmatprep.subr.bf16.mxu0 0
      %1167 = vmatpush1.bf16.msra.mxu0 0
      %1168 = vmatprep.subr.bf16.mxu0 0
      %1169 = vmatpush1.bf16.msra.mxu0 0
      %1170 = vmatprep.mubr.bf16.mxu0 0
      %1171 = vmatmul.mubr.bf16.gmra.mrb[0].mxu0 %v1136
      %v1172 = vpop.f32.mrb[0].mxu0
      %v1173 = vadd.f32 %v551, %v1172
      %v1174 = vpop.f32.mrb[0].mxu0
      %v1175 = vpop.f32.mrb[0].mxu0
      %v1176 = vpop.f32.mrb[0].mxu0
      %1177 = vdwg.mxu0
      %v1178 = vadd.f32 %v1130, %v1173
      %v1179 = vxor.u32 %v1178, 2147483648
      %v1180 = vmul.f32 %v1179, 1.442695
      %v1181 = vpow.pop %v1180
      %v1182 = vadd.f32 %v1181, 1.0
      %v1183 = vrcp.pop %v1182
      %v1184 = vmul.f32 1.0, %v1183
      %1186 = vrot.lane.b32.xlu0 %v1173, 96
      %v1187 = vpop.permute.xlu0 %1186
      %v1189 = vmul.f32 %v1184, %v1187
      %1191 = vrot.lane.b32.xlu0 %v1189, 32
      %v1192 = vpop.permute.xlu0 %1191
      %v1194 = vadd.f32 %v1130, %v1192
      %v1195 = vtanh.pop %v1194
      %v1196 = vsub.f32 1.0, %v1184
      %1198 = vrot.lane.b32.xlu0 %v1195, 112
      %v1199 = vpop.permute.xlu0 %1198
      %v1201 = vmul.f32 %v1196, %v1199
      %v1202 = vmul.f32 %v1184, %v1120
      %v1203 = vadd.f32 %v1201, %v1202
      %1205 = vrot.lane.b32.xlu0 %v1203, 112
      %v1206 = vpop.permute.xlu0 %1205
      %s1208 = scalar_lea.vmem %s272, %s1128
      %1209 = vst.msk [vmem:[%s1208] sm:$0x3] %vm627, %v1206
      %p1210 = scmp.lt.s32.totalorder %s16, 1
      %s1211 = scalar_select %p1210, %s16, 1
      %s1212 = smul.addr %s1211, 8
      %s1213 = smul.addr %s1212, 2
      %s1214 = scalar_lea.vmem %s5, %s1213
      // Predicated region
      $region41: #{gru_crf_forward.4} parent=39 // pred_check
        %p1215 = pneg %p159
      $region42: #{gru_crf_forward.4} parent=39 // pred_check_branch
        %1217 = sbr.rel (%p1215) target = $region44
      $region43: #{gru_crf_forward.4} parent=39 // pred_region
        _
      $region44: #{gru_crf_forward.4} parent=39 // pred_fallthru
        _
    $region40: #{gru_crf_forward.4} parent=5 // pred_fallthru
      _
    %p1218 = scmp.le.s32.totalorder 2, %s11
    // Predicated region
    $region45: #{gru_crf_forward.4} parent=5 // pred_check
      %p1219 = pneg %p1218
    $region46: #{gru_crf_forward.4} parent=5 // pred_check_branch
      %1221 = sbr.rel (%p1219) target = $region48
    $region47: #{gru_crf_forward.4} parent=5 // pred_region
      %s1222 = ssub.s32 %s11, 2
      // Predicated region
      $region49: #{gru_crf_forward.4} parent=47 // pred_check
        %p1223 = pneg %p165
      $region50: #{gru_crf_forward.4} parent=47 // pred_check_branch
        %1225 = sbr.rel (%p1223) target = $region52
      $region51: #{gru_crf_forward.4} parent=47 // pred_region
        %p1226 = scmp.lt.s32.totalorder %s17, 1
        %s1227 = scalar_select %p1226, %s17, 1
        %s1228 = smul.addr %s1227, 8
        %s1229 = smul.addr %s1228, 2
        %s1230 = scalar_lea.vmem %s5, %s1229
      $region52: #{gru_crf_forward.4} parent=47 // pred_fallthru
        _
    $region48: #{gru_crf_forward.4} parent=5 // pred_fallthru
      _
  $region6: #{gru_crf_forward.4} parent=0 // loop_footer
    %s15 = sadd.s32 1, %s11
  $region7: #{gru_crf_forward.4} parent=0 // loop_footer_branch
    %10 = sbr.rel target = $region3
  $region8: #{gru_crf_forward.4} parent=0 // loop_exit
    _

// kernel: gru_crf_forward.3
$region0: #{gru_crf_forward.3}
  #allocation0 [shape = 'u32[]', space=smem, size = 0x4, offset = 0x4, fixed_abs, tag = 'smem constant byte address 0x4 - core index']
  #allocation1 [shape = 'u32[144,128]{1,0:T(1,128)}', space=vmem, size = 0x12000, scoped, tag = 'internal scratch']
  #allocation2 [shape = 'f32[8,2,48]{2,1,0:T(2,128)}', space=vmem, size = 0x2000, scoped, tag = 'scratch operand']
  %s0 = inlined_call_operand.vmem [shape: f32[1,8,2,300], index: 0, kind: input, shape index: {}]
  %s1 = inlined_call_operand.vmem [shape: f32[2,300,48], index: 1, kind: input, shape index: {}]
  %s2 = inlined_call_operand.vmem [shape: f32[2,16,48], index: 2, kind: input, shape index: {}]
  %s3 = inlined_call_operand.vmem [shape: f32[2,1,48], index: 3, kind: input, shape index: {}]
  %s4 = inlined_call_operand.vmem [shape: f32[2,1,48], index: 4, kind: input, shape index: {}]
  %s5 = inlined_call_operand.vmem [shape: f32[2,8,2,16], index: 5, kind: output, shape index: {}]
  %s6 = sld [smem:[#allocation0]]
  $region53: #{gru_crf_forward.3} parent=0
    _
  %s8 = ssub.s32 1, %s6
  %s9 = scalar_select 0, %s8, %s6
  loop: start=0, step=1, limit=4
  $region2: #{gru_crf_forward.3} parent=0 // loop_pre_header
    _
  $region3: #{gru_crf_forward.3} parent=0 // loop_header
    %s11 = sphi 0, %s15
    %p12 = scmp.ge.s32.totalorder %s11, 4
    %s19 = sphi 0, %s19
    %s21 = sphi 0, %s19
    %s22 = sphi 0, %s21
    %s36 = sphi 0, %s22
    %s42 = sphi 0, %s44
    %s45 = sphi 0, %s42
    %s46 = sphi 0, %s45
    %s62 = sphi 0, %s46
    %s68 = sphi 0, %s70
    %s71 = sphi 0, %s68
    %s72 = sphi 0, %s71
    %s88 = sphi 0, %s72
    %s94 = sphi 0, %s96
    %s97 = sphi 0, %s94
    %s98 = sphi 0, %s97
    %s114 = sphi 0, %s98
    %s120 = sphi 0, %s122
    %s123 = sphi 0, %s120
    %s124 = sphi 0, %s123
    %s140 = sphi 0, %s124
    %s146 = sphi 0, %s148
    %s149 = sphi 0, %s146
    %s150 = sphi 0, %s149
    %s166 = sphi 0, %s150
  $region4: #{gru_crf_forward.3} parent=0 // loop_header_branch
    %14 = sbr.rel (%p12) target = $region8
  $region5: #{gru_crf_forward.3} parent=0 // loop_body
    %s16 = ssub.s32 %s11, 1
    %s17 = ssub.s32 %s11, 2
    %s18 = sadd.s32 %s11, 1
    %s20 = sadd.s32 %s19, 1
    %p23 = scmp.eq.s32.totalorder %s11, 1
    %p24 = scmp.ne.s32.totalorder %s19, %s21
    %p25 = scmp.eq.s32.totalorder %s11, 0
    %p26 = por %p24, %p25
    %p27 = scmp.ne.s32.totalorder %s19, %s21
    %p28 = scmp.eq.s32.totalorder %s16, 1
    %p29 = por %p27, %p28
    %p30 = scmp.ne.s32.totalorder %s21, %s22
    %p31 = scmp.eq.s32.totalorder %s16, 0
    %p32 = por %p30, %p31
    %p33 = scmp.ne.s32.totalorder %s21, %s22
    %p34 = scmp.eq.s32.totalorder %s17, 1
    %p35 = por %p33, %p34
    %p37 = scmp.ne.s32.totalorder %s22, %s36
    %p38 = scmp.eq.s32.totalorder %s17, 0
    %p39 = por %p37, %p38
    %s40 = ssub.s32 %s11, %s18
    %p41 = scmp.eq.s32.totalorder %s40, 0
    %s43 = sadd.s32 %s42, 1
    %s44 = scalar_select %p41, %s42, %s43
    %p47 = pneg %p41
    %p48 = scmp.eq.s32.totalorder %s11, 1
    %p49 = por %p47, %p48
    %p50 = scmp.ne.s32.totalorder %s42, %s45
    %p51 = scmp.eq.s32.totalorder %s11, 0
    %p52 = por %p50, %p51
    %p53 = scmp.ne.s32.totalorder %s42, %s45
    %p54 = scmp.eq.s32.totalorder %s16, 1
    %p55 = por %p53, %p54
    %p56 = scmp.ne.s32.totalorder %s45, %s46
    %p57 = scmp.eq.s32.totalorder %s16, 0
    %p58 = por %p56, %p57
    %p59 = scmp.ne.s32.totalorder %s45, %s46
    %p60 = scmp.eq.s32.totalorder %s17, 1
    %p61 = por %p59, %p60
    %p63 = scmp.ne.s32.totalorder %s46, %s62
    %p64 = scmp.eq.s32.totalorder %s17, 0
    %p65 = por %p63, %p64
    %s66 = ssub.s32 %s11, %s18
    %p67 = scmp.eq.s32.totalorder %s66, 0
    %s69 = sadd.s32 %s68, 1
    %s70 = scalar_select %p67, %s68, %s69
    %p73 = pneg %p67
    %p74 = scmp.eq.s32.totalorder %s11, 1
    %p75 = por %p73, %p74
    %p76 = scmp.ne.s32.totalorder %s68, %s71
    %p77 = scmp.eq.s32.totalorder %s11, 0
    %p78 = por %p76, %p77
    %p79 = scmp.ne.s32.totalorder %s68, %s71
    %p80 = scmp.eq.s32.totalorder %s16, 1
    %p81 = por %p79, %p80
    %p82 = scmp.ne.s32.totalorder %s71, %s72
    %p83 = scmp.eq.s32.totalorder %s16, 0
    %p84 = por %p82, %p83
    %p85 = scmp.ne.s32.totalorder %s71, %s72
    %p86 = scmp.eq.s32.totalorder %s17, 1
    %p87 = por %p85, %p86
    %p89 = scmp.ne.s32.totalorder %s72, %s88
    %p90 = scmp.eq.s32.totalorder %s17, 0
    %p91 = por %p89, %p90
    %s92 = ssub.s32 %s11, %s18
    %p93 = scmp.eq.s32.totalorder %s92, 0
    %s95 = sadd.s32 %s94, 1
    %s96 = scalar_select %p93, %s94, %s95
    %p99 = pneg %p93
    %p100 = scmp.eq.s32.totalorder %s11, 1
    %p101 = por %p99, %p100
    %p102 = scmp.ne.s32.totalorder %s94, %s97
    %p103 = scmp.eq.s32.totalorder %s11, 0
    %p104 = por %p102, %p103
    %p105 = scmp.ne.s32.totalorder %s94, %s97
    %p106 = scmp.eq.s32.totalorder %s16, 1
    %p107 = por %p105, %p106
    %p108 = scmp.ne.s32.totalorder %s97, %s98
    %p109 = scmp.eq.s32.totalorder %s16, 0
    %p110 = por %p108, %p109
    %p111 = scmp.ne.s32.totalorder %s97, %s98
    %p112 = scmp.eq.s32.totalorder %s17, 1
    %p113 = por %p111, %p112
    %p115 = scmp.ne.s32.totalorder %s98, %s114
    %p116 = scmp.eq.s32.totalorder %s17, 0
    %p117 = por %p115, %p116
    %s118 = ssub.s32 %s11, %s18
    %p119 = scmp.eq.s32.totalorder %s118, 0
    %s121 = sadd.s32 %s120, 1
    %s122 = scalar_select %p119, %s120, %s121
    %p125 = pneg %p119
    %p126 = scmp.eq.s32.totalorder %s11, 1
    %p127 = por %p125, %p126
    %p128 = scmp.ne.s32.totalorder %s120, %s123
    %p129 = scmp.eq.s32.totalorder %s11, 0
    %p130 = por %p128, %p129
    %p131 = scmp.ne.s32.totalorder %s120, %s123
    %p132 = scmp.eq.s32.totalorder %s16, 1
    %p133 = por %p131, %p132
    %p134 = scmp.ne.s32.totalorder %s123, %s124
    %p135 = scmp.eq.s32.totalorder %s16, 0
    %p136 = por %p134, %p135
    %p137 = scmp.ne.s32.totalorder %s123, %s124
    %p138 = scmp.eq.s32.totalorder %s17, 1
    %p139 = por %p137, %p138
    %p141 = scmp.ne.s32.totalorder %s124, %s140
    %p142 = scmp.eq.s32.totalorder %s17, 0
    %p143 = por %p141, %p142
    %s144 = ssub.s32 %s11, %s18
    %p145 = scmp.eq.s32.totalorder %s144, 0
    %s147 = sadd.s32 %s146, 1
    %s148 = scalar_select %p145, %s146, %s147
    %p151 = pneg %p145
    %p152 = scmp.eq.s32.totalorder %s11, 1
    %p153 = por %p151, %p152
    %p154 = scmp.ne.s32.totalorder %s146, %s149
    %p155 = scmp.eq.s32.totalorder %s11, 0
    %p156 = por %p154, %p155
    %p157 = scmp.ne.s32.totalorder %s146, %s149
    %p158 = scmp.eq.s32.totalorder %s16, 1
    %p159 = por %p157, %p158
    %p160 = scmp.ne.s32.totalorder %s149, %s150
    %p161 = scmp.eq.s32.totalorder %s16, 0
    %p162 = por %p160, %p161
    %p163 = scmp.ne.s32.totalorder %s149, %s150
    %p164 = scmp.eq.s32.totalorder %s17, 1
    %p165 = por %p163, %p164
    %p167 = scmp.ne.s32.totalorder %s150, %s166
    %p168 = scmp.eq.s32.totalorder %s17, 0
    %p169 = por %p167, %p168
    %p170 = scmp.le.s32.totalorder 1, %s11
    %p171 = scmp.lt.s32.totalorder %s11, 3
    %p172 = pnand %p170, %p171
    %p173 = pneg %p172
    // Predicated region
    $region9: #{gru_crf_forward.3} parent=5 // pred_check
      _
    $region10: #{gru_crf_forward.3} parent=5 // pred_check_branch
      %175 = sbr.rel (%p172) target = $region12
    $region11: #{gru_crf_forward.3} parent=5 // pred_region
      %s176 = ssub.s32 %s11, 1
      // Predicated region
      $region13: #{gru_crf_forward.3} parent=11 // pred_check
        %p177 = pneg %p32
      $region14: #{gru_crf_forward.3} parent=11 // pred_check_branch
        %179 = sbr.rel (%p177) target = $region16
      $region15: #{gru_crf_forward.3} parent=11 // pred_region
        _
      $region16: #{gru_crf_forward.3} parent=11 // pred_fallthru
        _
    $region12: #{gru_crf_forward.3} parent=5 // pred_fallthru
      _
    %p180 = scmp.lt.s32.totalorder %s11, 2
    // Predicated region
    $region17: #{gru_crf_forward.3} parent=5 // pred_check
      %p181 = pneg %p180
    $region18: #{gru_crf_forward.3} parent=5 // pred_check_branch
      %183 = sbr.rel (%p181) target = $region20
    $region19: #{gru_crf_forward.3} parent=5 // pred_region
      // Predicated region
      $region21: #{gru_crf_forward.3} parent=19 // pred_check
        %p184 = pneg %p52
      $region22: #{gru_crf_forward.3} parent=19 // pred_check_branch
        %186 = sbr.rel (%p184) target = $region24
      $region23: #{gru_crf_forward.3} parent=19 // pred_region
        %p187 = scmp.lt.s32.totalorder %s11, 1
        %s188 = scalar_select %p187, %s11, 1
        %s189 = smul.addr %s188, 38
        %s190 = smul.addr %s189, 8
        %s191 = scalar_lea.vmem %s1, %s190
      $region24: #{gru_crf_forward.3} parent=19 // pred_fallthru
        _
      // Predicated region
      $region25: #{gru_crf_forward.3} parent=19 // pred_check
        %p192 = pneg %p78
      $region26: #{gru_crf_forward.3} parent=19 // pred_check_branch
        %194 = sbr.rel (%p192) target = $region28
      $region27: #{gru_crf_forward.3} parent=19 // pred_region
        %p195 = scmp.lt.s32.totalorder %s11, 1
        %s196 = scalar_select %p195, %s11, 1
        %s197 = smul.addr %s196, 2
        %s198 = smul.addr %s197, 8
        %s199 = scalar_lea.vmem %s2, %s198
      $region28: #{gru_crf_forward.3} parent=19 // pred_fallthru
        _
      // Predicated region
      $region29: #{gru_crf_forward.3} parent=19 // pred_check
        %p200 = pneg %p104
      $region30: #{gru_crf_forward.3} parent=19 // pred_check_branch
        %202 = sbr.rel (%p200) target = $region32
      $region31: #{gru_crf_forward.3} parent=19 // pred_region
        %p203 = scmp.lt.s32.totalorder %s11, 1
        %s204 = scalar_select %p203, %s11, 1
        %s205 = scalar_lea.vmem %s3, %s204
      $region32: #{gru_crf_forward.3} parent=19 // pred_fallthru
        _
      // Predicated region
      $region33: #{gru_crf_forward.3} parent=19 // pred_check
        %p206 = pneg %p130
      $region34: #{gru_crf_forward.3} parent=19 // pred_check_branch
        %208 = sbr.rel (%p206) target = $region36
      $region35: #{gru_crf_forward.3} parent=19 // pred_region
        %p209 = scmp.lt.s32.totalorder %s11, 1
        %s210 = scalar_select %p209, %s11, 1
        %s211 = scalar_lea.vmem %s4, %s210
      $region36: #{gru_crf_forward.3} parent=19 // pred_fallthru
        _
    $region20: #{gru_crf_forward.3} parent=5 // pred_fallthru
      _
    %p212 = scmp.le.s32.totalorder 1, %s11
    %p213 = scmp.lt.s32.totalorder %s11, 3
    %p214 = pnand %p212, %p213
    %p215 = pneg %p214
    // Predicated region
    $region37: #{gru_crf_forward.3} parent=5 // pred_check
      _
    $region38: #{gru_crf_forward.3} parent=5 // pred_check_branch
      %217 = sbr.rel (%p214) target = $region40
    $region39: #{gru_crf_forward.3} parent=5 // pred_region
      %s218 = ssub.s32 %s11, 1
      %p219 = pneg %p32
      %p220 = pneg %p29
      %p221 = scmp.lt.s32.totalorder %s16, 1
      %s222 = scalar_select %p221, %s16, 1
      %s223 = smul.addr %s222, 38
      %s224 = smul.addr %s223, 8
      %s225 = scalar_lea.vmem %s1, %s224
      %p226 = pneg %p58
      %p227 = pneg %p55
      %p228 = scmp.lt.s32.totalorder %s16, 1
      %s229 = scalar_select %p228, %s16, 1
      %s230 = smul.addr %s229, 2
      %s231 = smul.addr %s230, 8
      %s232 = scalar_lea.vmem %s2, %s231
      %p233 = pneg %p84
      %p234 = pneg %p81
      %p235 = scmp.lt.s32.totalorder %s16, 1
      %s236 = scalar_select %p235, %s16, 1
      %s237 = scalar_lea.vmem %s3, %s236
      %p238 = pneg %p110
      %p239 = pneg %p107
      %p240 = scmp.lt.s32.totalorder %s16, 1
      %s241 = scalar_select %p240, %s16, 1
      %s242 = scalar_lea.vmem %s4, %s241
      %p243 = pneg %p136
      %p244 = pneg %p133
      %p245 = pneg %p162
      %p246 = pneg %p159
      %p247 = scmp.lt.s32.totalorder %s16, 1
      %s248 = scalar_select %p247, %s16, 1
      %s249 = smul.addr %s248, 8
      %s250 = smul.addr %s249, 2
      %s251 = scalar_lea.vmem %s5, %s250
      %p252 = scmp.lt.s32.totalorder %s16, 1
      %s253 = scalar_select %p252, %s16, 1
      %s254 = smul.addr %s253, 38
      %s255 = smul.addr %s254, 8
      %s256 = scalar_lea.vmem %s1, %s255
      %p257 = scmp.lt.s32.totalorder %s16, 1
      %s258 = scalar_select %p257, %s16, 1
      %s259 = smul.addr %s258, 2
      %s260 = smul.addr %s259, 8
      %s261 = scalar_lea.vmem %s2, %s260
      %p262 = scmp.lt.s32.totalorder %s16, 1
      %s263 = scalar_select %p262, %s16, 1
      %s264 = scalar_lea.vmem %s3, %s263
      %p265 = scmp.lt.s32.totalorder %s16, 1
      %s266 = scalar_select %p265, %s16, 1
      %s267 = scalar_lea.vmem %s4, %s266
      %p268 = scmp.lt.s32.totalorder %s16, 1
      %s269 = scalar_select %p268, %s16, 1
      %s270 = smul.addr %s269, 8
      %s271 = smul.addr %s270, 2
      %s272 = scalar_lea.vmem %s5, %s271
      %v274 = vld [vmem:[%s256] sm:$0xff]
      %v275 = vld [vmem:[%s256 + $0x8] sm:$0xff]
      %v276 = vld [vmem:[%s256 + $0x10] sm:$0xff]
      %v277 = vld [vmem:[%s256 + $0x18] sm:$0xff]
      %v278 = vld [vmem:[%s256 + $0x20] sm:$0xff]
      %v279 = vld [vmem:[%s256 + $0x28] sm:$0xff]
      %v280 = vld [vmem:[%s256 + $0x30] sm:$0xff]
      %v281 = vld [vmem:[%s256 + $0x38] sm:$0xff]
      %v282 = vld [vmem:[%s256 + $0x40] sm:$0xff]
      %v283 = vld [vmem:[%s256 + $0x48] sm:$0xff]
      %v284 = vld [vmem:[%s256 + $0x50] sm:$0xff]
      %v285 = vld [vmem:[%s256 + $0x58] sm:$0xff]
      %v286 = vld [vmem:[%s256 + $0x60] sm:$0xff]
      %v287 = vld [vmem:[%s256 + $0x68] sm:$0xff]
      %v288 = vld [vmem:[%s256 + $0x70] sm:$0xff]
      %v289 = vld [vmem:[%s256 + $0x78] sm:$0xff]
      %v290 = vld [vmem:[%s256 + $0x80] sm:$0xff]
      %v291 = vld [vmem:[%s256 + $0x88] sm:$0xff]
      %v292 = vld [vmem:[%s256 + $0x90] sm:$0xff]
      %v293 = vld [vmem:[%s256 + $0x98] sm:$0xff]
      %v294 = vld [vmem:[%s256 + $0xa0] sm:$0xff]
      %v295 = vld [vmem:[%s256 + $0xa8] sm:$0xff]
      %v296 = vld [vmem:[%s256 + $0xb0] sm:$0xff]
      %v297 = vld [vmem:[%s256 + $0xb8] sm:$0xff]
      %v298 = vld [vmem:[%s256 + $0xc0] sm:$0xff]
      %v299 = vld [vmem:[%s256 + $0xc8] sm:$0xff]
      %v300 = vld [vmem:[%s256 + $0xd0] sm:$0xff]
      %v301 = vld [vmem:[%s256 + $0xd8] sm:$0xff]
      %v302 = vld [vmem:[%s256 + $0xe0] sm:$0xff]
      %v303 = vld [vmem:[%s256 + $0xe8] sm:$0xff]
      %v304 = vld [vmem:[%s256 + $0xf0] sm:$0xff]
      %v305 = vld [vmem:[%s256 + $0xf8] sm:$0xff]
      %v306 = vld [vmem:[%s256 + $0x100] sm:$0xff]
      %v307 = vld [vmem:[%s256 + $0x108] sm:$0xff]
      %v308 = vld [vmem:[%s256 + $0x110] sm:$0xff]
      %v309 = vld [vmem:[%s256 + $0x118] sm:$0xff]
      %v310 = vld [vmem:[%s256 + $0x120] sm:$0xff]
      %v311 = vld [vmem:[%s256 + $0x128] sm:$0xf]
      %v312 = vpack.c.bf16 %v275, %v274
      %v313 = vpack.c.bf16 %v277, %v276
      %v314 = vpack.c.bf16 %v279, %v278
      %v315 = vpack.c.bf16 %v281, %v280
      %v316 = vpack.c.bf16 %v283, %v282
      %v317 = vpack.c.bf16 %v285, %v284
      %v318 = vpack.c.bf16 %v287, %v286
      %v319 = vpack.c.bf16 %v289, %v288
      %v320 = vpack.c.bf16 %v291, %v290
      %v321 = vpack.c.bf16 %v293, %v292
      %v322 = vpack.c.bf16 %v295, %v294
      %v323 = vpack.c.bf16 %v297, %v296
      %v324 = vpack.c.bf16 %v299, %v298
      %v325 = vpack.c.bf16 %v301, %v300
      %v326 = vpack.c.bf16 %v303, %v302
      %v327 = vpack.c.bf16 %v305, %v304
      %v328 = vpack.c.bf16 %v307, %v306
      %v329 = vpack.c.bf16 %v309, %v308
      %v330 = vpack.c.bf16 %v311, %v310
      %v331 = vld [vmem:[%s0] sm:$0x3f]
      %v332 = vld [vmem:[%s0 + $0x6] sm:$0x3f]
      %v333 = vld [vmem:[%s0 + $0xc] sm:$0x3f]
      %v334 = vld [vmem:[%s0 + $0x12] sm:$0x3f]
      %v335 = vld [vmem:[%s0 + $0x18] sm:$0x3f]
      %v336 = vld [vmem:[%s0 + $0x1e] sm:$0x3f]
      %v337 = vld [vmem:[%s0 + $0x24] sm:$0x3f]
      %v338 = vld [vmem:[%s0 + $0x2a] sm:$0x3f]
      %v347 = vcombine.low %v331, %v332
      %v348 = vcombine.high %v331, %v332
      %v349 = vcombine.low %v333, %v334
      %v350 = vcombine.high %v333, %v334
      %v352 = vunpack.c.l.s4 1983009808
      %v353 = vunpack.c.0.s8 %v352
      %v354 = vlaneseq
      %v355 = vshrl.u32 %v354, 7
      %v356 = vsub.s32 %v353, %v355
      %v357 = vrot.slane %v347, %v356
      %v359 = vunpack.c.l.s4 1983009808
      %v360 = vunpack.c.0.s8 %v359
      %v361 = vlaneseq
      %v362 = vshrl.u32 %v361, 7
      %v363 = vsub.s32 %v360, %v362
      %v364 = vrot.slane %v348, %v363
      %v366 = vunpack.c.l.s4 1983009808
      %v367 = vunpack.c.0.s8 %v366
      %v368 = vlaneseq
      %v369 = vshrl.u32 %v368, 7
      %v370 = vsub.s32 %v367, %v369
      %v371 = vrot.slane %v349, %v370
      %v373 = vunpack.c.l.s4 1983009808
      %v374 = vunpack.c.0.s8 %v373
      %v375 = vlaneseq
      %v376 = vshrl.u32 %v375, 7
      %v377 = vsub.s32 %v374, %v376
      %v378 = vrot.slane %v350, %v377
      %v379 = vcombine.low %v357, %v371
      %v380 = vcombine.high %v357, %v371
      %v381 = vcombine.low %v364, %v378
      %v382 = vcombine.low %v335, %v336
      %v383 = vcombine.high %v335, %v336
      %v384 = vcombine.low %v337, %v338
      %v385 = vcombine.high %v337, %v338
      %v387 = vunpack.c.l.s4 1983009808
      %v388 = vunpack.c.0.s8 %v387
      %v389 = vlaneseq
      %v390 = vshrl.u32 %v389, 7
      %v391 = vsub.s32 %v388, %v390
      %v392 = vrot.slane %v382, %v391
      %v394 = vunpack.c.l.s4 1983009808
      %v395 = vunpack.c.0.s8 %v394
      %v396 = vlaneseq
      %v397 = vshrl.u32 %v396, 7
      %v398 = vsub.s32 %v395, %v397
      %v399 = vrot.slane %v383, %v398
      %v401 = vunpack.c.l.s4 1983009808
      %v402 = vunpack.c.0.s8 %v401
      %v403 = vlaneseq
      %v404 = vshrl.u32 %v403, 7
      %v405 = vsub.s32 %v402, %v404
      %v406 = vrot.slane %v384, %v405
      %v408 = vunpack.c.l.s4 1983009808
      %v409 = vunpack.c.0.s8 %v408
      %v410 = vlaneseq
      %v411 = vshrl.u32 %v410, 7
      %v412 = vsub.s32 %v409, %v411
      %v413 = vrot.slane %v385, %v412
      %v414 = vcombine.low %v392, %v406
      %v415 = vcombine.high %v392, %v406
      %v416 = vcombine.low %v399, %v413
      %v423 = vpack.c.bf16 %v414, %v379
      %v424 = vpack.c.bf16 %v415, %v380
      %v425 = vpack.c.bf16 %v416, %v381
      %v426 = vld [vmem:[%s264] sm:$0x1]
      %v428 = vlaneseq
      %v429 = vshrl.u32 %v428, 7
      %v430 = vsub.s32 0, %v429
      %v431 = vrot.slane %v426, %v430
      %vm433 = vcmask 359424
      %v435 = vsel %vm433, %v425, 0
      %vm437 = vcmask 1045504
      %v439 = vsel %vm437, %v330, 0
      %441 = vmatprep.subr.bf16.mxu0 0
      %442 = vmatpush1.bf16.msra.mxu0 %v312
      %443 = vmatprep.subr.bf16.mxu0 0
      %444 = vmatpush1.bf16.msra.mxu0 %v313
      %445 = vmatprep.subr.bf16.mxu0 0
      %446 = vmatpush1.bf16.msra.mxu0 %v314
      %447 = vmatprep.subr.bf16.mxu0 0
      %448 = vmatpush1.bf16.msra.mxu0 %v315
      %449 = vmatprep.subr.bf16.mxu0 0
      %450 = vmatpush1.bf16.msra.mxu0 %v316
      %451 = vmatprep.subr.bf16.mxu0 0
      %452 = vmatpush1.bf16.msra.mxu0 %v317
      %453 = vmatprep.subr.bf16.mxu0 0
      %454 = vmatpush1.bf16.msra.mxu0 %v318
      %455 = vmatprep.subr.bf16.mxu0 0
      %456 = vmatpush1.bf16.msra.mxu0 %v319
      %457 = vmatprep.subr.bf16.mxu0 0
      %458 = vmatpush1.bf16.msra.mxu0 %v320
      %459 = vmatprep.subr.bf16.mxu0 0
      %460 = vmatpush1.bf16.msra.mxu0 %v321
      %461 = vmatprep.subr.bf16.mxu0 0
      %462 = vmatpush1.bf16.msra.mxu0 %v322
      %463 = vmatprep.subr.bf16.mxu0 0
      %464 = vmatpush1.bf16.msra.mxu0 %v323
      %465 = vmatprep.subr.bf16.mxu0 0
      %466 = vmatpush1.bf16.msra.mxu0 %v324
      %467 = vmatprep.subr.bf16.mxu0 0
      %468 = vmatpush1.bf16.msra.mxu0 %v325
      %469 = vmatprep.subr.bf16.mxu0 0
      %470 = vmatpush1.bf16.msra.mxu0 %v326
      %471 = vmatprep.subr.bf16.mxu0 0
      %472 = vmatpush1.bf16.msra.mxu0 %v327
      %473 = vmatprep.mubr.bf16.mxu0 %v424
      %474 = vmatmul.mubr.bf16.gmra.mrb[0].mxu0 %v423
      %v475 = vpop.f32.mrb[0].mxu0
      %v476 = vadd.f32 %v431, %v475
      %v477 = vpop.f32.mrb[0].mxu0
      %v478 = vpop.f32.mrb[0].mxu0
      %v479 = vadd.f32 %v431, %v478
      %v480 = vpop.f32.mrb[0].mxu0
      %481 = vdwg.mxu0
      %482 = vmatprep.subr.bf16.mxu0 0
      %483 = vmatpush1.bf16.msra.mxu0 %v328
      %484 = vmatprep.subr.bf16.mxu0 0
      %485 = vmatpush1.bf16.msra.mxu0 %v329
      %486 = vmatprep.subr.bf16.mxu0 0
      %487 = vmatpush1.bf16.msra.mxu0 %v439
      %488 = vmatprep.subr.bf16.mxu0 0
      %489 = vmatpush1.bf16.msra.mxu0 0
      %490 = vmatprep.subr.bf16.mxu0 0
      %491 = vmatpush1.bf16.msra.mxu0 0
      %492 = vmatprep.subr.bf16.mxu0 0
      %493 = vmatpush1.bf16.msra.mxu0 0
      %494 = vmatprep.subr.bf16.mxu0 0
      %495 = vmatpush1.bf16.msra.mxu0 0
      %496 = vmatprep.subr.bf16.mxu0 0
      %497 = vmatpush1.bf16.msra.mxu0 0
      %498 = vmatprep.subr.bf16.mxu0 0
      %499 = vmatpush1.bf16.msra.mxu0 0
      %500 = vmatprep.subr.bf16.mxu0 0
      %501 = vmatpush1.bf16.msra.mxu0 0
      %502 = vmatprep.subr.bf16.mxu0 0
      %503 = vmatpush1.bf16.msra.mxu0 0
      %504 = vmatprep.subr.bf16.mxu0 0
      %505 = vmatpush1.bf16.msra.mxu0 0
      %506 = vmatprep.subr.bf16.mxu0 0
      %507 = vmatpush1.bf16.msra.mxu0 0
      %508 = vmatprep.subr.bf16.mxu0 0
      %509 = vmatpush1.bf16.msra.mxu0 0
      %510 = vmatprep.subr.bf16.mxu0 0
      %511 = vmatpush1.bf16.msra.mxu0 0
      %512 = vmatprep.subr.bf16.mxu0 0
      %513 = vmatpush1.bf16.msra.mxu0 0
      %514 = vmatprep.mubr.bf16.mxu0 0
      %515 = vmatmul.mubr.bf16.gmra.mrb[0].mxu0 %v435
      %v516 = vpop.f32.mrb[0].mxu0
      %v517 = vadd.f32 %v476, %v516
      %v518 = vpop.f32.mrb[0].mxu0
      %v519 = vpop.f32.mrb[0].mxu0
      %v520 = vadd.f32 %v479, %v519
      %v521 = vpop.f32.mrb[0].mxu0
      %522 = vdwg.mxu0
      %v525 = vcombine.high %v517, %v517
      %v527 = vunpack.c.l.s4 1983009808
      %v528 = vunpack.c.0.s8 %v527
      %v529 = vlaneseq
      %v530 = vshrl.u32 %v529, 7
      %v531 = vsub.s32 %v528, %v530
      %v532 = vrot.slane %v517, %v531
      %v534 = vunpack.c.l.s4 1983009808
      %v535 = vunpack.c.0.s8 %v534
      %v536 = vlaneseq
      %v537 = vshrl.u32 %v536, 7
      %v538 = vsub.s32 %v535, %v537
      %v539 = vrot.slane %v525, %v538
      %v540 = vcombine.high %v532, %v532
      %v541 = vcombine.high %v539, %v539
      %v542 = vcombine.high %v520, %v520
      %v544 = vunpack.c.l.s4 1983009808
      %v545 = vunpack.c.0.s8 %v544
      %v546 = vlaneseq
      %v547 = vshrl.u32 %v546, 7
      %v548 = vsub.s32 %v545, %v547
      %v549 = vrot.slane %v520, %v548
      %v551 = vunpack.c.l.s4 1983009808
      %v552 = vunpack.c.0.s8 %v551
      %v553 = vlaneseq
      %v554 = vshrl.u32 %v553, 7
      %v555 = vsub.s32 %v552, %v554
      %v556 = vrot.slane %v542, %v555
      %v557 = vcombine.high %v549, %v549
      %v558 = vcombine.high %v556, %v556
      %vm567 = vcmask 386048
      %568 = vst.msk [vmem:[#allocation2] sm:$0x3] %vm567, %v532
      %569 = vst.msk [vmem:[#allocation2 + $0x2] sm:$0x3] %vm567, %v540
      %570 = vst.msk [vmem:[#allocation2 + $0x4] sm:$0x3] %vm567, %v539
      %571 = vst.msk [vmem:[#allocation2 + $0x6] sm:$0x3] %vm567, %v541
      %572 = vst.msk [vmem:[#allocation2 + $0x8] sm:$0x3] %vm567, %v549
      %573 = vst.msk [vmem:[#allocation2 + $0xa] sm:$0x3] %vm567, %v557
      %574 = vst.msk [vmem:[#allocation2 + $0xc] sm:$0x3] %vm567, %v556
      %575 = vst.msk [vmem:[#allocation2 + $0xe] sm:$0x3] %vm567, %v558
      %v576 = vld [vmem:[%s261] sm:$0xff]
      %v577 = vld [vmem:[%s261 + $0x8] sm:$0xff]
      %v578 = vpack.c.bf16 %v577, %v576
      %v579 = vld [vmem:[%s267] sm:$0x1]
      %p580 = scmp.eq.s32.totalorder %s16, 0
      %s581 = scalar_select %p580, 0, 7
      %s582 = smul.u32 %s581, 2
      %s583 = scalar_lea.vmem [#allocation2], %s582
      %v584 = vld [vmem:[%s583] sm:$0x3]
      %v586 = vlaneseq
      %v587 = vshrl.u32 %v586, 7
      %v588 = vsub.s32 0, %v587
      %v589 = vrot.slane %v579, %v588
      %vm591 = vcmask 130048
      %v593 = vsel %vm591, 0, 0
      %595 = vmatprep.subr.bf16.mxu0 0
      %596 = vmatpush1.bf16.msra.mxu0 %v578
      %597 = vmatprep.subr.bf16.mxu0 0
      %598 = vmatpush1.bf16.msra.mxu0 0
      %599 = vmatprep.subr.bf16.mxu0 0
      %600 = vmatpush1.bf16.msra.mxu0 0
      %601 = vmatprep.subr.bf16.mxu0 0
      %602 = vmatpush1.bf16.msra.mxu0 0
      %603 = vmatprep.subr.bf16.mxu0 0
      %604 = vmatpush1.bf16.msra.mxu0 0
      %605 = vmatprep.subr.bf16.mxu0 0
      %606 = vmatpush1.bf16.msra.mxu0 0
      %607 = vmatprep.subr.bf16.mxu0 0
      %608 = vmatpush1.bf16.msra.mxu0 0
      %609 = vmatprep.subr.bf16.mxu0 0
      %610 = vmatpush1.bf16.msra.mxu0 0
      %611 = vmatprep.subr.bf16.mxu0 0
      %612 = vmatpush1.bf16.msra.mxu0 0
      %613 = vmatprep.subr.bf16.mxu0 0
      %614 = vmatpush1.bf16.msra.mxu0 0
      %615 = vmatprep.subr.bf16.mxu0 0
      %616 = vmatpush1.bf16.msra.mxu0 0
      %617 = vmatprep.subr.bf16.mxu0 0
      %618 = vmatpush1.bf16.msra.mxu0 0
      %619 = vmatprep.subr.bf16.mxu0 0
      %620 = vmatpush1.bf16.msra.mxu0 0
      %621 = vmatprep.subr.bf16.mxu0 0
      %622 = vmatpush1.bf16.msra.mxu0 0
      %623 = vmatprep.subr.bf16.mxu0 0
      %624 = vmatpush1.bf16.msra.mxu0 0
      %625 = vmatprep.subr.bf16.mxu0 0
      %626 = vmatpush1.bf16.msra.mxu0 0
      %627 = vmatprep.mubr.bf16.mxu0 0
      %628 = vmatmul.mubr.bf16.gmra.mrb[0].mxu0 %v593
      %v629 = vpop.f32.mrb[0].mxu0
      %v630 = vadd.f32 %v589, %v629
      %v631 = vpop.f32.mrb[0].mxu0
      %v632 = vpop.f32.mrb[0].mxu0
      %v633 = vpop.f32.mrb[0].mxu0
      %634 = vdwg.mxu0
      %v635 = vadd.f32 %v584, %v630
      %v636 = vxor.u32 %v635, 2147483648
      %v637 = vmul.f32 %v636, 1.442695
      %v638 = vpow.pop %v637
      %v639 = vadd.f32 %v638, 1.0
      %v640 = vrcp.pop %v639
      %v641 = vmul.f32 1.0, %v640
      %643 = vrot.lane.b32.xlu0 %v630, 96
      %v644 = vpop.permute.xlu0 %643
      %v646 = vmul.f32 %v641, %v644
      %648 = vrot.lane.b32.xlu0 %v646, 32
      %v649 = vpop.permute.xlu0 %648
      %v651 = vadd.f32 %v584, %v649
      %v652 = vtanh.pop %v651
      %v653 = vsub.f32 1.0, %v641
      %655 = vrot.lane.b32.xlu0 %v652, 112
      %v656 = vpop.permute.xlu0 %655
      %v658 = vmul.f32 %v653, %v656
      %v659 = vmul.f32 %v641, 0.0
      %v660 = vadd.f32 %v658, %v659
      %662 = vrot.lane.b32.xlu0 %v660, 112
      %v663 = vpop.permute.xlu0 %662
      %s665 = scalar_lea.vmem %s272, %s582
      %vm666 = vcmask 123904
      %667 = vst.msk [vmem:[%s665] sm:$0x3] %vm666, %v663
      %s668 = scalar_select %p580, 1, 6
      %s669 = smul.u32 %s668, 2
      %s670 = scalar_lea.vmem [#allocation2], %s669
      %v671 = vld [vmem:[%s670] sm:$0x3]
      %v672 = vpack.c.bf16 %v660, %v660
      %674 = vrot.lane.b32.xlu0 %v672, 112
      %v675 = vpop.permute.xlu0 %674
      %v677 = vsel %vm591, %v675, 0
      %679 = vmatprep.subr.bf16.mxu0 0
      %680 = vmatpush1.bf16.msra.mxu0 %v578
      %681 = vmatprep.subr.bf16.mxu0 0
      %682 = vmatpush1.bf16.msra.mxu0 0
      %683 = vmatprep.subr.bf16.mxu0 0
      %684 = vmatpush1.bf16.msra.mxu0 0
      %685 = vmatprep.subr.bf16.mxu0 0
      %686 = vmatpush1.bf16.msra.mxu0 0
      %687 = vmatprep.subr.bf16.mxu0 0
      %688 = vmatpush1.bf16.msra.mxu0 0
      %689 = vmatprep.subr.bf16.mxu0 0
      %690 = vmatpush1.bf16.msra.mxu0 0
      %691 = vmatprep.subr.bf16.mxu0 0
      %692 = vmatpush1.bf16.msra.mxu0 0
      %693 = vmatprep.subr.bf16.mxu0 0
      %694 = vmatpush1.bf16.msra.mxu0 0
      %695 = vmatprep.subr.bf16.mxu0 0
      %696 = vmatpush1.bf16.msra.mxu0 0
      %697 = vmatprep.subr.bf16.mxu0 0
      %698 = vmatpush1.bf16.msra.mxu0 0
      %699 = vmatprep.subr.bf16.mxu0 0
      %700 = vmatpush1.bf16.msra.mxu0 0
      %701 = vmatprep.subr.bf16.mxu0 0
      %702 = vmatpush1.bf16.msra.mxu0 0
      %703 = vmatprep.subr.bf16.mxu0 0
      %704 = vmatpush1.bf16.msra.mxu0 0
      %705 = vmatprep.subr.bf16.mxu0 0
      %706 = vmatpush1.bf16.msra.mxu0 0
      %707 = vmatprep.subr.bf16.mxu0 0
      %708 = vmatpush1.bf16.msra.mxu0 0
      %709 = vmatprep.subr.bf16.mxu0 0
      %710 = vmatpush1.bf16.msra.mxu0 0
      %711 = vmatprep.mubr.bf16.mxu0 0
      %712 = vmatmul.mubr.bf16.gmra.mrb[0].mxu0 %v677
      %v713 = vpop.f32.mrb[0].mxu0
      %v714 = vadd.f32 %v589, %v713
      %v715 = vpop.f32.mrb[0].mxu0
      %v716 = vpop.f32.mrb[0].mxu0
      %v717 = vpop.f32.mrb[0].mxu0
      %718 = vdwg.mxu0
      %v719 = vadd.f32 %v671, %v714
      %v720 = vxor.u32 %v719, 2147483648
      %v721 = vmul.f32 %v720, 1.442695
      %v722 = vpow.pop %v721
      %v723 = vadd.f32 %v722, 1.0
      %v724 = vrcp.pop %v723
      %v725 = vmul.f32 1.0, %v724
      %727 = vrot.lane.b32.xlu0 %v714, 96
      %v728 = vpop.permute.xlu0 %727
      %v730 = vmul.f32 %v725, %v728
      %732 = vrot.lane.b32.xlu0 %v730, 32
      %v733 = vpop.permute.xlu0 %732
      %v735 = vadd.f32 %v671, %v733
      %v736 = vtanh.pop %v735
      %v737 = vsub.f32 1.0, %v725
      %739 = vrot.lane.b32.xlu0 %v736, 112
      %v740 = vpop.permute.xlu0 %739
      %v742 = vmul.f32 %v737, %v740
      %v743 = vmul.f32 %v725, %v660
      %v744 = vadd.f32 %v742, %v743
      %746 = vrot.lane.b32.xlu0 %v744, 112
      %v747 = vpop.permute.xlu0 %746
      %s749 = scalar_lea.vmem %s272, %s669
      %750 = vst.msk [vmem:[%s749] sm:$0x3] %vm666, %v747
      %s751 = scalar_select %p580, 2, 5
      %s752 = smul.u32 %s751, 2
      %s753 = scalar_lea.vmem [#allocation2], %s752
      %v754 = vld [vmem:[%s753] sm:$0x3]
      %v755 = vpack.c.bf16 %v744, %v744
      %757 = vrot.lane.b32.xlu0 %v755, 112
      %v758 = vpop.permute.xlu0 %757
      %v760 = vsel %vm591, %v758, 0
      %762 = vmatprep.subr.bf16.mxu0 0
      %763 = vmatpush1.bf16.msra.mxu0 %v578
      %764 = vmatprep.subr.bf16.mxu0 0
      %765 = vmatpush1.bf16.msra.mxu0 0
      %766 = vmatprep.subr.bf16.mxu0 0
      %767 = vmatpush1.bf16.msra.mxu0 0
      %768 = vmatprep.subr.bf16.mxu0 0
      %769 = vmatpush1.bf16.msra.mxu0 0
      %770 = vmatprep.subr.bf16.mxu0 0
      %771 = vmatpush1.bf16.msra.mxu0 0
      %772 = vmatprep.subr.bf16.mxu0 0
      %773 = vmatpush1.bf16.msra.mxu0 0
      %774 = vmatprep.subr.bf16.mxu0 0
      %775 = vmatpush1.bf16.msra.mxu0 0
      %776 = vmatprep.subr.bf16.mxu0 0
      %777 = vmatpush1.bf16.msra.mxu0 0
      %778 = vmatprep.subr.bf16.mxu0 0
      %779 = vmatpush1.bf16.msra.mxu0 0
      %780 = vmatprep.subr.bf16.mxu0 0
      %781 = vmatpush1.bf16.msra.mxu0 0
      %782 = vmatprep.subr.bf16.mxu0 0
      %783 = vmatpush1.bf16.msra.mxu0 0
      %784 = vmatprep.subr.bf16.mxu0 0
      %785 = vmatpush1.bf16.msra.mxu0 0
      %786 = vmatprep.subr.bf16.mxu0 0
      %787 = vmatpush1.bf16.msra.mxu0 0
      %788 = vmatprep.subr.bf16.mxu0 0
      %789 = vmatpush1.bf16.msra.mxu0 0
      %790 = vmatprep.subr.bf16.mxu0 0
      %791 = vmatpush1.bf16.msra.mxu0 0
      %792 = vmatprep.subr.bf16.mxu0 0
      %793 = vmatpush1.bf16.msra.mxu0 0
      %794 = vmatprep.mubr.bf16.mxu0 0
      %795 = vmatmul.mubr.bf16.gmra.mrb[0].mxu0 %v760
      %v796 = vpop.f32.mrb[0].mxu0
      %v797 = vadd.f32 %v589, %v796
      %v798 = vpop.f32.mrb[0].mxu0
      %v799 = vpop.f32.mrb[0].mxu0
      %v800 = vpop.f32.mrb[0].mxu0
      %801 = vdwg.mxu0
      %v802 = vadd.f32 %v754, %v797
      %v803 = vxor.u32 %v802, 2147483648
      %v804 = vmul.f32 %v803, 1.442695
      %v805 = vpow.pop %v804
      %v806 = vadd.f32 %v805, 1.0
      %v807 = vrcp.pop %v806
      %v808 = vmul.f32 1.0, %v807
      %810 = vrot.lane.b32.xlu0 %v797, 96
      %v811 = vpop.permute.xlu0 %810
      %v813 = vmul.f32 %v808, %v811
      %815 = vrot.lane.b32.xlu0 %v813, 32
      %v816 = vpop.permute.xlu0 %815
      %v818 = vadd.f32 %v754, %v816
      %v819 = vtanh.pop %v818
      %v820 = vsub.f32 1.0, %v808
      %822 = vrot.lane.b32.xlu0 %v819, 112
      %v823 = vpop.permute.xlu0 %822
      %v825 = vmul.f32 %v820, %v823
      %v826 = vmul.f32 %v808, %v744
      %v827 = vadd.f32 %v825, %v826
      %829 = vrot.lane.b32.xlu0 %v827, 112
      %v830 = vpop.permute.xlu0 %829
      %s832 = scalar_lea.vmem %s272, %s752
      %833 = vst.msk [vmem:[%s832] sm:$0x3] %vm666, %v830
      %s834 = scalar_select %p580, 3, 4
      %s835 = smul.u32 %s834, 2
      %s836 = scalar_lea.vmem [#allocation2], %s835
      %v837 = vld [vmem:[%s836] sm:$0x3]
      %v838 = vpack.c.bf16 %v827, %v827
      %840 = vrot.lane.b32.xlu0 %v838, 112
      %v841 = vpop.permute.xlu0 %840
      %v843 = vsel %vm591, %v841, 0
      %845 = vmatprep.subr.bf16.mxu0 0
      %846 = vmatpush1.bf16.msra.mxu0 %v578
      %847 = vmatprep.subr.bf16.mxu0 0
      %848 = vmatpush1.bf16.msra.mxu0 0
      %849 = vmatprep.subr.bf16.mxu0 0
      %850 = vmatpush1.bf16.msra.mxu0 0
      %851 = vmatprep.subr.bf16.mxu0 0
      %852 = vmatpush1.bf16.msra.mxu0 0
      %853 = vmatprep.subr.bf16.mxu0 0
      %854 = vmatpush1.bf16.msra.mxu0 0
      %855 = vmatprep.subr.bf16.mxu0 0
      %856 = vmatpush1.bf16.msra.mxu0 0
      %857 = vmatprep.subr.bf16.mxu0 0
      %858 = vmatpush1.bf16.msra.mxu0 0
      %859 = vmatprep.subr.bf16.mxu0 0
      %860 = vmatpush1.bf16.msra.mxu0 0
      %861 = vmatprep.subr.bf16.mxu0 0
      %862 = vmatpush1.bf16.msra.mxu0 0
      %863 = vmatprep.subr.bf16.mxu0 0
      %864 = vmatpush1.bf16.msra.mxu0 0
      %865 = vmatprep.subr.bf16.mxu0 0
      %866 = vmatpush1.bf16.msra.mxu0 0
      %867 = vmatprep.subr.bf16.mxu0 0
      %868 = vmatpush1.bf16.msra.mxu0 0
      %869 = vmatprep.subr.bf16.mxu0 0
      %870 = vmatpush1.bf16.msra.mxu0 0
      %871 = vmatprep.subr.bf16.mxu0 0
      %872 = vmatpush1.bf16.msra.mxu0 0
      %873 = vmatprep.subr.bf16.mxu0 0
      %874 = vmatpush1.bf16.msra.mxu0 0
      %875 = vmatprep.subr.bf16.mxu0 0
      %876 = vmatpush1.bf16.msra.mxu0 0
      %877 = vmatprep.mubr.bf16.mxu0 0
      %878 = vmatmul.mubr.bf16.gmra.mrb[0].mxu0 %v843
      %v879 = vpop.f32.mrb[0].mxu0
      %v880 = vadd.f32 %v589, %v879
      %v881 = vpop.f32.mrb[0].mxu0
      %v882 = vpop.f32.mrb[0].mxu0
      %v883 = vpop.f32.mrb[0].mxu0
      %884 = vdwg.mxu0
      %v885 = vadd.f32 %v837, %v880
      %v886 = vxor.u32 %v885, 2147483648
      %v887 = vmul.f32 %v886, 1.442695
      %v888 = vpow.pop %v887
      %v889 = vadd.f32 %v888, 1.0
      %v890 = vrcp.pop %v889
      %v891 = vmul.f32 1.0, %v890
      %893 = vrot.lane.b32.xlu0 %v880, 96
      %v894 = vpop.permute.xlu0 %893
      %v896 = vmul.f32 %v891, %v894
      %898 = vrot.lane.b32.xlu0 %v896, 32
      %v899 = vpop.permute.xlu0 %898
      %v901 = vadd.f32 %v837, %v899
      %v902 = vtanh.pop %v901
      %v903 = vsub.f32 1.0, %v891
      %905 = vrot.lane.b32.xlu0 %v902, 112
      %v906 = vpop.permute.xlu0 %905
      %v908 = vmul.f32 %v903, %v906
      %v909 = vmul.f32 %v891, %v827
      %v910 = vadd.f32 %v908, %v909
      %912 = vrot.lane.b32.xlu0 %v910, 112
      %v913 = vpop.permute.xlu0 %912
      %s915 = scalar_lea.vmem %s272, %s835
      %916 = vst.msk [vmem:[%s915] sm:$0x3] %vm666, %v913
      %s917 = scalar_select %p580, 4, 3
      %s918 = smul.u32 %s917, 2
      %s919 = scalar_lea.vmem [#allocation2], %s918
      %v920 = vld [vmem:[%s919] sm:$0x3]
      %v921 = vpack.c.bf16 %v910, %v910
      %923 = vrot.lane.b32.xlu0 %v921, 112
      %v924 = vpop.permute.xlu0 %923
      %v926 = vsel %vm591, %v924, 0
      %928 = vmatprep.subr.bf16.mxu0 0
      %929 = vmatpush1.bf16.msra.mxu0 %v578
      %930 = vmatprep.subr.bf16.mxu0 0
      %931 = vmatpush1.bf16.msra.mxu0 0
      %932 = vmatprep.subr.bf16.mxu0 0
      %933 = vmatpush1.bf16.msra.mxu0 0
      %934 = vmatprep.subr.bf16.mxu0 0
      %935 = vmatpush1.bf16.msra.mxu0 0
      %936 = vmatprep.subr.bf16.mxu0 0
      %937 = vmatpush1.bf16.msra.mxu0 0
      %938 = vmatprep.subr.bf16.mxu0 0
      %939 = vmatpush1.bf16.msra.mxu0 0
      %940 = vmatprep.subr.bf16.mxu0 0
      %941 = vmatpush1.bf16.msra.mxu0 0
      %942 = vmatprep.subr.bf16.mxu0 0
      %943 = vmatpush1.bf16.msra.mxu0 0
      %944 = vmatprep.subr.bf16.mxu0 0
      %945 = vmatpush1.bf16.msra.mxu0 0
      %946 = vmatprep.subr.bf16.mxu0 0
      %947 = vmatpush1.bf16.msra.mxu0 0
      %948 = vmatprep.subr.bf16.mxu0 0
      %949 = vmatpush1.bf16.msra.mxu0 0
      %950 = vmatprep.subr.bf16.mxu0 0
      %951 = vmatpush1.bf16.msra.mxu0 0
      %952 = vmatprep.subr.bf16.mxu0 0
      %953 = vmatpush1.bf16.msra.mxu0 0
      %954 = vmatprep.subr.bf16.mxu0 0
      %955 = vmatpush1.bf16.msra.mxu0 0
      %956 = vmatprep.subr.bf16.mxu0 0
      %957 = vmatpush1.bf16.msra.mxu0 0
      %958 = vmatprep.subr.bf16.mxu0 0
      %959 = vmatpush1.bf16.msra.mxu0 0
      %960 = vmatprep.mubr.bf16.mxu0 0
      %961 = vmatmul.mubr.bf16.gmra.mrb[0].mxu0 %v926
      %v962 = vpop.f32.mrb[0].mxu0
      %v963 = vadd.f32 %v589, %v962
      %v964 = vpop.f32.mrb[0].mxu0
      %v965 = vpop.f32.mrb[0].mxu0
      %v966 = vpop.f32.mrb[0].mxu0
      %967 = vdwg.mxu0
      %v968 = vadd.f32 %v920, %v963
      %v969 = vxor.u32 %v968, 2147483648
      %v970 = vmul.f32 %v969, 1.442695
      %v971 = vpow.pop %v970
      %v972 = vadd.f32 %v971, 1.0
      %v973 = vrcp.pop %v972
      %v974 = vmul.f32 1.0, %v973
      %976 = vrot.lane.b32.xlu0 %v963, 96
      %v977 = vpop.permute.xlu0 %976
      %v979 = vmul.f32 %v974, %v977
      %981 = vrot.lane.b32.xlu0 %v979, 32
      %v982 = vpop.permute.xlu0 %981
      %v984 = vadd.f32 %v920, %v982
      %v985 = vtanh.pop %v984
      %v986 = vsub.f32 1.0, %v974
      %988 = vrot.lane.b32.xlu0 %v985, 112
      %v989 = vpop.permute.xlu0 %988
      %v991 = vmul.f32 %v986, %v989
      %v992 = vmul.f32 %v974, %v910
      %v993 = vadd.f32 %v991, %v992
      %995 = vrot.lane.b32.xlu0 %v993, 112
      %v996 = vpop.permute.xlu0 %995
      %s998 = scalar_lea.vmem %s272, %s918
      %999 = vst.msk [vmem:[%s998] sm:$0x3] %vm666, %v996
      %s1000 = scalar_select %p580, 5, 2
      %s1001 = smul.u32 %s1000, 2
      %s1002 = scalar_lea.vmem [#allocation2], %s1001
      %v1003 = vld [vmem:[%s1002] sm:$0x3]
      %v1004 = vpack.c.bf16 %v993, %v993
      %1006 = vrot.lane.b32.xlu0 %v1004, 112
      %v1007 = vpop.permute.xlu0 %1006
      %v1009 = vsel %vm591, %v1007, 0
      %1011 = vmatprep.subr.bf16.mxu0 0
      %1012 = vmatpush1.bf16.msra.mxu0 %v578
      %1013 = vmatprep.subr.bf16.mxu0 0
      %1014 = vmatpush1.bf16.msra.mxu0 0
      %1015 = vmatprep.subr.bf16.mxu0 0
      %1016 = vmatpush1.bf16.msra.mxu0 0
      %1017 = vmatprep.subr.bf16.mxu0 0
      %1018 = vmatpush1.bf16.msra.mxu0 0
      %1019 = vmatprep.subr.bf16.mxu0 0
      %1020 = vmatpush1.bf16.msra.mxu0 0
      %1021 = vmatprep.subr.bf16.mxu0 0
      %1022 = vmatpush1.bf16.msra.mxu0 0
      %1023 = vmatprep.subr.bf16.mxu0 0
      %1024 = vmatpush1.bf16.msra.mxu0 0
      %1025 = vmatprep.subr.bf16.mxu0 0
      %1026 = vmatpush1.bf16.msra.mxu0 0
      %1027 = vmatprep.subr.bf16.mxu0 0
      %1028 = vmatpush1.bf16.msra.mxu0 0
      %1029 = vmatprep.subr.bf16.mxu0 0
      %1030 = vmatpush1.bf16.msra.mxu0 0
      %1031 = vmatprep.subr.bf16.mxu0 0
      %1032 = vmatpush1.bf16.msra.mxu0 0
      %1033 = vmatprep.subr.bf16.mxu0 0
      %1034 = vmatpush1.bf16.msra.mxu0 0
      %1035 = vmatprep.subr.bf16.mxu0 0
      %1036 = vmatpush1.bf16.msra.mxu0 0
      %1037 = vmatprep.subr.bf16.mxu0 0
      %1038 = vmatpush1.bf16.msra.mxu0 0
      %1039 = vmatprep.subr.bf16.mxu0 0
      %1040 = vmatpush1.bf16.msra.mxu0 0
      %1041 = vmatprep.subr.bf16.mxu0 0
      %1042 = vmatpush1.bf16.msra.mxu0 0
      %1043 = vmatprep.mubr.bf16.mxu0 0
      %1044 = vmatmul.mubr.bf16.gmra.mrb[0].mxu0 %v1009
      %v1045 = vpop.f32.mrb[0].mxu0
      %v1046 = vadd.f32 %v589, %v1045
      %v1047 = vpop.f32.mrb[0].mxu0
      %v1048 = vpop.f32.mrb[0].mxu0
      %v1049 = vpop.f32.mrb[0].mxu0
      %1050 = vdwg.mxu0
      %v1051 = vadd.f32 %v1003, %v1046
      %v1052 = vxor.u32 %v1051, 2147483648
      %v1053 = vmul.f32 %v1052, 1.442695
      %v1054 = vpow.pop %v1053
      %v1055 = vadd.f32 %v1054, 1.0
      %v1056 = vrcp.pop %v1055
      %v1057 = vmul.f32 1.0, %v1056
      %1059 = vrot.lane.b32.xlu0 %v1046, 96
      %v1060 = vpop.permute.xlu0 %1059
      %v1062 = vmul.f32 %v1057, %v1060
      %1064 = vrot.lane.b32.xlu0 %v1062, 32
      %v1065 = vpop.permute.xlu0 %1064
      %v1067 = vadd.f32 %v1003, %v1065
      %v1068 = vtanh.pop %v1067
      %v1069 = vsub.f32 1.0, %v1057
      %1071 = vrot.lane.b32.xlu0 %v1068, 112
      %v1072 = vpop.permute.xlu0 %1071
      %v1074 = vmul.f32 %v1069, %v1072
      %v1075 = vmul.f32 %v1057, %v993
      %v1076 = vadd.f32 %v1074, %v1075
      %1078 = vrot.lane.b32.xlu0 %v1076, 112
      %v1079 = vpop.permute.xlu0 %1078
      %s1081 = scalar_lea.vmem %s272, %s1001
      %1082 = vst.msk [vmem:[%s1081] sm:$0x3] %vm666, %v1079
      %s1083 = scalar_select %p580, 6, 1
      %s1084 = smul.u32 %s1083, 2
      %s1085 = scalar_lea.vmem [#allocation2], %s1084
      %v1086 = vld [vmem:[%s1085] sm:$0x3]
      %v1087 = vpack.c.bf16 %v1076, %v1076
      %1089 = vrot.lane.b32.xlu0 %v1087, 112
      %v1090 = vpop.permute.xlu0 %1089
      %v1092 = vsel %vm591, %v1090, 0
      %1094 = vmatprep.subr.bf16.mxu0 0
      %1095 = vmatpush1.bf16.msra.mxu0 %v578
      %1096 = vmatprep.subr.bf16.mxu0 0
      %1097 = vmatpush1.bf16.msra.mxu0 0
      %1098 = vmatprep.subr.bf16.mxu0 0
      %1099 = vmatpush1.bf16.msra.mxu0 0
      %1100 = vmatprep.subr.bf16.mxu0 0
      %1101 = vmatpush1.bf16.msra.mxu0 0
      %1102 = vmatprep.subr.bf16.mxu0 0
      %1103 = vmatpush1.bf16.msra.mxu0 0
      %1104 = vmatprep.subr.bf16.mxu0 0
      %1105 = vmatpush1.bf16.msra.mxu0 0
      %1106 = vmatprep.subr.bf16.mxu0 0
      %1107 = vmatpush1.bf16.msra.mxu0 0
      %1108 = vmatprep.subr.bf16.mxu0 0
      %1109 = vmatpush1.bf16.msra.mxu0 0
      %1110 = vmatprep.subr.bf16.mxu0 0
      %1111 = vmatpush1.bf16.msra.mxu0 0
      %1112 = vmatprep.subr.bf16.mxu0 0
      %1113 = vmatpush1.bf16.msra.mxu0 0
      %1114 = vmatprep.subr.bf16.mxu0 0
      %1115 = vmatpush1.bf16.msra.mxu0 0
      %1116 = vmatprep.subr.bf16.mxu0 0
      %1117 = vmatpush1.bf16.msra.mxu0 0
      %1118 = vmatprep.subr.bf16.mxu0 0
      %1119 = vmatpush1.bf16.msra.mxu0 0
      %1120 = vmatprep.subr.bf16.mxu0 0
      %1121 = vmatpush1.bf16.msra.mxu0 0
      %1122 = vmatprep.subr.bf16.mxu0 0
      %1123 = vmatpush1.bf16.msra.mxu0 0
      %1124 = vmatprep.subr.bf16.mxu0 0
      %1125 = vmatpush1.bf16.msra.mxu0 0
      %1126 = vmatprep.mubr.bf16.mxu0 0
      %1127 = vmatmul.mubr.bf16.gmra.mrb[0].mxu0 %v1092
      %v1128 = vpop.f32.mrb[0].mxu0
      %v1129 = vadd.f32 %v589, %v1128
      %v1130 = vpop.f32.mrb[0].mxu0
      %v1131 = vpop.f32.mrb[0].mxu0
      %v1132 = vpop.f32.mrb[0].mxu0
      %1133 = vdwg.mxu0
      %v1134 = vadd.f32 %v1086, %v1129
      %v1135 = vxor.u32 %v1134, 2147483648
      %v1136 = vmul.f32 %v1135, 1.442695
      %v1137 = vpow.pop %v1136
      %v1138 = vadd.f32 %v1137, 1.0
      %v1139 = vrcp.pop %v1138
      %v1140 = vmul.f32 1.0, %v1139
      %1142 = vrot.lane.b32.xlu0 %v1129, 96
      %v1143 = vpop.permute.xlu0 %1142
      %v1145 = vmul.f32 %v1140, %v1143
      %1147 = vrot.lane.b32.xlu0 %v1145, 32
      %v1148 = vpop.permute.xlu0 %1147
      %v1150 = vadd.f32 %v1086, %v1148
      %v1151 = vtanh.pop %v1150
      %v1152 = vsub.f32 1.0, %v1140
      %1154 = vrot.lane.b32.xlu0 %v1151, 112
      %v1155 = vpop.permute.xlu0 %1154
      %v1157 = vmul.f32 %v1152, %v1155
      %v1158 = vmul.f32 %v1140, %v1076
      %v1159 = vadd.f32 %v1157, %v1158
      %1161 = vrot.lane.b32.xlu0 %v1159, 112
      %v1162 = vpop.permute.xlu0 %1161
      %s1164 = scalar_lea.vmem %s272, %s1084
      %1165 = vst.msk [vmem:[%s1164] sm:$0x3] %vm666, %v1162
      %s1166 = scalar_select %p580, 7, 0
      %s1167 = smul.u32 %s1166, 2
      %s1168 = scalar_lea.vmem [#allocation2], %s1167
      %v1169 = vld [vmem:[%s1168] sm:$0x3]
      %v1170 = vpack.c.bf16 %v1159, %v1159
      %1172 = vrot.lane.b32.xlu0 %v1170, 112
      %v1173 = vpop.permute.xlu0 %1172
      %v1175 = vsel %vm591, %v1173, 0
      %1177 = vmatprep.subr.bf16.mxu0 0
      %1178 = vmatpush1.bf16.msra.mxu0 %v578
      %1179 = vmatprep.subr.bf16.mxu0 0
      %1180 = vmatpush1.bf16.msra.mxu0 0
      %1181 = vmatprep.subr.bf16.mxu0 0
      %1182 = vmatpush1.bf16.msra.mxu0 0
      %1183 = vmatprep.subr.bf16.mxu0 0
      %1184 = vmatpush1.bf16.msra.mxu0 0
      %1185 = vmatprep.subr.bf16.mxu0 0
      %1186 = vmatpush1.bf16.msra.mxu0 0
      %1187 = vmatprep.subr.bf16.mxu0 0
      %1188 = vmatpush1.bf16.msra.mxu0 0
      %1189 = vmatprep.subr.bf16.mxu0 0
      %1190 = vmatpush1.bf16.msra.mxu0 0
      %1191 = vmatprep.subr.bf16.mxu0 0
      %1192 = vmatpush1.bf16.msra.mxu0 0
      %1193 = vmatprep.subr.bf16.mxu0 0
      %1194 = vmatpush1.bf16.msra.mxu0 0
      %1195 = vmatprep.subr.bf16.mxu0 0
      %1196 = vmatpush1.bf16.msra.mxu0 0
      %1197 = vmatprep.subr.bf16.mxu0 0
      %1198 = vmatpush1.bf16.msra.mxu0 0
      %1199 = vmatprep.subr.bf16.mxu0 0
      %1200 = vmatpush1.bf16.msra.mxu0 0
      %1201 = vmatprep.subr.bf16.mxu0 0
      %1202 = vmatpush1.bf16.msra.mxu0 0
      %1203 = vmatprep.subr.bf16.mxu0 0
      %1204 = vmatpush1.bf16.msra.mxu0 0
      %1205 = vmatprep.subr.bf16.mxu0 0
      %1206 = vmatpush1.bf16.msra.mxu0 0
      %1207 = vmatprep.subr.bf16.mxu0 0
      %1208 = vmatpush1.bf16.msra.mxu0 0
      %1209 = vmatprep.mubr.bf16.mxu0 0
      %1210 = vmatmul.mubr.bf16.gmra.mrb[0].mxu0 %v1175
      %v1211 = vpop.f32.mrb[0].mxu0
      %v1212 = vadd.f32 %v589, %v1211
      %v1213 = vpop.f32.mrb[0].mxu0
      %v1214 = vpop.f32.mrb[0].mxu0
      %v1215 = vpop.f32.mrb[0].mxu0
      %1216 = vdwg.mxu0
      %v1217 = vadd.f32 %v1169, %v1212
      %v1218 = vxor.u32 %v1217, 2147483648
      %v1219 = vmul.f32 %v1218, 1.442695
      %v1220 = vpow.pop %v1219
      %v1221 = vadd.f32 %v1220, 1.0
      %v1222 = vrcp.pop %v1221
      %v1223 = vmul.f32 1.0, %v1222
      %1225 = vrot.lane.b32.xlu0 %v1212, 96
      %v1226 = vpop.permute.xlu0 %1225
      %v1228 = vmul.f32 %v1223, %v1226
      %1230 = vrot.lane.b32.xlu0 %v1228, 32
      %v1231 = vpop.permute.xlu0 %1230
      %v1233 = vadd.f32 %v1169, %v1231
      %v1234 = vtanh.pop %v1233
      %v1235 = vsub.f32 1.0, %v1223
      %1237 = vrot.lane.b32.xlu0 %v1234, 112
      %v1238 = vpop.permute.xlu0 %1237
      %v1240 = vmul.f32 %v1235, %v1238
      %v1241 = vmul.f32 %v1223, %v1159
      %v1242 = vadd.f32 %v1240, %v1241
      %1244 = vrot.lane.b32.xlu0 %v1242, 112
      %v1245 = vpop.permute.xlu0 %1244
      %s1247 = scalar_lea.vmem %s272, %s1167
      %1248 = vst.msk [vmem:[%s1247] sm:$0x3] %vm666, %v1245
      %p1249 = scmp.lt.s32.totalorder %s16, 1
      %s1250 = scalar_select %p1249, %s16, 1
      %s1251 = smul.addr %s1250, 8
      %s1252 = smul.addr %s1251, 2
      %s1253 = scalar_lea.vmem %s5, %s1252
      // Predicated region
      $region41: #{gru_crf_forward.3} parent=39 // pred_check
        %p1254 = pneg %p159
      $region42: #{gru_crf_forward.3} parent=39 // pred_check_branch
        %1256 = sbr.rel (%p1254) target = $region44
      $region43: #{gru_crf_forward.3} parent=39 // pred_region
        _
      $region44: #{gru_crf_forward.3} parent=39 // pred_fallthru
        _
    $region40: #{gru_crf_forward.3} parent=5 // pred_fallthru
      _
    %p1257 = scmp.le.s32.totalorder 2, %s11
    // Predicated region
    $region45: #{gru_crf_forward.3} parent=5 // pred_check
      %p1258 = pneg %p1257
    $region46: #{gru_crf_forward.3} parent=5 // pred_check_branch
      %1260 = sbr.rel (%p1258) target = $region48
    $region47: #{gru_crf_forward.3} parent=5 // pred_region
      %s1261 = ssub.s32 %s11, 2
      // Predicated region
      $region49: #{gru_crf_forward.3} parent=47 // pred_check
        %p1262 = pneg %p165
      $region50: #{gru_crf_forward.3} parent=47 // pred_check_branch
        %1264 = sbr.rel (%p1262) target = $region52
      $region51: #{gru_crf_forward.3} parent=47 // pred_region
        %p1265 = scmp.lt.s32.totalorder %s17, 1
        %s1266 = scalar_select %p1265, %s17, 1
        %s1267 = smul.addr %s1266, 8
        %s1268 = smul.addr %s1267, 2
        %s1269 = scalar_lea.vmem %s5, %s1268
      $region52: #{gru_crf_forward.3} parent=47 // pred_fallthru
        _
    $region48: #{gru_crf_forward.3} parent=5 // pred_fallthru
      _
  $region6: #{gru_crf_forward.3} parent=0 // loop_footer
    %s15 = sadd.s32 1, %s11
  $region7: #{gru_crf_forward.3} parent=0 // loop_footer_branch
    %10 = sbr.rel target = $region3
  $region8: #{gru_crf_forward.3} parent=0 // loop_exit
    _

// kernel: gru_crf_forward.5
$region0: #{gru_crf_forward.5}
  #allocation0 [shape = 'u32[]', space=smem, size = 0x4, offset = 0x4, fixed_abs, tag = 'smem constant byte address 0x4 - core index']
  #allocation1 [shape = 'u32[144,128]{1,0:T(1,128)}', space=vmem, size = 0x12000, scoped, tag = 'internal scratch']
  #allocation2 [shape = 'f32[8,2,5]{2,1,0:T(2,128)}', space=vmem, size = 0x2000, scoped, tag = 'scratch operand']
  %s0 = inlined_call_operand.vmem [shape: f32[2,8,2,16], index: 0, kind: input, shape index: {}]
  %s1 = inlined_call_operand.vmem [shape: f32[32,5], index: 1, kind: input, shape index: {}]
  %s2 = inlined_call_operand.vmem [shape: f32[1,5], index: 2, kind: input, shape index: {}]
  %s3 = inlined_call_operand.vmem [shape: f32[8,2,1], index: 3, kind: input, shape index: {}]
  %s4 = inlined_call_operand.vmem [shape: f32[8,2,5], index: 4, kind: input, shape index: {}]
  %s5 = inlined_call_operand.vmem [shape: f32[2,1], index: 5, kind: input, shape index: {}]
  %s6 = inlined_call_operand.vmem [shape: f32[5,5], index: 6, kind: input, shape index: {}]
  %s7 = inlined_call_operand.vmem [shape: f32[1,5], index: 7, kind: input, shape index: {}]
  %s8 = inlined_call_operand.vmem [shape: f32[1,5], index: 8, kind: input, shape index: {}]
  %s9 = inlined_call_operand.hbm [shape: f32[1,1], index: 9, kind: output, shape index: {}]
  %s10 = sld [smem:[#allocation0]]
  $region46: #{gru_crf_forward.5} parent=0
    _
  %s12 = ssub.s32 1, %s10
  %s13 = scalar_select 0, %s12, %s10
  $region1: #{gru_crf_forward.5} parent=0
    #allocation3 [shape = 'u8[512]{0}', space=vmem, size = 0x400, scoped, tag = 'output window, operand 0, single buffered']
    #allocation4 [shape = 's32[1]{0}', space=sflag, size = 0x4, scoped, tag = 'scoped memory for gru_crf_forward.5']
    %14 = vsyncpa [#allocation4], 0
    // Predicated region
    $region2: #{gru_crf_forward.5} parent=1 // pred_check
      _
    $region3: #{gru_crf_forward.5} parent=1 // pred_check_branch
      %16 = sbr.rel (0) target = $region5
    $region4: #{gru_crf_forward.5} parent=1 // pred_region
      _
    $region5: #{gru_crf_forward.5} parent=1 // pred_fallthru
      _
    // Predicated region
    $region6: #{gru_crf_forward.5} parent=1 // pred_check
      _
    $region7: #{gru_crf_forward.5} parent=1 // pred_check_branch
      %18 = sbr.rel (0) target = $region9
    $region8: #{gru_crf_forward.5} parent=1 // pred_region
      _
    $region9: #{gru_crf_forward.5} parent=1 // pred_fallthru
      _
    // Predicated region
    $region10: #{gru_crf_forward.5} parent=1 // pred_check
      _
    $region11: #{gru_crf_forward.5} parent=1 // pred_check_branch
      %20 = sbr.rel (0) target = $region13
    $region12: #{gru_crf_forward.5} parent=1 // pred_region
      _
    $region13: #{gru_crf_forward.5} parent=1 // pred_fallthru
      _
    // Predicated region
    $region14: #{gru_crf_forward.5} parent=1 // pred_check
      _
    $region15: #{gru_crf_forward.5} parent=1 // pred_check_branch
      %22 = sbr.rel (0) target = $region17
    $region16: #{gru_crf_forward.5} parent=1 // pred_region
      _
    $region17: #{gru_crf_forward.5} parent=1 // pred_fallthru
      _
    // Predicated region
    $region18: #{gru_crf_forward.5} parent=1 // pred_check
      _
    $region19: #{gru_crf_forward.5} parent=1 // pred_check_branch
      %24 = sbr.rel (0) target = $region21
    $region20: #{gru_crf_forward.5} parent=1 // pred_region
      _
    $region21: #{gru_crf_forward.5} parent=1 // pred_fallthru
      _
    // Predicated region
    $region22: #{gru_crf_forward.5} parent=1 // pred_check
      _
    $region23: #{gru_crf_forward.5} parent=1 // pred_check_branch
      %26 = sbr.rel (0) target = $region25
    $region24: #{gru_crf_forward.5} parent=1 // pred_region
      _
    $region25: #{gru_crf_forward.5} parent=1 // pred_fallthru
      _
    // Predicated region
    $region26: #{gru_crf_forward.5} parent=1 // pred_check
      _
    $region27: #{gru_crf_forward.5} parent=1 // pred_check_branch
      %28 = sbr.rel (0) target = $region29
    $region28: #{gru_crf_forward.5} parent=1 // pred_region
      _
    $region29: #{gru_crf_forward.5} parent=1 // pred_fallthru
      _
    // Predicated region
    $region30: #{gru_crf_forward.5} parent=1 // pred_check
      _
    $region31: #{gru_crf_forward.5} parent=1 // pred_check_branch
      %30 = sbr.rel (0) target = $region33
    $region32: #{gru_crf_forward.5} parent=1 // pred_region
      _
    $region33: #{gru_crf_forward.5} parent=1 // pred_fallthru
      _
    // Predicated region
    $region34: #{gru_crf_forward.5} parent=1 // pred_check
      _
    $region35: #{gru_crf_forward.5} parent=1 // pred_check_branch
      %32 = sbr.rel (0) target = $region37
    $region36: #{gru_crf_forward.5} parent=1 // pred_region
      _
    $region37: #{gru_crf_forward.5} parent=1 // pred_fallthru
      _
    %v34 = vld [vmem:[%s1] sm:$0xff]
    %v35 = vld [vmem:[%s1 + $0x8] sm:$0xff]
    %v36 = vld [vmem:[%s1 + $0x10] sm:$0xff]
    %v37 = vld [vmem:[%s1 + $0x18] sm:$0xff]
    %v38 = vpack.c.bf16 %v35, %v34
    %v39 = vpack.c.bf16 %v37, %v36
    %v40 = vld [vmem:[%s0] sm:$0x3]
    %v41 = vld [vmem:[%s0 + $0x2] sm:$0x3]
    %v42 = vld [vmem:[%s0 + $0x4] sm:$0x3]
    %v43 = vld [vmem:[%s0 + $0x6] sm:$0x3]
    %v44 = vld [vmem:[%s0 + $0x8] sm:$0x3]
    %v45 = vld [vmem:[%s0 + $0xa] sm:$0x3]
    %v46 = vld [vmem:[%s0 + $0xc] sm:$0x3]
    %v47 = vld [vmem:[%s0 + $0xe] sm:$0x3]
    %v56 = vcombine.low %v40, %v41
    %v57 = vcombine.low %v42, %v43
    %v59 = vunpack.c.l.s4 1983009808
    %v60 = vunpack.c.0.s8 %v59
    %v61 = vlaneseq
    %v62 = vshrl.u32 %v61, 7
    %v63 = vsub.s32 %v60, %v62
    %v64 = vrot.slane %v56, %v63
    %v66 = vunpack.c.l.s4 1983009808
    %v67 = vunpack.c.0.s8 %v66
    %v68 = vlaneseq
    %v69 = vshrl.u32 %v68, 7
    %v70 = vsub.s32 %v67, %v69
    %v71 = vrot.slane %v57, %v70
    %v72 = vcombine.low %v64, %v71
    %v73 = vcombine.low %v44, %v45
    %v74 = vcombine.low %v46, %v47
    %v76 = vunpack.c.l.s4 1983009808
    %v77 = vunpack.c.0.s8 %v76
    %v78 = vlaneseq
    %v79 = vshrl.u32 %v78, 7
    %v80 = vsub.s32 %v77, %v79
    %v81 = vrot.slane %v73, %v80
    %v83 = vunpack.c.l.s4 1983009808
    %v84 = vunpack.c.0.s8 %v83
    %v85 = vlaneseq
    %v86 = vshrl.u32 %v85, 7
    %v87 = vsub.s32 %v84, %v86
    %v88 = vrot.slane %v74, %v87
    %v89 = vcombine.low %v81, %v88
    %v92 = vpack.c.bf16 %v89, %v72
    %s93 = scalar_lea.vmem %s0, 16
    %v94 = vld [vmem:[%s93] sm:$0x3]
    %v95 = vld [vmem:[%s93 + $0x2] sm:$0x3]
    %v96 = vld [vmem:[%s93 + $0x4] sm:$0x3]
    %v97 = vld [vmem:[%s93 + $0x6] sm:$0x3]
    %v98 = vld [vmem:[%s93 + $0x8] sm:$0x3]
    %v99 = vld [vmem:[%s93 + $0xa] sm:$0x3]
    %v100 = vld [vmem:[%s93 + $0xc] sm:$0x3]
    %v101 = vld [vmem:[%s93 + $0xe] sm:$0x3]
    %v110 = vcombine.low %v94, %v95
    %v111 = vcombine.low %v96, %v97
    %v113 = vunpack.c.l.s4 1983009808
    %v114 = vunpack.c.0.s8 %v113
    %v115 = vlaneseq
    %v116 = vshrl.u32 %v115, 7
    %v117 = vsub.s32 %v114, %v116
    %v118 = vrot.slane %v110, %v117
    %v120 = vunpack.c.l.s4 1983009808
    %v121 = vunpack.c.0.s8 %v120
    %v122 = vlaneseq
    %v123 = vshrl.u32 %v122, 7
    %v124 = vsub.s32 %v121, %v123
    %v125 = vrot.slane %v111, %v124
    %v126 = vcombine.low %v118, %v125
    %v127 = vcombine.low %v98, %v99
    %v128 = vcombine.low %v100, %v101
    %v130 = vunpack.c.l.s4 1983009808
    %v131 = vunpack.c.0.s8 %v130
    %v132 = vlaneseq
    %v133 = vshrl.u32 %v132, 7
    %v134 = vsub.s32 %v131, %v133
    %v135 = vrot.slane %v127, %v134
    %v137 = vunpack.c.l.s4 1983009808
    %v138 = vunpack.c.0.s8 %v137
    %v139 = vlaneseq
    %v140 = vshrl.u32 %v139, 7
    %v141 = vsub.s32 %v138, %v140
    %v142 = vrot.slane %v128, %v141
    %v143 = vcombine.low %v135, %v142
    %v146 = vpack.c.bf16 %v143, %v126
    %vm147 = vcmask 130048
    %v149 = vsel %vm147, %v146, 0
    %151 = vmatprep.subr.bf16.mxu0 0
    %152 = vmatpush1.bf16.msra.mxu0 %v39
    %153 = vmatprep.subr.bf16.mxu0 0
    %154 = vmatpush1.bf16.msra.mxu0 0
    %155 = vmatprep.subr.bf16.mxu0 0
    %156 = vmatpush1.bf16.msra.mxu0 0
    %157 = vmatprep.subr.bf16.mxu0 0
    %158 = vmatpush1.bf16.msra.mxu0 0
    %159 = vmatprep.subr.bf16.mxu0 0
    %160 = vmatpush1.bf16.msra.mxu0 0
    %161 = vmatprep.subr.bf16.mxu0 0
    %162 = vmatpush1.bf16.msra.mxu0 0
    %163 = vmatprep.subr.bf16.mxu0 0
    %164 = vmatpush1.bf16.msra.mxu0 0
    %165 = vmatprep.subr.bf16.mxu0 0
    %166 = vmatpush1.bf16.msra.mxu0 0
    %167 = vmatprep.subr.bf16.mxu0 0
    %168 = vmatpush1.bf16.msra.mxu0 0
    %169 = vmatprep.subr.bf16.mxu0 0
    %170 = vmatpush1.bf16.msra.mxu0 0
    %171 = vmatprep.subr.bf16.mxu0 0
    %172 = vmatpush1.bf16.msra.mxu0 0
    %173 = vmatprep.subr.bf16.mxu0 0
    %174 = vmatpush1.bf16.msra.mxu0 0
    %175 = vmatprep.subr.bf16.mxu0 0
    %176 = vmatpush1.bf16.msra.mxu0 0
    %177 = vmatprep.subr.bf16.mxu0 0
    %178 = vmatpush1.bf16.msra.mxu0 0
    %179 = vmatprep.subr.bf16.mxu0 0
    %180 = vmatpush1.bf16.msra.mxu0 0
    %181 = vmatprep.subr.bf16.mxu0 0
    %182 = vmatpush1.bf16.msra.mxu0 0
    %183 = vmatprep.mubr.bf16.mxu0 0
    %184 = vmatmul.mubr.bf16.gmra.mrb[0].mxu0 %v149
    %v185 = vpop.f32.mrb[0].mxu0
    %v186 = vadd.f32 0.0, %v185
    %v187 = vpop.f32.mrb[0].mxu0
    %v188 = vpop.f32.mrb[0].mxu0
    %v189 = vadd.f32 0.0, %v188
    %v190 = vpop.f32.mrb[0].mxu0
    %191 = vdwg.mxu0
    %v193 = vsel %vm147, %v92, 0
    %195 = vmatprep.subr.bf16.mxu0 0
    %196 = vmatpush1.bf16.msra.mxu0 %v38
    %197 = vmatprep.subr.bf16.mxu0 0
    %198 = vmatpush1.bf16.msra.mxu0 0
    %199 = vmatprep.subr.bf16.mxu0 0
    %200 = vmatpush1.bf16.msra.mxu0 0
    %201 = vmatprep.subr.bf16.mxu0 0
    %202 = vmatpush1.bf16.msra.mxu0 0
    %203 = vmatprep.subr.bf16.mxu0 0
    %204 = vmatpush1.bf16.msra.mxu0 0
    %205 = vmatprep.subr.bf16.mxu0 0
    %206 = vmatpush1.bf16.msra.mxu0 0
    %207 = vmatprep.subr.bf16.mxu0 0
    %208 = vmatpush1.bf16.msra.mxu0 0
    %209 = vmatprep.subr.bf16.mxu0 0
    %210 = vmatpush1.bf16.msra.mxu0 0
    %211 = vmatprep.subr.bf16.mxu0 0
    %212 = vmatpush1.bf16.msra.mxu0 0
    %213 = vmatprep.subr.bf16.mxu0 0
    %214 = vmatpush1.bf16.msra.mxu0 0
    %215 = vmatprep.subr.bf16.mxu0 0
    %216 = vmatpush1.bf16.msra.mxu0 0
    %217 = vmatprep.subr.bf16.mxu0 0
    %218 = vmatpush1.bf16.msra.mxu0 0
    %219 = vmatprep.subr.bf16.mxu0 0
    %220 = vmatpush1.bf16.msra.mxu0 0
    %221 = vmatprep.subr.bf16.mxu0 0
    %222 = vmatpush1.bf16.msra.mxu0 0
    %223 = vmatprep.subr.bf16.mxu0 0
    %224 = vmatpush1.bf16.msra.mxu0 0
    %225 = vmatprep.subr.bf16.mxu0 0
    %226 = vmatpush1.bf16.msra.mxu0 0
    %227 = vmatprep.mubr.bf16.mxu0 0
    %228 = vmatmul.mubr.bf16.gmra.mrb[0].mxu0 %v193
    %v229 = vpop.f32.mrb[0].mxu0
    %v230 = vadd.f32 %v186, %v229
    %v231 = vpop.f32.mrb[0].mxu0
    %v232 = vpop.f32.mrb[0].mxu0
    %v233 = vadd.f32 %v189, %v232
    %v234 = vpop.f32.mrb[0].mxu0
    %235 = vdwg.mxu0
    %v236 = vld [vmem:[%s2] sm:$0x1]
    %v238 = vlaneseq
    %v239 = vshrl.u32 %v238, 7
    %v240 = vsub.s32 0, %v239
    %v241 = vrot.slane %v236, %v240
    %v243 = vadd.f32 %v230, %v241
    %v244 = vadd.f32 %v233, %v241
    %v247 = vcombine.high %v243, %v243
    %v249 = vunpack.c.l.s4 1983009808
    %v250 = vunpack.c.0.s8 %v249
    %v251 = vlaneseq
    %v252 = vshrl.u32 %v251, 7
    %v253 = vsub.s32 %v250, %v252
    %v254 = vrot.slane %v243, %v253
    %v256 = vunpack.c.l.s4 1983009808
    %v257 = vunpack.c.0.s8 %v256
    %v258 = vlaneseq
    %v259 = vshrl.u32 %v258, 7
    %v260 = vsub.s32 %v257, %v259
    %v261 = vrot.slane %v247, %v260
    %v262 = vcombine.high %v254, %v254
    %v263 = vcombine.high %v261, %v261
    %v264 = vcombine.high %v244, %v244
    %v266 = vunpack.c.l.s4 1983009808
    %v267 = vunpack.c.0.s8 %v266
    %v268 = vlaneseq
    %v269 = vshrl.u32 %v268, 7
    %v270 = vsub.s32 %v267, %v269
    %v271 = vrot.slane %v244, %v270
    %v273 = vunpack.c.l.s4 1983009808
    %v274 = vunpack.c.0.s8 %v273
    %v275 = vlaneseq
    %v276 = vshrl.u32 %v275, 7
    %v277 = vsub.s32 %v274, %v276
    %v278 = vrot.slane %v264, %v277
    %v279 = vcombine.high %v271, %v271
    %v280 = vcombine.high %v278, %v278
    %vm289 = vcmask 33792
    %290 = vst.msk [vmem:[#allocation2] sm:$0x3] %vm289, %v254
    %291 = vst.msk [vmem:[#allocation2 + $0x2] sm:$0x3] %vm289, %v262
    %292 = vst.msk [vmem:[#allocation2 + $0x4] sm:$0x3] %vm289, %v261
    %293 = vst.msk [vmem:[#allocation2 + $0x6] sm:$0x3] %vm289, %v263
    %294 = vst.msk [vmem:[#allocation2 + $0x8] sm:$0x3] %vm289, %v271
    %295 = vst.msk [vmem:[#allocation2 + $0xa] sm:$0x3] %vm289, %v279
    %296 = vst.msk [vmem:[#allocation2 + $0xc] sm:$0x3] %vm289, %v278
    %297 = vst.msk [vmem:[#allocation2 + $0xe] sm:$0x3] %vm289, %v280
    %v298 = vld [vmem:[%s6] sm:$0x1f]
    %v299 = vld [vmem:[%s7] sm:$0x1]
    %v300 = vld [vmem:[%s8] sm:$0x1]
    %v301 = vld [vmem:[%s3] sm:$0x3]
    %v302 = vld [vmem:[%s3 + $0x2] sm:$0x3]
    %v303 = vld [vmem:[%s3 + $0x4] sm:$0x3]
    %v304 = vld [vmem:[%s3 + $0x6] sm:$0x3]
    %v305 = vld [vmem:[%s3 + $0x8] sm:$0x3]
    %v306 = vld [vmem:[%s3 + $0xa] sm:$0x3]
    %v307 = vld [vmem:[%s3 + $0xc] sm:$0x3]
    %v308 = vld [vmem:[%s3 + $0xe] sm:$0x3]
    %v309 = vld [vmem:[%s4] sm:$0x3]
    %v310 = vld [vmem:[%s4 + $0x2] sm:$0x3]
    %v311 = vld [vmem:[%s4 + $0x4] sm:$0x3]
    %v312 = vld [vmem:[%s4 + $0x6] sm:$0x3]
    %v313 = vld [vmem:[%s4 + $0x8] sm:$0x3]
    %v314 = vld [vmem:[%s4 + $0xa] sm:$0x3]
    %v315 = vld [vmem:[%s4 + $0xc] sm:$0x3]
    %v316 = vld [vmem:[%s4 + $0xe] sm:$0x3]
    %v317 = vmul.f32 %v309, %v254
    %v318 = vmul.f32 %v310, %v262
    %v319 = vmul.f32 %v311, %v261
    %v320 = vmul.f32 %v312, %v263
    %v321 = vmul.f32 %v313, %v271
    %v322 = vmul.f32 %v314, %v279
    %v323 = vmul.f32 %v315, %v278
    %v324 = vmul.f32 %v316, %v280
    %v325 = vsel %vm289, %v317, 0.0
    %326 = vadd.xlane.f32.xlu0 %v325
    %v327 = vpop.xlane.xlu0 %326
    %v328 = vsel %vm289, %v318, 0.0
    %329 = vadd.xlane.f32.xlu0 %v328
    %v330 = vpop.xlane.xlu0 %329
    %v331 = vsel %vm289, %v319, 0.0
    %332 = vadd.xlane.f32.xlu0 %v331
    %v333 = vpop.xlane.xlu0 %332
    %v334 = vsel %vm289, %v320, 0.0
    %335 = vadd.xlane.f32.xlu0 %v334
    %v336 = vpop.xlane.xlu0 %335
    %v337 = vsel %vm289, %v321, 0.0
    %338 = vadd.xlane.f32.xlu0 %v337
    %v339 = vpop.xlane.xlu0 %338
    %v340 = vsel %vm289, %v322, 0.0
    %341 = vadd.xlane.f32.xlu0 %v340
    %v342 = vpop.xlane.xlu0 %341
    %v343 = vsel %vm289, %v323, 0.0
    %344 = vadd.xlane.f32.xlu0 %v343
    %v345 = vpop.xlane.xlu0 %344
    %v346 = vsel %vm289, %v324, 0.0
    %347 = vadd.xlane.f32.xlu0 %v346
    %v348 = vpop.xlane.xlu0 %347
    %v349 = vmul.f32 %v327, %v301
    %v350 = vmul.f32 %v330, %v302
    %v351 = vmul.f32 %v333, %v303
    %v352 = vmul.f32 %v336, %v304
    %v353 = vmul.f32 %v339, %v305
    %v354 = vmul.f32 %v342, %v306
    %v355 = vmul.f32 %v345, %v307
    %v356 = vmul.f32 %v348, %v308
    %vm357 = vcmask 1024
    %v358 = vsel %vm357, %v349, 0.0
    %v359 = vsel %vm357, %v350, 0.0
    %v360 = vadd.f32 %v358, %v359
    %v361 = vsel %vm357, %v351, 0.0
    %v362 = vadd.f32 %v360, %v361
    %v363 = vsel %vm357, %v352, 0.0
    %v364 = vadd.f32 %v362, %v363
    %v365 = vsel %vm357, %v353, 0.0
    %v366 = vadd.f32 %v364, %v365
    %v367 = vsel %vm357, %v354, 0.0
    %v368 = vadd.f32 %v366, %v367
    %v369 = vsel %vm357, %v355, 0.0
    %v370 = vadd.f32 %v368, %v369
    %v371 = vsel %vm357, %v356, 0.0
    %v372 = vadd.f32 %v370, %v371
    %v373 = vld [vmem:[%s5] sm:$0x3]
    %v374 = vadd.f32 %v373, %v372
    %v375 = vld [vmem:[#allocation2] sm:$0x3]
    %v377 = vlaneseq
    %v378 = vshrl.u32 %v377, 7
    %v379 = vsub.s32 0, %v378
    %v380 = vrot.slane %v299, %v379
    %v382 = vadd.f32 %v380, %v375
    %s383 = scalar_lea.vmem [#allocation2], 2
    %v384 = vld [vmem:[%s383] sm:$0x3]
    %s385 = scalar_lea.vmem %s3, 2
    %v386 = vld [vmem:[%s385] sm:$0x3]
    %v387 = vlaneseq
    %v388 = vshrl.u32 %v387, 7
    %v389 = vsub.s32 0, %v388
    %v390 = vrot.slane %v382, %v389
    %392 = vbcast.lane.b32.xlu0 %v390, 256
    %v393 = vpop.permute.xlu0 %392
    %v394 = vlaneseq
    %v395 = vshrl.u32 %v394, 7
    %v396 = vsub.s32 1, %v395
    %v397 = vrot.slane %v382, %v396
    %399 = vbcast.lane.b32.xlu0 %v397, 256
    %v400 = vpop.permute.xlu0 %399
    %v401 = vadd.f32 %v393, %v298
    %v402 = vadd.f32 %v400, %v298
    %v405 = vunpack.c.l.s4 1966171168
    %v406 = vunpack.c.0.s8 %v405
    %v407 = vlaneseq
    %v408 = vshrl.u32 %v407, 7
    %v409 = vsub.s32 %v406, %v408
    %v410 = vrot.slane %v384, %v409
    %v411 = vcombine.high %v410, %v410
    %v413 = vunpack.c.l.s4 1966171168
    %v414 = vunpack.c.0.s8 %v413
    %v415 = vlaneseq
    %v416 = vshrl.u32 %v415, 7
    %v417 = vsub.s32 %v414, %v416
    %v418 = vrot.slane %v410, %v417
    %v420 = vunpack.c.l.s4 1966171168
    %v421 = vunpack.c.0.s8 %v420
    %v422 = vlaneseq
    %v423 = vshrl.u32 %v422, 7
    %v424 = vsub.s32 %v421, %v423
    %v425 = vrot.slane %v411, %v424
    %v426 = vlaneseq
    %v427 = vshrl.u32 %v426, 7
    %v428 = vsub.s32 0, %v427
    %v429 = vrot.slane %v418, %v428
    %v430 = vlaneseq
    %v431 = vshrl.u32 %v430, 7
    %v432 = vsub.s32 0, %v431
    %v433 = vrot.slane %v425, %v432
    %v436 = vadd.f32 %v401, %v429
    %v437 = vadd.f32 %v402, %v433
    %vm438 = vcmask 36864
    %v439 = vsel %vm438, %v436, -inf
    %v440 = vrot.slane %v439, 4
    %v441 = vmax.f32 %v439, %v440
    %v442 = vrot.slane %v441, 2
    %v443 = vmax.f32 %v441, %v442
    %v444 = vrot.slane %v443, 1
    %v445 = vmax.f32 %v443, %v444
    %v446 = vsel %vm438, %v437, -inf
    %v447 = vrot.slane %v446, 4
    %v448 = vmax.f32 %v446, %v447
    %v449 = vrot.slane %v448, 2
    %v450 = vmax.f32 %v448, %v449
    %v451 = vrot.slane %v450, 1
    %v452 = vmax.f32 %v450, %v451
    %v453 = vsub.f32 %v436, %v445
    %v454 = vsub.f32 %v437, %v452
    %v455 = vmul.f32 %v453, 1.442695
    %v456 = vpow.pop %v455
    %v457 = vmul.f32 %v454, 1.442695
    %v458 = vpow.pop %v457
    %v459 = vsel %vm438, %v456, 0.0
    %v460 = vrot.slane %v459, 4
    %v461 = vadd.f32 %v459, %v460
    %v462 = vrot.slane %v461, 2
    %v463 = vadd.f32 %v461, %v462
    %v464 = vrot.slane %v463, 1
    %v465 = vadd.f32 %v463, %v464
    %v466 = vsel %vm438, %v458, 0.0
    %v467 = vrot.slane %v466, 4
    %v468 = vadd.f32 %v466, %v467
    %v469 = vrot.slane %v468, 2
    %v470 = vadd.f32 %v468, %v469
    %v471 = vrot.slane %v470, 1
    %v472 = vadd.f32 %v470, %v471
    %v473 = vlog2.pop %v465
    %v474 = vmul.f32 %v473, 0.6931472
    %v475 = vlog2.pop %v472
    %v476 = vmul.f32 %v475, 0.6931472
    %v477 = vadd.f32 %v474, %v445
    %v478 = vadd.f32 %v476, %v452
    %vm479 = vcmp.gt.f32.partialorder %v386, 0.5
    %v480 = vsel %vm479, 1, 0
    %481 = vset.pattern.permute.xlu0 0
    %482 = vperm.xlu0 %481, %v480
    %v483 = vpop.permute.xlu0 %482
    %vm484 = vcmp.eq.s32.totalorder %v483, 1
    %vm487 = vcmask 1041409
    %v488 = vsel %vm487, %v478, %v477
    %v490 = vsel %vm484, %v488, %v382
    %s491 = scalar_lea.vmem [#allocation2], 4
    %v492 = vld [vmem:[%s491] sm:$0x3]
    %s493 = scalar_lea.vmem %s3, 4
    %v494 = vld [vmem:[%s493] sm:$0x3]
    %v495 = vlaneseq
    %v496 = vshrl.u32 %v495, 7
    %v497 = vsub.s32 0, %v496
    %v498 = vrot.slane %v490, %v497
    %500 = vbcast.lane.b32.xlu0 %v498, 256
    %v501 = vpop.permute.xlu0 %500
    %v502 = vlaneseq
    %v503 = vshrl.u32 %v502, 7
    %v504 = vsub.s32 1, %v503
    %v505 = vrot.slane %v490, %v504
    %507 = vbcast.lane.b32.xlu0 %v505, 256
    %v508 = vpop.permute.xlu0 %507
    %v509 = vadd.f32 %v501, %v298
    %v510 = vadd.f32 %v508, %v298
    %v513 = vunpack.c.l.s4 1966171168
    %v514 = vunpack.c.0.s8 %v513
    %v515 = vlaneseq
    %v516 = vshrl.u32 %v515, 7
    %v517 = vsub.s32 %v514, %v516
    %v518 = vrot.slane %v492, %v517
    %v519 = vcombine.high %v518, %v518
    %v521 = vunpack.c.l.s4 1966171168
    %v522 = vunpack.c.0.s8 %v521
    %v523 = vlaneseq
    %v524 = vshrl.u32 %v523, 7
    %v525 = vsub.s32 %v522, %v524
    %v526 = vrot.slane %v518, %v525
    %v528 = vunpack.c.l.s4 1966171168
    %v529 = vunpack.c.0.s8 %v528
    %v530 = vlaneseq
    %v531 = vshrl.u32 %v530, 7
    %v532 = vsub.s32 %v529, %v531
    %v533 = vrot.slane %v519, %v532
    %v534 = vlaneseq
    %v535 = vshrl.u32 %v534, 7
    %v536 = vsub.s32 0, %v535
    %v537 = vrot.slane %v526, %v536
    %v538 = vlaneseq
    %v539 = vshrl.u32 %v538, 7
    %v540 = vsub.s32 0, %v539
    %v541 = vrot.slane %v533, %v540
    %v544 = vadd.f32 %v509, %v537
    %v545 = vadd.f32 %v510, %v541
    %v546 = vsel %vm438, %v544, -inf
    %v547 = vrot.slane %v546, 4
    %v548 = vmax.f32 %v546, %v547
    %v549 = vrot.slane %v548, 2
    %v550 = vmax.f32 %v548, %v549
    %v551 = vrot.slane %v550, 1
    %v552 = vmax.f32 %v550, %v551
    %v553 = vsel %vm438, %v545, -inf
    %v554 = vrot.slane %v553, 4
    %v555 = vmax.f32 %v553, %v554
    %v556 = vrot.slane %v555, 2
    %v557 = vmax.f32 %v555, %v556
    %v558 = vrot.slane %v557, 1
    %v559 = vmax.f32 %v557, %v558
    %v560 = vsub.f32 %v544, %v552
    %v561 = vsub.f32 %v545, %v559
    %v562 = vmul.f32 %v560, 1.442695
    %v563 = vpow.pop %v562
    %v564 = vmul.f32 %v561, 1.442695
    %v565 = vpow.pop %v564
    %v566 = vsel %vm438, %v563, 0.0
    %v567 = vrot.slane %v566, 4
    %v568 = vadd.f32 %v566, %v567
    %v569 = vrot.slane %v568, 2
    %v570 = vadd.f32 %v568, %v569
    %v571 = vrot.slane %v570, 1
    %v572 = vadd.f32 %v570, %v571
    %v573 = vsel %vm438, %v565, 0.0
    %v574 = vrot.slane %v573, 4
    %v575 = vadd.f32 %v573, %v574
    %v576 = vrot.slane %v575, 2
    %v577 = vadd.f32 %v575, %v576
    %v578 = vrot.slane %v577, 1
    %v579 = vadd.f32 %v577, %v578
    %v580 = vlog2.pop %v572
    %v581 = vmul.f32 %v580, 0.6931472
    %v582 = vlog2.pop %v579
    %v583 = vmul.f32 %v582, 0.6931472
    %v584 = vadd.f32 %v581, %v552
    %v585 = vadd.f32 %v583, %v559
    %vm586 = vcmp.gt.f32.partialorder %v494, 0.5
    %v587 = vsel %vm586, 1, 0
    %588 = vset.pattern.permute.xlu0 0
    %589 = vperm.xlu0 %588, %v587
    %v590 = vpop.permute.xlu0 %589
    %vm591 = vcmp.eq.s32.totalorder %v590, 1
    %v594 = vsel %vm487, %v585, %v584
    %v596 = vsel %vm591, %v594, %v490
    %s597 = scalar_lea.vmem [#allocation2], 6
    %v598 = vld [vmem:[%s597] sm:$0x3]
    %s599 = scalar_lea.vmem %s3, 6
    %v600 = vld [vmem:[%s599] sm:$0x3]
    %v601 = vlaneseq
    %v602 = vshrl.u32 %v601, 7
    %v603 = vsub.s32 0, %v602
    %v604 = vrot.slane %v596, %v603
    %606 = vbcast.lane.b32.xlu0 %v604, 256
    %v607 = vpop.permute.xlu0 %606
    %v608 = vlaneseq
    %v609 = vshrl.u32 %v608, 7
    %v610 = vsub.s32 1, %v609
    %v611 = vrot.slane %v596, %v610
    %613 = vbcast.lane.b32.xlu0 %v611, 256
    %v614 = vpop.permute.xlu0 %613
    %v615 = vadd.f32 %v607, %v298
    %v616 = vadd.f32 %v614, %v298
    %v619 = vunpack.c.l.s4 1966171168
    %v620 = vunpack.c.0.s8 %v619
    %v621 = vlaneseq
    %v622 = vshrl.u32 %v621, 7
    %v623 = vsub.s32 %v620, %v622
    %v624 = vrot.slane %v598, %v623
    %v625 = vcombine.high %v624, %v624
    %v627 = vunpack.c.l.s4 1966171168
    %v628 = vunpack.c.0.s8 %v627
    %v629 = vlaneseq
    %v630 = vshrl.u32 %v629, 7
    %v631 = vsub.s32 %v628, %v630
    %v632 = vrot.slane %v624, %v631
    %v634 = vunpack.c.l.s4 1966171168
    %v635 = vunpack.c.0.s8 %v634
    %v636 = vlaneseq
    %v637 = vshrl.u32 %v636, 7
    %v638 = vsub.s32 %v635, %v637
    %v639 = vrot.slane %v625, %v638
    %v640 = vlaneseq
    %v641 = vshrl.u32 %v640, 7
    %v642 = vsub.s32 0, %v641
    %v643 = vrot.slane %v632, %v642
    %v644 = vlaneseq
    %v645 = vshrl.u32 %v644, 7
    %v646 = vsub.s32 0, %v645
    %v647 = vrot.slane %v639, %v646
    %v650 = vadd.f32 %v615, %v643
    %v651 = vadd.f32 %v616, %v647
    %v652 = vsel %vm438, %v650, -inf
    %v653 = vrot.slane %v652, 4
    %v654 = vmax.f32 %v652, %v653
    %v655 = vrot.slane %v654, 2
    %v656 = vmax.f32 %v654, %v655
    %v657 = vrot.slane %v656, 1
    %v658 = vmax.f32 %v656, %v657
    %v659 = vsel %vm438, %v651, -inf
    %v660 = vrot.slane %v659, 4
    %v661 = vmax.f32 %v659, %v660
    %v662 = vrot.slane %v661, 2
    %v663 = vmax.f32 %v661, %v662
    %v664 = vrot.slane %v663, 1
    %v665 = vmax.f32 %v663, %v664
    %v666 = vsub.f32 %v650, %v658
    %v667 = vsub.f32 %v651, %v665
    %v668 = vmul.f32 %v666, 1.442695
    %v669 = vpow.pop %v668
    %v670 = vmul.f32 %v667, 1.442695
    %v671 = vpow.pop %v670
    %v672 = vsel %vm438, %v669, 0.0
    %v673 = vrot.slane %v672, 4
    %v674 = vadd.f32 %v672, %v673
    %v675 = vrot.slane %v674, 2
    %v676 = vadd.f32 %v674, %v675
    %v677 = vrot.slane %v676, 1
    %v678 = vadd.f32 %v676, %v677
    %v679 = vsel %vm438, %v671, 0.0
    %v680 = vrot.slane %v679, 4
    %v681 = vadd.f32 %v679, %v680
    %v682 = vrot.slane %v681, 2
    %v683 = vadd.f32 %v681, %v682
    %v684 = vrot.slane %v683, 1
    %v685 = vadd.f32 %v683, %v684
    %v686 = vlog2.pop %v678
    %v687 = vmul.f32 %v686, 0.6931472
    %v688 = vlog2.pop %v685
    %v689 = vmul.f32 %v688, 0.6931472
    %v690 = vadd.f32 %v687, %v658
    %v691 = vadd.f32 %v689, %v665
    %vm692 = vcmp.gt.f32.partialorder %v600, 0.5
    %v693 = vsel %vm692, 1, 0
    %694 = vset.pattern.permute.xlu0 0
    %695 = vperm.xlu0 %694, %v693
    %v696 = vpop.permute.xlu0 %695
    %vm697 = vcmp.eq.s32.totalorder %v696, 1
    %v700 = vsel %vm487, %v691, %v690
    %v702 = vsel %vm697, %v700, %v596
    %s703 = scalar_lea.vmem [#allocation2], 8
    %v704 = vld [vmem:[%s703] sm:$0x3]
    %s705 = scalar_lea.vmem %s3, 8
    %v706 = vld [vmem:[%s705] sm:$0x3]
    %v707 = vlaneseq
    %v708 = vshrl.u32 %v707, 7
    %v709 = vsub.s32 0, %v708
    %v710 = vrot.slane %v702, %v709
    %712 = vbcast.lane.b32.xlu0 %v710, 256
    %v713 = vpop.permute.xlu0 %712
    %v714 = vlaneseq
    %v715 = vshrl.u32 %v714, 7
    %v716 = vsub.s32 1, %v715
    %v717 = vrot.slane %v702, %v716
    %719 = vbcast.lane.b32.xlu0 %v717, 256
    %v720 = vpop.permute.xlu0 %719
    %v721 = vadd.f32 %v713, %v298
    %v722 = vadd.f32 %v720, %v298
    %v725 = vunpack.c.l.s4 1966171168
    %v726 = vunpack.c.0.s8 %v725
    %v727 = vlaneseq
    %v728 = vshrl.u32 %v727, 7
    %v729 = vsub.s32 %v726, %v728
    %v730 = vrot.slane %v704, %v729
    %v731 = vcombine.high %v730, %v730
    %v733 = vunpack.c.l.s4 1966171168
    %v734 = vunpack.c.0.s8 %v733
    %v735 = vlaneseq
    %v736 = vshrl.u32 %v735, 7
    %v737 = vsub.s32 %v734, %v736
    %v738 = vrot.slane %v730, %v737
    %v740 = vunpack.c.l.s4 1966171168
    %v741 = vunpack.c.0.s8 %v740
    %v742 = vlaneseq
    %v743 = vshrl.u32 %v742, 7
    %v744 = vsub.s32 %v741, %v743
    %v745 = vrot.slane %v731, %v744
    %v746 = vlaneseq
    %v747 = vshrl.u32 %v746, 7
    %v748 = vsub.s32 0, %v747
    %v749 = vrot.slane %v738, %v748
    %v750 = vlaneseq
    %v751 = vshrl.u32 %v750, 7
    %v752 = vsub.s32 0, %v751
    %v753 = vrot.slane %v745, %v752
    %v756 = vadd.f32 %v721, %v749
    %v757 = vadd.f32 %v722, %v753
    %v758 = vsel %vm438, %v756, -inf
    %v759 = vrot.slane %v758, 4
    %v760 = vmax.f32 %v758, %v759
    %v761 = vrot.slane %v760, 2
    %v762 = vmax.f32 %v760, %v761
    %v763 = vrot.slane %v762, 1
    %v764 = vmax.f32 %v762, %v763
    %v765 = vsel %vm438, %v757, -inf
    %v766 = vrot.slane %v765, 4
    %v767 = vmax.f32 %v765, %v766
    %v768 = vrot.slane %v767, 2
    %v769 = vmax.f32 %v767, %v768
    %v770 = vrot.slane %v769, 1
    %v771 = vmax.f32 %v769, %v770
    %v772 = vsub.f32 %v756, %v764
    %v773 = vsub.f32 %v757, %v771
    %v774 = vmul.f32 %v772, 1.442695
    %v775 = vpow.pop %v774
    %v776 = vmul.f32 %v773, 1.442695
    %v777 = vpow.pop %v776
    %v778 = vsel %vm438, %v775, 0.0
    %v779 = vrot.slane %v778, 4
    %v780 = vadd.f32 %v778, %v779
    %v781 = vrot.slane %v780, 2
    %v782 = vadd.f32 %v780, %v781
    %v783 = vrot.slane %v782, 1
    %v784 = vadd.f32 %v782, %v783
    %v785 = vsel %vm438, %v777, 0.0
    %v786 = vrot.slane %v785, 4
    %v787 = vadd.f32 %v785, %v786
    %v788 = vrot.slane %v787, 2
    %v789 = vadd.f32 %v787, %v788
    %v790 = vrot.slane %v789, 1
    %v791 = vadd.f32 %v789, %v790
    %v792 = vlog2.pop %v784
    %v793 = vmul.f32 %v792, 0.6931472
    %v794 = vlog2.pop %v791
    %v795 = vmul.f32 %v794, 0.6931472
    %v796 = vadd.f32 %v793, %v764
    %v797 = vadd.f32 %v795, %v771
    %vm798 = vcmp.gt.f32.partialorder %v706, 0.5
    %v799 = vsel %vm798, 1, 0
    %800 = vset.pattern.permute.xlu0 0
    %801 = vperm.xlu0 %800, %v799
    %v802 = vpop.permute.xlu0 %801
    %vm803 = vcmp.eq.s32.totalorder %v802, 1
    %v806 = vsel %vm487, %v797, %v796
    %v808 = vsel %vm803, %v806, %v702
    %s809 = scalar_lea.vmem [#allocation2], 10
    %v810 = vld [vmem:[%s809] sm:$0x3]
    %s811 = scalar_lea.vmem %s3, 10
    %v812 = vld [vmem:[%s811] sm:$0x3]
    %v813 = vlaneseq
    %v814 = vshrl.u32 %v813, 7
    %v815 = vsub.s32 0, %v814
    %v816 = vrot.slane %v808, %v815
    %818 = vbcast.lane.b32.xlu0 %v816, 256
    %v819 = vpop.permute.xlu0 %818
    %v820 = vlaneseq
    %v821 = vshrl.u32 %v820, 7
    %v822 = vsub.s32 1, %v821
    %v823 = vrot.slane %v808, %v822
    %825 = vbcast.lane.b32.xlu0 %v823, 256
    %v826 = vpop.permute.xlu0 %825
    %v827 = vadd.f32 %v819, %v298
    %v828 = vadd.f32 %v826, %v298
    %v831 = vunpack.c.l.s4 1966171168
    %v832 = vunpack.c.0.s8 %v831
    %v833 = vlaneseq
    %v834 = vshrl.u32 %v833, 7
    %v835 = vsub.s32 %v832, %v834
    %v836 = vrot.slane %v810, %v835
    %v837 = vcombine.high %v836, %v836
    %v839 = vunpack.c.l.s4 1966171168
    %v840 = vunpack.c.0.s8 %v839
    %v841 = vlaneseq
    %v842 = vshrl.u32 %v841, 7
    %v843 = vsub.s32 %v840, %v842
    %v844 = vrot.slane %v836, %v843
    %v846 = vunpack.c.l.s4 1966171168
    %v847 = vunpack.c.0.s8 %v846
    %v848 = vlaneseq
    %v849 = vshrl.u32 %v848, 7
    %v850 = vsub.s32 %v847, %v849
    %v851 = vrot.slane %v837, %v850
    %v852 = vlaneseq
    %v853 = vshrl.u32 %v852, 7
    %v854 = vsub.s32 0, %v853
    %v855 = vrot.slane %v844, %v854
    %v856 = vlaneseq
    %v857 = vshrl.u32 %v856, 7
    %v858 = vsub.s32 0, %v857
    %v859 = vrot.slane %v851, %v858
    %v862 = vadd.f32 %v827, %v855
    %v863 = vadd.f32 %v828, %v859
    %v864 = vsel %vm438, %v862, -inf
    %v865 = vrot.slane %v864, 4
    %v866 = vmax.f32 %v864, %v865
    %v867 = vrot.slane %v866, 2
    %v868 = vmax.f32 %v866, %v867
    %v869 = vrot.slane %v868, 1
    %v870 = vmax.f32 %v868, %v869
    %v871 = vsel %vm438, %v863, -inf
    %v872 = vrot.slane %v871, 4
    %v873 = vmax.f32 %v871, %v872
    %v874 = vrot.slane %v873, 2
    %v875 = vmax.f32 %v873, %v874
    %v876 = vrot.slane %v875, 1
    %v877 = vmax.f32 %v875, %v876
    %v878 = vsub.f32 %v862, %v870
    %v879 = vsub.f32 %v863, %v877
    %v880 = vmul.f32 %v878, 1.442695
    %v881 = vpow.pop %v880
    %v882 = vmul.f32 %v879, 1.442695
    %v883 = vpow.pop %v882
    %v884 = vsel %vm438, %v881, 0.0
    %v885 = vrot.slane %v884, 4
    %v886 = vadd.f32 %v884, %v885
    %v887 = vrot.slane %v886, 2
    %v888 = vadd.f32 %v886, %v887
    %v889 = vrot.slane %v888, 1
    %v890 = vadd.f32 %v888, %v889
    %v891 = vsel %vm438, %v883, 0.0
    %v892 = vrot.slane %v891, 4
    %v893 = vadd.f32 %v891, %v892
    %v894 = vrot.slane %v893, 2
    %v895 = vadd.f32 %v893, %v894
    %v896 = vrot.slane %v895, 1
    %v897 = vadd.f32 %v895, %v896
    %v898 = vlog2.pop %v890
    %v899 = vmul.f32 %v898, 0.6931472
    %v900 = vlog2.pop %v897
    %v901 = vmul.f32 %v900, 0.6931472
    %v902 = vadd.f32 %v899, %v870
    %v903 = vadd.f32 %v901, %v877
    %vm904 = vcmp.gt.f32.partialorder %v812, 0.5
    %v905 = vsel %vm904, 1, 0
    %906 = vset.pattern.permute.xlu0 0
    %907 = vperm.xlu0 %906, %v905
    %v908 = vpop.permute.xlu0 %907
    %vm909 = vcmp.eq.s32.totalorder %v908, 1
    %v912 = vsel %vm487, %v903, %v902
    %v914 = vsel %vm909, %v912, %v808
    %s915 = scalar_lea.vmem [#allocation2], 12
    %v916 = vld [vmem:[%s915] sm:$0x3]
    %s917 = scalar_lea.vmem %s3, 12
    %v918 = vld [vmem:[%s917] sm:$0x3]
    %v919 = vlaneseq
    %v920 = vshrl.u32 %v919, 7
    %v921 = vsub.s32 0, %v920
    %v922 = vrot.slane %v914, %v921
    %924 = vbcast.lane.b32.xlu0 %v922, 256
    %v925 = vpop.permute.xlu0 %924
    %v926 = vlaneseq
    %v927 = vshrl.u32 %v926, 7
    %v928 = vsub.s32 1, %v927
    %v929 = vrot.slane %v914, %v928
    %931 = vbcast.lane.b32.xlu0 %v929, 256
    %v932 = vpop.permute.xlu0 %931
    %v933 = vadd.f32 %v925, %v298
    %v934 = vadd.f32 %v932, %v298
    %v937 = vunpack.c.l.s4 1966171168
    %v938 = vunpack.c.0.s8 %v937
    %v939 = vlaneseq
    %v940 = vshrl.u32 %v939, 7
    %v941 = vsub.s32 %v938, %v940
    %v942 = vrot.slane %v916, %v941
    %v943 = vcombine.high %v942, %v942
    %v945 = vunpack.c.l.s4 1966171168
    %v946 = vunpack.c.0.s8 %v945
    %v947 = vlaneseq
    %v948 = vshrl.u32 %v947, 7
    %v949 = vsub.s32 %v946, %v948
    %v950 = vrot.slane %v942, %v949
    %v952 = vunpack.c.l.s4 1966171168
    %v953 = vunpack.c.0.s8 %v952
    %v954 = vlaneseq
    %v955 = vshrl.u32 %v954, 7
    %v956 = vsub.s32 %v953, %v955
    %v957 = vrot.slane %v943, %v956
    %v958 = vlaneseq
    %v959 = vshrl.u32 %v958, 7
    %v960 = vsub.s32 0, %v959
    %v961 = vrot.slane %v950, %v960
    %v962 = vlaneseq
    %v963 = vshrl.u32 %v962, 7
    %v964 = vsub.s32 0, %v963
    %v965 = vrot.slane %v957, %v964
    %v968 = vadd.f32 %v933, %v961
    %v969 = vadd.f32 %v934, %v965
    %v970 = vsel %vm438, %v968, -inf
    %v971 = vrot.slane %v970, 4
    %v972 = vmax.f32 %v970, %v971
    %v973 = vrot.slane %v972, 2
    %v974 = vmax.f32 %v972, %v973
    %v975 = vrot.slane %v974, 1
    %v976 = vmax.f32 %v974, %v975
    %v977 = vsel %vm438, %v969, -inf
    %v978 = vrot.slane %v977, 4
    %v979 = vmax.f32 %v977, %v978
    %v980 = vrot.slane %v979, 2
    %v981 = vmax.f32 %v979, %v980
    %v982 = vrot.slane %v981, 1
    %v983 = vmax.f32 %v981, %v982
    %v984 = vsub.f32 %v968, %v976
    %v985 = vsub.f32 %v969, %v983
    %v986 = vmul.f32 %v984, 1.442695
    %v987 = vpow.pop %v986
    %v988 = vmul.f32 %v985, 1.442695
    %v989 = vpow.pop %v988
    %v990 = vsel %vm438, %v987, 0.0
    %v991 = vrot.slane %v990, 4
    %v992 = vadd.f32 %v990, %v991
    %v993 = vrot.slane %v992, 2
    %v994 = vadd.f32 %v992, %v993
    %v995 = vrot.slane %v994, 1
    %v996 = vadd.f32 %v994, %v995
    %v997 = vsel %vm438, %v989, 0.0
    %v998 = vrot.slane %v997, 4
    %v999 = vadd.f32 %v997, %v998
    %v1000 = vrot.slane %v999, 2
    %v1001 = vadd.f32 %v999, %v1000
    %v1002 = vrot.slane %v1001, 1
    %v1003 = vadd.f32 %v1001, %v1002
    %v1004 = vlog2.pop %v996
    %v1005 = vmul.f32 %v1004, 0.6931472
    %v1006 = vlog2.pop %v1003
    %v1007 = vmul.f32 %v1006, 0.6931472
    %v1008 = vadd.f32 %v1005, %v976
    %v1009 = vadd.f32 %v1007, %v983
    %vm1010 = vcmp.gt.f32.partialorder %v918, 0.5
    %v1011 = vsel %vm1010, 1, 0
    %1012 = vset.pattern.permute.xlu0 0
    %1013 = vperm.xlu0 %1012, %v1011
    %v1014 = vpop.permute.xlu0 %1013
    %vm1015 = vcmp.eq.s32.totalorder %v1014, 1
    %v1018 = vsel %vm487, %v1009, %v1008
    %v1020 = vsel %vm1015, %v1018, %v914
    %s1021 = scalar_lea.vmem [#allocation2], 14
    %v1022 = vld [vmem:[%s1021] sm:$0x3]
    %s1023 = scalar_lea.vmem %s3, 14
    %v1024 = vld [vmem:[%s1023] sm:$0x3]
    %v1025 = vlaneseq
    %v1026 = vshrl.u32 %v1025, 7
    %v1027 = vsub.s32 0, %v1026
    %v1028 = vrot.slane %v1020, %v1027
    %1030 = vbcast.lane.b32.xlu0 %v1028, 256
    %v1031 = vpop.permute.xlu0 %1030
    %v1032 = vlaneseq
    %v1033 = vshrl.u32 %v1032, 7
    %v1034 = vsub.s32 1, %v1033
    %v1035 = vrot.slane %v1020, %v1034
    %1037 = vbcast.lane.b32.xlu0 %v1035, 256
    %v1038 = vpop.permute.xlu0 %1037
    %v1039 = vadd.f32 %v1031, %v298
    %v1040 = vadd.f32 %v1038, %v298
    %v1043 = vunpack.c.l.s4 1966171168
    %v1044 = vunpack.c.0.s8 %v1043
    %v1045 = vlaneseq
    %v1046 = vshrl.u32 %v1045, 7
    %v1047 = vsub.s32 %v1044, %v1046
    %v1048 = vrot.slane %v1022, %v1047
    %v1049 = vcombine.high %v1048, %v1048
    %v1051 = vunpack.c.l.s4 1966171168
    %v1052 = vunpack.c.0.s8 %v1051
    %v1053 = vlaneseq
    %v1054 = vshrl.u32 %v1053, 7
    %v1055 = vsub.s32 %v1052, %v1054
    %v1056 = vrot.slane %v1048, %v1055
    %v1058 = vunpack.c.l.s4 1966171168
    %v1059 = vunpack.c.0.s8 %v1058
    %v1060 = vlaneseq
    %v1061 = vshrl.u32 %v1060, 7
    %v1062 = vsub.s32 %v1059, %v1061
    %v1063 = vrot.slane %v1049, %v1062
    %v1064 = vlaneseq
    %v1065 = vshrl.u32 %v1064, 7
    %v1066 = vsub.s32 0, %v1065
    %v1067 = vrot.slane %v1056, %v1066
    %v1068 = vlaneseq
    %v1069 = vshrl.u32 %v1068, 7
    %v1070 = vsub.s32 0, %v1069
    %v1071 = vrot.slane %v1063, %v1070
    %v1074 = vadd.f32 %v1039, %v1067
    %v1075 = vadd.f32 %v1040, %v1071
    %v1076 = vsel %vm438, %v1074, -inf
    %v1077 = vrot.slane %v1076, 4
    %v1078 = vmax.f32 %v1076, %v1077
    %v1079 = vrot.slane %v1078, 2
    %v1080 = vmax.f32 %v1078, %v1079
    %v1081 = vrot.slane %v1080, 1
    %v1082 = vmax.f32 %v1080, %v1081
    %v1083 = vsel %vm438, %v1075, -inf
    %v1084 = vrot.slane %v1083, 4
    %v1085 = vmax.f32 %v1083, %v1084
    %v1086 = vrot.slane %v1085, 2
    %v1087 = vmax.f32 %v1085, %v1086
    %v1088 = vrot.slane %v1087, 1
    %v1089 = vmax.f32 %v1087, %v1088
    %v1090 = vsub.f32 %v1074, %v1082
    %v1091 = vsub.f32 %v1075, %v1089
    %v1092 = vmul.f32 %v1090, 1.442695
    %v1093 = vpow.pop %v1092
    %v1094 = vmul.f32 %v1091, 1.442695
    %v1095 = vpow.pop %v1094
    %v1096 = vsel %vm438, %v1093, 0.0
    %v1097 = vrot.slane %v1096, 4
    %v1098 = vadd.f32 %v1096, %v1097
    %v1099 = vrot.slane %v1098, 2
    %v1100 = vadd.f32 %v1098, %v1099
    %v1101 = vrot.slane %v1100, 1
    %v1102 = vadd.f32 %v1100, %v1101
    %v1103 = vsel %vm438, %v1095, 0.0
    %v1104 = vrot.slane %v1103, 4
    %v1105 = vadd.f32 %v1103, %v1104
    %v1106 = vrot.slane %v1105, 2
    %v1107 = vadd.f32 %v1105, %v1106
    %v1108 = vrot.slane %v1107, 1
    %v1109 = vadd.f32 %v1107, %v1108
    %v1110 = vlog2.pop %v1102
    %v1111 = vmul.f32 %v1110, 0.6931472
    %v1112 = vlog2.pop %v1109
    %v1113 = vmul.f32 %v1112, 0.6931472
    %v1114 = vadd.f32 %v1111, %v1082
    %v1115 = vadd.f32 %v1113, %v1089
    %vm1116 = vcmp.gt.f32.partialorder %v1024, 0.5
    %v1117 = vsel %vm1116, 1, 0
    %1118 = vset.pattern.permute.xlu0 0
    %1119 = vperm.xlu0 %1118, %v1117
    %v1120 = vpop.permute.xlu0 %1119
    %vm1121 = vcmp.eq.s32.totalorder %v1120, 1
    %v1124 = vsel %vm487, %v1115, %v1114
    %v1126 = vsel %vm1121, %v1124, %v1020
    %v1128 = vlaneseq
    %v1129 = vshrl.u32 %v1128, 7
    %v1130 = vsub.s32 0, %v1129
    %v1131 = vrot.slane %v300, %v1130
    %v1133 = vadd.f32 %v1126, %v1131
    %v1134 = vsel %vm289, %v1133, -inf
    %1135 = vmax.xlane.f32.xlu0 %v1134
    %v1136 = vpop.xlane.xlu0 %1135
    %v1137 = vsub.f32 %v1133, %v1136
    %v1138 = vmul.f32 %v1137, 1.442695
    %v1139 = vpow.pop %v1138
    %v1140 = vsel %vm289, %v1139, 0.0
    %1141 = vadd.xlane.f32.xlu0 %v1140
    %v1142 = vpop.xlane.xlu0 %1141
    %v1143 = vlog2.pop %v1142
    %v1144 = vmul.f32 %v1143, 0.6931472
    %v1145 = vadd.f32 %v1144, %v1136
    %v1146 = vsub.f32 %v1145, %v374
    %v1147 = vsel %vm357, %v1146, 0.0
    %v1148 = vrot.slane %v1147, 4
    %v1149 = vadd.f32 %v1147, %v1148
    %v1150 = vrot.slane %v1149, 2
    %v1151 = vadd.f32 %v1149, %v1150
    %v1152 = vrot.slane %v1151, 1
    %v1153 = vadd.f32 %v1151, %v1152
    %vm1154 = vcmask 0
    %1155 = vst.msk [vmem:[#allocation3] sm:$0x1] %vm1154, %v1153
    // Predicated region
    $region38: #{gru_crf_forward.5} parent=1 // pred_check
      _
    $region39: #{gru_crf_forward.5} parent=1 // pred_check_branch
      %1157 = sbr.rel (0) target = $region41
    $region40: #{gru_crf_forward.5} parent=1 // pred_region
      %s1159 = ssub.s32 16, 16
      %1160 = vsyncadd [#allocation4], %s1159
      %s1162 = sshll.u32 [#allocation3], 4
      %s1163 = int_to_ptr.vmem [resolvable:$true] %s1162
      %1165 = dma.vmem_to_hbm [thread:$0]  %s1163, 16, %s9, [#allocation4]
    $region41: #{gru_crf_forward.5} parent=1 // pred_fallthru
      _
    // Predicated region
    $region42: #{gru_crf_forward.5} parent=1 // pred_check
      _
    $region43: #{gru_crf_forward.5} parent=1 // pred_check_branch
      %1167 = sbr.rel (0) target = $region45
    $region44: #{gru_crf_forward.5} parent=1 // pred_region
      %1168 = dma.done [#allocation4], 16
    $region45: #{gru_crf_forward.5} parent=1 // pred_fallthru
      _
    %1169 = vsyncpa [#allocation4], 1

</llo_original>
